<compile_context>
chip_gen: v7x
topology: tpu7x:2x2x1
jax: 0.10.0
libtpu: 0.0.40
codegen_flags: <defaults>
</compile_context>

<pallas_src>
import functools

import jax
import jax.numpy as jnp
from jax.experimental import pallas as pl
from jax.experimental.pallas import tpu as pltpu


# ----------------------------------------------------------------------------
# Fused forward kernel
# ----------------------------------------------------------------------------
def fused_forward_kernel(tok_ref,                       # SMEM [B, T] int32 (scalar prefetch)
                         emb_ref,                       # [V, 1, E]
                         wih0_ref, whh0_ref, bl0_ref,   # [2,E,4H] [2,H,4H] [2,1,4H]
                         wih1_ref, whh1_ref, bl1_ref,   # [2,2H,4H] [2,H,4H] [2,1,4H]
                         w1_ref, bf1_ref,               # [2H,H] [1,H]
                         w2_ref, bf2_ref,               # [H,2]  [1,2]
                         out_ref,                       # [B, 2]
                         x0_sc, x1_sc, x2_sc,           # VMEM scratch
                         *, B, T, E, H):
    f32 = jnp.float32

    # ---- Embedding gather (time-major rows: row = t*B + b) -------------------
    # TODO(synk): nn.Dropout is identity at inference; both dropout sites omitted.
    for t in range(T):
        for b in range(B):
            row = t * B + b
            tok = tok_ref[b, t]                          # SMEM scalar
            x0_sc[row:row + 1, :] = emb_ref[tok]         # dynamic row gather [1, E]

    # ---- One direction of one LSTM layer -------------------------------------
    # gx: [T*B, 4H] = x @ W_ih + (b_ih + b_hh), precomputed for all timesteps
    # (hoisted out of the serial recurrence).  Gate order along 4H: i, f, g, o.
    def run_direction(gx, whh, out_sc, col, reverse):
        h = jnp.zeros((B, H), f32)
        c = jnp.zeros((B, H), f32)
        for step in range(T):                            # statically unrolled
            t = (T - 1 - step) if reverse else step
            g = gx[t * B:(t + 1) * B, :] + jnp.dot(
                h, whh, preferred_element_type=f32)      # [B, 4H] (full 128 lanes)
            i_g = jax.nn.sigmoid(g[:, 0 * H:1 * H])
            f_g = jax.nn.sigmoid(g[:, 1 * H:2 * H])
            g_g = jnp.tanh(g[:, 2 * H:3 * H])
            o_g = jax.nn.sigmoid(g[:, 3 * H:4 * H])
            c = f_g * c + i_g * g_g
            h = o_g * jnp.tanh(c)
            out_sc[t * B:(t + 1) * B, col:col + H] = h   # stays in VMEM

    def bilstm_layer(x, wih_ref, whh_ref, b_ref, out_sc):
        for d in range(2):                               # 0 = forward, 1 = backward
            gx = jnp.dot(x, wih_ref[d], preferred_element_type=f32) + b_ref[d]
            run_direction(gx, whh_ref[d], out_sc, d * H, reverse=(d == 1))

    bilstm_layer(x0_sc[...], wih0_ref, whh0_ref, bl0_ref, x1_sc)
    bilstm_layer(x1_sc[...], wih1_ref, whh1_ref, bl1_ref, x2_sc)

    # ---- Head: fc1 + ReLU, mean over the T timesteps, fc2 --------------------
    h1 = jnp.maximum(
        jnp.dot(x2_sc[...], w1_ref[...], preferred_element_type=f32)
        + bf1_ref[...], 0.0)                             # [T*B, H]
    pooled = jnp.zeros((B, H), f32)
    for t in range(T):
        pooled = pooled + h1[t * B:(t + 1) * B, :]
    pooled = pooled * (1.0 / T)
    out_ref[...] = (jnp.dot(pooled, w2_ref[...], preferred_element_type=f32)
                    + bf2_ref[...])


# ----------------------------------------------------------------------------
# Wrapper: one pallas_call for the whole forward pass
# ----------------------------------------------------------------------------
def model_forward(tokens, params):
    B, L = tokens.shape
    V, _, E = params["embedding"].shape
    H = params["whh0"].shape[1]
    T = L

    def vspec(shape):
        nd = len(shape)
        return pl.BlockSpec(shape, lambda i, tok, _n=nd: (0,) * _n)

    kernel = functools.partial(fused_forward_kernel, B=B, T=T, E=E, H=H)

    grid_spec = pltpu.PrefetchScalarGridSpec(
        num_scalar_prefetch=1,                 # tokens -> SMEM
        grid=(1,),
        in_specs=[
            vspec((V, 1, E)),
            vspec((2, E, 4 * H)), vspec((2, H, 4 * H)), vspec((2, 1, 4 * H)),
            vspec((2, 2 * H, 4 * H)), vspec((2, H, 4 * H)), vspec((2, 1, 4 * H)),
            vspec((2 * H, H)), vspec((1, H)),
            vspec((H, 2)), vspec((1, 2)),
        ],
        out_specs=pl.BlockSpec((B, 2), lambda i, tok: (0, 0)),
        scratch_shapes=[
            pltpu.VMEM((T * B, E), jnp.float32),        # embedded input (layer-0 in)
            pltpu.VMEM((T * B, 2 * H), jnp.float32),    # layer-0 output
            pltpu.VMEM((T * B, 2 * H), jnp.float32),    # layer-1 output
        ],
    )

    return pl.pallas_call(
        kernel,
        out_shape=jax.ShapeDtypeStruct((B, 2), jnp.float32),
        grid_spec=grid_spec,
        compiler_params=pltpu.CompilerParams(
            dimension_semantics=("arbitrary",)),
    )(tokens, params["embedding"],
      params["wih0"], params["whh0"], params["bl0"],
      params["wih1"], params["whh1"], params["bl1"],
      params["w1"], params["bf1"], params["w2"], params["bf2"])


# ----------------------------------------------------------------------------
# Parameters (deterministic, synthetic)
# ----------------------------------------------------------------------------
def init_params(key, max_words, emb_size, hid_size):
    ks = iter(jax.random.split(key, 32))
    H = hid_size
    p = {}
    # Stored with a singleton middle dim so the kernel can row-index it directly.
    p["embedding"] = jax.random.normal(next(ks), (max_words, 1, emb_size),
                                       jnp.float32)
    bound = 1.0 / float(H) ** 0.5

    def u(shape, b):
        return jax.random.uniform(next(ks), shape, jnp.float32, -b, b)

    in_dims = [emb_size, 2 * H]
    for layer in range(2):
        din = in_dims[layer]
        # Pre-transposed to [Din, 4H]; leading axis stacks fwd(0)/bwd(1);
        # bias folded as b_ih + b_hh.  Gate order i, f, g, o (PyTorch).
        p[f"wih{layer}"] = jnp.stack([u((din, 4 * H), bound) for _ in range(2)])
        p[f"whh{layer}"] = jnp.stack([u((H, 4 * H), bound) for _ in range(2)])
        p[f"bl{layer}"] = jnp.stack(
            [u((1, 4 * H), bound) + u((1, 4 * H), bound) for _ in range(2)])
    b1 = 1.0 / float(2 * H) ** 0.5
    p["w1"] = u((2 * H, H), b1)
    p["bf1"] = u((1, H), b1)
    b2 = 1.0 / float(H) ** 0.5
    p["w2"] = u((H, 2), b2)
    p["bf2"] = u((1, 2), b2)
    return p


if __name__ == "__main__":
    max_words, emb_size, hid_size, dropout = 100, 16, 32, 0.2
    B, L = 2, 8

    key = jax.random.PRNGKey(0)
    pkey, xkey = jax.random.split(key)
    params = init_params(pkey, max_words, emb_size, hid_size)
    tokens = jax.random.randint(xkey, (B, L), 0, max_words, dtype=jnp.int32)

    out = jax.jit(model_forward)(tokens, params)
    out = jax.block_until_ready(out)
    assert out.shape == (B, 2) and out.dtype == jnp.float32
    assert bool(jnp.all(jnp.isfinite(out)))
    print("KERNEL_OK")
</pallas_src>

<mosaic_0001>
module attributes {stable_mosaic.version = 11 : i64} {
  func.func @fused_forward_kernel(%arg0: i32, %arg1: memref<2x8xi32, #tpu.memory_space<smem>>, %arg2: memref<100x1x16xf32, #tpu.memory_space<vmem>>, %arg3: memref<2x16x128xf32, #tpu.memory_space<vmem>>, %arg4: memref<2x32x128xf32, #tpu.memory_space<vmem>>, %arg5: memref<2x1x128xf32, #tpu.memory_space<vmem>>, %arg6: memref<2x64x128xf32, #tpu.memory_space<vmem>>, %arg7: memref<2x32x128xf32, #tpu.memory_space<vmem>>, %arg8: memref<2x1x128xf32, #tpu.memory_space<vmem>>, %arg9: memref<64x32xf32, #tpu.memory_space<vmem>>, %arg10: memref<1x32xf32, #tpu.memory_space<vmem>>, %arg11: memref<32x2xf32, #tpu.memory_space<vmem>>, %arg12: memref<1x2xf32, #tpu.memory_space<vmem>>, %arg13: memref<2x2xf32, #tpu.memory_space<vmem>>, %arg14: memref<16x16xf32, #tpu.memory_space<vmem>>, %arg15: memref<16x64xf32, #tpu.memory_space<vmem>>, %arg16: memref<16x64xf32, #tpu.memory_space<vmem>>) attributes {dimension_semantics = [#tpu.dimension_semantics<arbitrary>], iteration_bounds = array<i64: 1>, scalar_prefetch = 1 : i64, scratch_operands = 3 : i64, tpu.core_type = #tpu.core_type<tc>, window_params = [{pipeline_mode = #tpu.pipeline_mode<synchronous>, transform_indices = @transform_0, window_bounds = array<i64: 100, 1, 16>}, {pipeline_mode = #tpu.pipeline_mode<synchronous>, transform_indices = @transform_1, window_bounds = array<i64: 2, 16, 128>}, {pipeline_mode = #tpu.pipeline_mode<synchronous>, transform_indices = @transform_2, window_bounds = array<i64: 2, 32, 128>}, {pipeline_mode = #tpu.pipeline_mode<synchronous>, transform_indices = @transform_3, window_bounds = array<i64: 2, 1, 128>}, {pipeline_mode = #tpu.pipeline_mode<synchronous>, transform_indices = @transform_4, window_bounds = array<i64: 2, 64, 128>}, {pipeline_mode = #tpu.pipeline_mode<synchronous>, transform_indices = @transform_5, window_bounds = array<i64: 2, 32, 128>}, {pipeline_mode = #tpu.pipeline_mode<synchronous>, transform_indices = @transform_6, window_bounds = array<i64: 2, 1, 128>}, {pipeline_mode = #tpu.pipeline_mode<synchronous>, transform_indices = @transform_7, window_bounds = array<i64: 64, 32>}, {pipeline_mode = #tpu.pipeline_mode<synchronous>, transform_indices = @transform_8, window_bounds = array<i64: 1, 32>}, {pipeline_mode = #tpu.pipeline_mode<synchronous>, transform_indices = @transform_9, window_bounds = array<i64: 32, 2>}, {pipeline_mode = #tpu.pipeline_mode<synchronous>, transform_indices = @transform_10, window_bounds = array<i64: 1, 2>}, {pipeline_mode = #tpu.pipeline_mode<synchronous>, transform_indices = @transform_11, window_bounds = array<i64: 2, 2>}]} {
    %c0 = arith.constant 0 : index
    %c0_0 = arith.constant 0 : index
    %0 = memref.load %arg1[%c0, %c0_0] : memref<2x8xi32, #tpu.memory_space<smem>>
    %1 = arith.index_cast %0 : i32 to index
    %c0_1 = arith.constant 0 : index
    %c0_2 = arith.constant 0 : index
    %2 = vector.load %arg2[%1, %c0_1, %c0_2] : memref<100x1x16xf32, #tpu.memory_space<vmem>>, vector<1x1x16xf32>
    %3 = vector.shape_cast %2 : vector<1x1x16xf32> to vector<1x16xf32>
    %c0_3 = arith.constant 0 : index
    %c0_4 = arith.constant 0 : index
    %4 = vector.load %arg14[%c0_3, %c0_4] : memref<16x16xf32, #tpu.memory_space<vmem>>, vector<1x16xf32>
    tpu.vector_store %arg14[%c0_3, %c0_4], %3 {strides = array<i32>} : memref<16x16xf32, #tpu.memory_space<vmem>>, vector<1x16xf32>,
    %c1 = arith.constant 1 : index
    %c0_5 = arith.constant 0 : index
    %5 = memref.load %arg1[%c1, %c0_5] : memref<2x8xi32, #tpu.memory_space<smem>>
    %6 = arith.index_cast %5 : i32 to index
    %c0_6 = arith.constant 0 : index
    %c0_7 = arith.constant 0 : index
    %7 = vector.load %arg2[%6, %c0_6, %c0_7] : memref<100x1x16xf32, #tpu.memory_space<vmem>>, vector<1x1x16xf32>
    %8 = vector.shape_cast %7 : vector<1x1x16xf32> to vector<1x16xf32>
    %c1_8 = arith.constant 1 : index
    %c0_9 = arith.constant 0 : index
    %9 = vector.load %arg14[%c1_8, %c0_9] : memref<16x16xf32, #tpu.memory_space<vmem>>, vector<1x16xf32>
    tpu.vector_store %arg14[%c1_8, %c0_9], %8 {strides = array<i32>} : memref<16x16xf32, #tpu.memory_space<vmem>>, vector<1x16xf32>,
    %c0_10 = arith.constant 0 : index
    %c1_11 = arith.constant 1 : index
    %10 = memref.load %arg1[%c0_10, %c1_11] : memref<2x8xi32, #tpu.memory_space<smem>>
    %11 = arith.index_cast %10 : i32 to index
    %c0_12 = arith.constant 0 : index
    %c0_13 = arith.constant 0 : index
    %12 = vector.load %arg2[%11, %c0_12, %c0_13] : memref<100x1x16xf32, #tpu.memory_space<vmem>>, vector<1x1x16xf32>
    %13 = vector.shape_cast %12 : vector<1x1x16xf32> to vector<1x16xf32>
    %c2 = arith.constant 2 : index
    %c0_14 = arith.constant 0 : index
    %14 = vector.load %arg14[%c2, %c0_14] : memref<16x16xf32, #tpu.memory_space<vmem>>, vector<1x16xf32>
    tpu.vector_store %arg14[%c2, %c0_14], %13 {strides = array<i32>} : memref<16x16xf32, #tpu.memory_space<vmem>>, vector<1x16xf32>,
    %c1_15 = arith.constant 1 : index
    %c1_16 = arith.constant 1 : index
    %15 = memref.load %arg1[%c1_15, %c1_16] : memref<2x8xi32, #tpu.memory_space<smem>>
    %16 = arith.index_cast %15 : i32 to index
    %c0_17 = arith.constant 0 : index
    %c0_18 = arith.constant 0 : index
    %17 = vector.load %arg2[%16, %c0_17, %c0_18] : memref<100x1x16xf32, #tpu.memory_space<vmem>>, vector<1x1x16xf32>
    %18 = vector.shape_cast %17 : vector<1x1x16xf32> to vector<1x16xf32>
    %c3 = arith.constant 3 : index
    %c0_19 = arith.constant 0 : index
    %19 = vector.load %arg14[%c3, %c0_19] : memref<16x16xf32, #tpu.memory_space<vmem>>, vector<1x16xf32>
    tpu.vector_store %arg14[%c3, %c0_19], %18 {strides = array<i32>} : memref<16x16xf32, #tpu.memory_space<vmem>>, vector<1x16xf32>,
    %c0_20 = arith.constant 0 : index
    %c2_21 = arith.constant 2 : index
    %20 = memref.load %arg1[%c0_20, %c2_21] : memref<2x8xi32, #tpu.memory_space<smem>>
    %21 = arith.index_cast %20 : i32 to index
    %c0_22 = arith.constant 0 : index
    %c0_23 = arith.constant 0 : index
    %22 = vector.load %arg2[%21, %c0_22, %c0_23] : memref<100x1x16xf32, #tpu.memory_space<vmem>>, vector<1x1x16xf32>
    %23 = vector.shape_cast %22 : vector<1x1x16xf32> to vector<1x16xf32>
    %c4 = arith.constant 4 : index
    %c0_24 = arith.constant 0 : index
    %24 = vector.load %arg14[%c4, %c0_24] : memref<16x16xf32, #tpu.memory_space<vmem>>, vector<1x16xf32>
    tpu.vector_store %arg14[%c4, %c0_24], %23 {strides = array<i32>} : memref<16x16xf32, #tpu.memory_space<vmem>>, vector<1x16xf32>,
    %c1_25 = arith.constant 1 : index
    %c2_26 = arith.constant 2 : index
    %25 = memref.load %arg1[%c1_25, %c2_26] : memref<2x8xi32, #tpu.memory_space<smem>>
    %26 = arith.index_cast %25 : i32 to index
    %c0_27 = arith.constant 0 : index
    %c0_28 = arith.constant 0 : index
    %27 = vector.load %arg2[%26, %c0_27, %c0_28] : memref<100x1x16xf32, #tpu.memory_space<vmem>>, vector<1x1x16xf32>
    %28 = vector.shape_cast %27 : vector<1x1x16xf32> to vector<1x16xf32>
    %c5 = arith.constant 5 : index
    %c0_29 = arith.constant 0 : index
    %29 = vector.load %arg14[%c5, %c0_29] : memref<16x16xf32, #tpu.memory_space<vmem>>, vector<1x16xf32>
    tpu.vector_store %arg14[%c5, %c0_29], %28 {strides = array<i32>} : memref<16x16xf32, #tpu.memory_space<vmem>>, vector<1x16xf32>,
    %c0_30 = arith.constant 0 : index
    %c3_31 = arith.constant 3 : index
    %30 = memref.load %arg1[%c0_30, %c3_31] : memref<2x8xi32, #tpu.memory_space<smem>>
    %31 = arith.index_cast %30 : i32 to index
    %c0_32 = arith.constant 0 : index
    %c0_33 = arith.constant 0 : index
    %32 = vector.load %arg2[%31, %c0_32, %c0_33] : memref<100x1x16xf32, #tpu.memory_space<vmem>>, vector<1x1x16xf32>
    %33 = vector.shape_cast %32 : vector<1x1x16xf32> to vector<1x16xf32>
    %c6 = arith.constant 6 : index
    %c0_34 = arith.constant 0 : index
    %34 = vector.load %arg14[%c6, %c0_34] : memref<16x16xf32, #tpu.memory_space<vmem>>, vector<1x16xf32>
    tpu.vector_store %arg14[%c6, %c0_34], %33 {strides = array<i32>} : memref<16x16xf32, #tpu.memory_space<vmem>>, vector<1x16xf32>,
    %c1_35 = arith.constant 1 : index
    %c3_36 = arith.constant 3 : index
    %35 = memref.load %arg1[%c1_35, %c3_36] : memref<2x8xi32, #tpu.memory_space<smem>>
    %36 = arith.index_cast %35 : i32 to index
    %c0_37 = arith.constant 0 : index
    %c0_38 = arith.constant 0 : index
    %37 = vector.load %arg2[%36, %c0_37, %c0_38] : memref<100x1x16xf32, #tpu.memory_space<vmem>>, vector<1x1x16xf32>
    %38 = vector.shape_cast %37 : vector<1x1x16xf32> to vector<1x16xf32>
    %c7 = arith.constant 7 : index
    %c0_39 = arith.constant 0 : index
    %39 = vector.load %arg14[%c7, %c0_39] : memref<16x16xf32, #tpu.memory_space<vmem>>, vector<1x16xf32>
    tpu.vector_store %arg14[%c7, %c0_39], %38 {strides = array<i32>} : memref<16x16xf32, #tpu.memory_space<vmem>>, vector<1x16xf32>,
    %c0_40 = arith.constant 0 : index
    %c4_41 = arith.constant 4 : index
    %40 = memref.load %arg1[%c0_40, %c4_41] : memref<2x8xi32, #tpu.memory_space<smem>>
    %41 = arith.index_cast %40 : i32 to index
    %c0_42 = arith.constant 0 : index
    %c0_43 = arith.constant 0 : index
    %42 = vector.load %arg2[%41, %c0_42, %c0_43] : memref<100x1x16xf32, #tpu.memory_space<vmem>>, vector<1x1x16xf32>
    %43 = vector.shape_cast %42 : vector<1x1x16xf32> to vector<1x16xf32>
    %c8 = arith.constant 8 : index
    %c0_44 = arith.constant 0 : index
    %44 = vector.load %arg14[%c8, %c0_44] : memref<16x16xf32, #tpu.memory_space<vmem>>, vector<1x16xf32>
    tpu.vector_store %arg14[%c8, %c0_44], %43 {strides = array<i32>} : memref<16x16xf32, #tpu.memory_space<vmem>>, vector<1x16xf32>,
    %c1_45 = arith.constant 1 : index
    %c4_46 = arith.constant 4 : index
    %45 = memref.load %arg1[%c1_45, %c4_46] : memref<2x8xi32, #tpu.memory_space<smem>>
    %46 = arith.index_cast %45 : i32 to index
    %c0_47 = arith.constant 0 : index
    %c0_48 = arith.constant 0 : index
    %47 = vector.load %arg2[%46, %c0_47, %c0_48] : memref<100x1x16xf32, #tpu.memory_space<vmem>>, vector<1x1x16xf32>
    %48 = vector.shape_cast %47 : vector<1x1x16xf32> to vector<1x16xf32>
    %c9 = arith.constant 9 : index
    %c0_49 = arith.constant 0 : index
    %49 = vector.load %arg14[%c9, %c0_49] : memref<16x16xf32, #tpu.memory_space<vmem>>, vector<1x16xf32>
    tpu.vector_store %arg14[%c9, %c0_49], %48 {strides = array<i32>} : memref<16x16xf32, #tpu.memory_space<vmem>>, vector<1x16xf32>,
    %c0_50 = arith.constant 0 : index
    %c5_51 = arith.constant 5 : index
    %50 = memref.load %arg1[%c0_50, %c5_51] : memref<2x8xi32, #tpu.memory_space<smem>>
    %51 = arith.index_cast %50 : i32 to index
    %c0_52 = arith.constant 0 : index
    %c0_53 = arith.constant 0 : index
    %52 = vector.load %arg2[%51, %c0_52, %c0_53] : memref<100x1x16xf32, #tpu.memory_space<vmem>>, vector<1x1x16xf32>
    %53 = vector.shape_cast %52 : vector<1x1x16xf32> to vector<1x16xf32>
    %c10 = arith.constant 10 : index
    %c0_54 = arith.constant 0 : index
    %54 = vector.load %arg14[%c10, %c0_54] : memref<16x16xf32, #tpu.memory_space<vmem>>, vector<1x16xf32>
    tpu.vector_store %arg14[%c10, %c0_54], %53 {strides = array<i32>} : memref<16x16xf32, #tpu.memory_space<vmem>>, vector<1x16xf32>,
    %c1_55 = arith.constant 1 : index
    %c5_56 = arith.constant 5 : index
    %55 = memref.load %arg1[%c1_55, %c5_56] : memref<2x8xi32, #tpu.memory_space<smem>>
    %56 = arith.index_cast %55 : i32 to index
    %c0_57 = arith.constant 0 : index
    %c0_58 = arith.constant 0 : index
    %57 = vector.load %arg2[%56, %c0_57, %c0_58] : memref<100x1x16xf32, #tpu.memory_space<vmem>>, vector<1x1x16xf32>
    %58 = vector.shape_cast %57 : vector<1x1x16xf32> to vector<1x16xf32>
    %c11 = arith.constant 11 : index
    %c0_59 = arith.constant 0 : index
    %59 = vector.load %arg14[%c11, %c0_59] : memref<16x16xf32, #tpu.memory_space<vmem>>, vector<1x16xf32>
    tpu.vector_store %arg14[%c11, %c0_59], %58 {strides = array<i32>} : memref<16x16xf32, #tpu.memory_space<vmem>>, vector<1x16xf32>,
    %c0_60 = arith.constant 0 : index
    %c6_61 = arith.constant 6 : index
    %60 = memref.load %arg1[%c0_60, %c6_61] : memref<2x8xi32, #tpu.memory_space<smem>>
    %61 = arith.index_cast %60 : i32 to index
    %c0_62 = arith.constant 0 : index
    %c0_63 = arith.constant 0 : index
    %62 = vector.load %arg2[%61, %c0_62, %c0_63] : memref<100x1x16xf32, #tpu.memory_space<vmem>>, vector<1x1x16xf32>
    %63 = vector.shape_cast %62 : vector<1x1x16xf32> to vector<1x16xf32>
    %c12 = arith.constant 12 : index
    %c0_64 = arith.constant 0 : index
    %64 = vector.load %arg14[%c12, %c0_64] : memref<16x16xf32, #tpu.memory_space<vmem>>, vector<1x16xf32>
    tpu.vector_store %arg14[%c12, %c0_64], %63 {strides = array<i32>} : memref<16x16xf32, #tpu.memory_space<vmem>>, vector<1x16xf32>,
    %c1_65 = arith.constant 1 : index
    %c6_66 = arith.constant 6 : index
    %65 = memref.load %arg1[%c1_65, %c6_66] : memref<2x8xi32, #tpu.memory_space<smem>>
    %66 = arith.index_cast %65 : i32 to index
    %c0_67 = arith.constant 0 : index
    %c0_68 = arith.constant 0 : index
    %67 = vector.load %arg2[%66, %c0_67, %c0_68] : memref<100x1x16xf32, #tpu.memory_space<vmem>>, vector<1x1x16xf32>
    %68 = vector.shape_cast %67 : vector<1x1x16xf32> to vector<1x16xf32>
    %c13 = arith.constant 13 : index
    %c0_69 = arith.constant 0 : index
    %69 = vector.load %arg14[%c13, %c0_69] : memref<16x16xf32, #tpu.memory_space<vmem>>, vector<1x16xf32>
    tpu.vector_store %arg14[%c13, %c0_69], %68 {strides = array<i32>} : memref<16x16xf32, #tpu.memory_space<vmem>>, vector<1x16xf32>,
    %c0_70 = arith.constant 0 : index
    %c7_71 = arith.constant 7 : index
    %70 = memref.load %arg1[%c0_70, %c7_71] : memref<2x8xi32, #tpu.memory_space<smem>>
    %71 = arith.index_cast %70 : i32 to index
    %c0_72 = arith.constant 0 : index
    %c0_73 = arith.constant 0 : index
    %72 = vector.load %arg2[%71, %c0_72, %c0_73] : memref<100x1x16xf32, #tpu.memory_space<vmem>>, vector<1x1x16xf32>
    %73 = vector.shape_cast %72 : vector<1x1x16xf32> to vector<1x16xf32>
    %c14 = arith.constant 14 : index
    %c0_74 = arith.constant 0 : index
    %74 = vector.load %arg14[%c14, %c0_74] : memref<16x16xf32, #tpu.memory_space<vmem>>, vector<1x16xf32>
    tpu.vector_store %arg14[%c14, %c0_74], %73 {strides = array<i32>} : memref<16x16xf32, #tpu.memory_space<vmem>>, vector<1x16xf32>,
    %c1_75 = arith.constant 1 : index
    %c7_76 = arith.constant 7 : index
    %75 = memref.load %arg1[%c1_75, %c7_76] : memref<2x8xi32, #tpu.memory_space<smem>>
    %76 = arith.index_cast %75 : i32 to index
    %c0_77 = arith.constant 0 : index
    %c0_78 = arith.constant 0 : index
    %77 = vector.load %arg2[%76, %c0_77, %c0_78] : memref<100x1x16xf32, #tpu.memory_space<vmem>>, vector<1x1x16xf32>
    %78 = vector.shape_cast %77 : vector<1x1x16xf32> to vector<1x16xf32>
    %c15 = arith.constant 15 : index
    %c0_79 = arith.constant 0 : index
    %79 = vector.load %arg14[%c15, %c0_79] : memref<16x16xf32, #tpu.memory_space<vmem>>, vector<1x16xf32>
    tpu.vector_store %arg14[%c15, %c0_79], %78 {strides = array<i32>} : memref<16x16xf32, #tpu.memory_space<vmem>>, vector<1x16xf32>,
    %c0_80 = arith.constant 0 : index
    %c0_81 = arith.constant 0 : index
    %80 = vector.load %arg14[%c0_80, %c0_81] : memref<16x16xf32, #tpu.memory_space<vmem>>, vector<16x16xf32>
    %c0_82 = arith.constant 0 : index
    %c0_83 = arith.constant 0 : index
    %c0_84 = arith.constant 0 : index
    %81 = vector.load %arg3[%c0_82, %c0_83, %c0_84] : memref<2x16x128xf32, #tpu.memory_space<vmem>>, vector<1x16x128xf32>
    %82 = vector.shape_cast %81 : vector<1x16x128xf32> to vector<16x128xf32>
    %cst = arith.constant dense<0.000000e+00> : vector<16x128xf32>
    %83 = tpu.matmul %80, %82, %cst {dimension_numbers = #tpu.dot_dimension_numbers<[1], [0], [0], [1], [0, 0, 1, 1], [], []>} : vector<16x16xf32>, vector<16x128xf32>, vector<16x128xf32> -> vector<16x128xf32>
    %c0_85 = arith.constant 0 : index
    %c0_86 = arith.constant 0 : index
    %c0_87 = arith.constant 0 : index
    %84 = vector.load %arg5[%c0_85, %c0_86, %c0_87] : memref<2x1x128xf32, #tpu.memory_space<vmem>>, vector<1x1x128xf32>
    %85 = vector.shape_cast %84 : vector<1x1x128xf32> to vector<1x128xf32>
    %86 = vector.broadcast %85 : vector<1x128xf32> to vector<16x128xf32>
    %87 = arith.addf %83, %86 : vector<16x128xf32>
    %c0_88 = arith.constant 0 : index
    %c0_89 = arith.constant 0 : index
    %c0_90 = arith.constant 0 : index
    %88 = vector.load %arg4[%c0_88, %c0_89, %c0_90] : memref<2x32x128xf32, #tpu.memory_space<vmem>>, vector<1x32x128xf32>
    %89 = vector.shape_cast %88 : vector<1x32x128xf32> to vector<32x128xf32>
    %cst_91 = arith.constant 0.000000e+00 : f32
    %90 = vector.broadcast %cst_91 : f32 to vector<2x32xf32>
    %cst_92 = arith.constant 0.000000e+00 : f32
    %91 = vector.broadcast %cst_92 : f32 to vector<2x32xf32>
    %92 = vector.extract_strided_slice %87 {offsets = [0, 0], sizes = [2, 128], strides = [1, 1]} : vector<16x128xf32> to vector<2x128xf32>
    %cst_93 = arith.constant dense<0.000000e+00> : vector<2x128xf32>
    %93 = tpu.matmul %90, %89, %cst_93 {dimension_numbers = #tpu.dot_dimension_numbers<[1], [0], [0], [1], [0, 0, 1, 1], [], []>} : vector<2x32xf32>, vector<32x128xf32>, vector<2x128xf32> -> vector<2x128xf32>
    %94 = arith.addf %92, %93 : vector<2x128xf32>
    %95 = vector.extract_strided_slice %94 {offsets = [0, 0], sizes = [2, 32], strides = [1, 1]} : vector<2x128xf32> to vector<2x32xf32>
    %96 = arith.negf %95 : vector<2x32xf32>
    %97 = math.exp %96 : vector<2x32xf32>
    %cst_94 = arith.constant 1.000000e+00 : f32
    %98 = vector.broadcast %cst_94 : f32 to vector<2x32xf32>
    %99 = arith.addf %98, %97 : vector<2x32xf32>
    %100 = arith.divf %98, %99 : vector<2x32xf32>
    %101 = vector.extract_strided_slice %94 {offsets = [0, 32], sizes = [2, 32], strides = [1, 1]} : vector<2x128xf32> to vector<2x32xf32>
    %102 = arith.negf %101 : vector<2x32xf32>
    %103 = math.exp %102 : vector<2x32xf32>
    %cst_95 = arith.constant 1.000000e+00 : f32
    %104 = vector.broadcast %cst_95 : f32 to vector<2x32xf32>
    %105 = arith.addf %104, %103 : vector<2x32xf32>
    %106 = arith.divf %104, %105 : vector<2x32xf32>
    %107 = vector.extract_strided_slice %94 {offsets = [0, 64], sizes = [2, 32], strides = [1, 1]} : vector<2x128xf32> to vector<2x32xf32>
    %108 = math.tanh %107 : vector<2x32xf32>
    %109 = vector.extract_strided_slice %94 {offsets = [0, 96], sizes = [2, 32], strides = [1, 1]} : vector<2x128xf32> to vector<2x32xf32>
    %110 = arith.negf %109 : vector<2x32xf32>
    %111 = math.exp %110 : vector<2x32xf32>
    %cst_96 = arith.constant 1.000000e+00 : f32
    %112 = vector.broadcast %cst_96 : f32 to vector<2x32xf32>
    %113 = arith.addf %112, %111 : vector<2x32xf32>
    %114 = arith.divf %112, %113 : vector<2x32xf32>
    %115 = arith.mulf %106, %91 : vector<2x32xf32>
    %116 = arith.mulf %100, %108 : vector<2x32xf32>
    %117 = arith.addf %115, %116 : vector<2x32xf32>
    %118 = math.tanh %117 : vector<2x32xf32>
    %119 = arith.mulf %114, %118 : vector<2x32xf32>
    %c0_97 = arith.constant 0 : index
    %c0_98 = arith.constant 0 : index
    %120 = vector.load %arg15[%c0_97, %c0_98] : memref<16x64xf32, #tpu.memory_space<vmem>>, vector<2x32xf32>
    tpu.vector_store %arg15[%c0_97, %c0_98], %119 {strides = array<i32>} : memref<16x64xf32, #tpu.memory_space<vmem>>, vector<2x32xf32>,
    %121 = vector.extract_strided_slice %87 {offsets = [2, 0], sizes = [2, 128], strides = [1, 1]} : vector<16x128xf32> to vector<2x128xf32>
    %cst_99 = arith.constant dense<0.000000e+00> : vector<2x128xf32>
    %122 = tpu.matmul %119, %89, %cst_99 {dimension_numbers = #tpu.dot_dimension_numbers<[1], [0], [0], [1], [0, 0, 1, 1], [], []>} : vector<2x32xf32>, vector<32x128xf32>, vector<2x128xf32> -> vector<2x128xf32>
    %123 = arith.addf %121, %122 : vector<2x128xf32>
    %124 = vector.extract_strided_slice %123 {offsets = [0, 0], sizes = [2, 32], strides = [1, 1]} : vector<2x128xf32> to vector<2x32xf32>
    %125 = arith.negf %124 : vector<2x32xf32>
    %126 = math.exp %125 : vector<2x32xf32>
    %cst_100 = arith.constant 1.000000e+00 : f32
    %127 = vector.broadcast %cst_100 : f32 to vector<2x32xf32>
    %128 = arith.addf %127, %126 : vector<2x32xf32>
    %129 = arith.divf %127, %128 : vector<2x32xf32>
    %130 = vector.extract_strided_slice %123 {offsets = [0, 32], sizes = [2, 32], strides = [1, 1]} : vector<2x128xf32> to vector<2x32xf32>
    %131 = arith.negf %130 : vector<2x32xf32>
    %132 = math.exp %131 : vector<2x32xf32>
    %cst_101 = arith.constant 1.000000e+00 : f32
    %133 = vector.broadcast %cst_101 : f32 to vector<2x32xf32>
    %134 = arith.addf %133, %132 : vector<2x32xf32>
    %135 = arith.divf %133, %134 : vector<2x32xf32>
    %136 = vector.extract_strided_slice %123 {offsets = [0, 64], sizes = [2, 32], strides = [1, 1]} : vector<2x128xf32> to vector<2x32xf32>
    %137 = math.tanh %136 : vector<2x32xf32>
    %138 = vector.extract_strided_slice %123 {offsets = [0, 96], sizes = [2, 32], strides = [1, 1]} : vector<2x128xf32> to vector<2x32xf32>
    %139 = arith.negf %138 : vector<2x32xf32>
    %140 = math.exp %139 : vector<2x32xf32>
    %cst_102 = arith.constant 1.000000e+00 : f32
    %141 = vector.broadcast %cst_102 : f32 to vector<2x32xf32>
    %142 = arith.addf %141, %140 : vector<2x32xf32>
    %143 = arith.divf %141, %142 : vector<2x32xf32>
    %144 = arith.mulf %135, %117 : vector<2x32xf32>
    %145 = arith.mulf %129, %137 : vector<2x32xf32>
    %146 = arith.addf %144, %145 : vector<2x32xf32>
    %147 = math.tanh %146 : vector<2x32xf32>
    %148 = arith.mulf %143, %147 : vector<2x32xf32>
    %c2_103 = arith.constant 2 : index
    %c0_104 = arith.constant 0 : index
    %149 = vector.load %arg15[%c2_103, %c0_104] : memref<16x64xf32, #tpu.memory_space<vmem>>, vector<2x32xf32>
    tpu.vector_store %arg15[%c2_103, %c0_104], %148 {strides = array<i32>} : memref<16x64xf32, #tpu.memory_space<vmem>>, vector<2x32xf32>,
    %150 = vector.extract_strided_slice %87 {offsets = [4, 0], sizes = [2, 128], strides = [1, 1]} : vector<16x128xf32> to vector<2x128xf32>
    %cst_105 = arith.constant dense<0.000000e+00> : vector<2x128xf32>
    %151 = tpu.matmul %148, %89, %cst_105 {dimension_numbers = #tpu.dot_dimension_numbers<[1], [0], [0], [1], [0, 0, 1, 1], [], []>} : vector<2x32xf32>, vector<32x128xf32>, vector<2x128xf32> -> vector<2x128xf32>
    %152 = arith.addf %150, %151 : vector<2x128xf32>
    %153 = vector.extract_strided_slice %152 {offsets = [0, 0], sizes = [2, 32], strides = [1, 1]} : vector<2x128xf32> to vector<2x32xf32>
    %154 = arith.negf %153 : vector<2x32xf32>
    %155 = math.exp %154 : vector<2x32xf32>
    %cst_106 = arith.constant 1.000000e+00 : f32
    %156 = vector.broadcast %cst_106 : f32 to vector<2x32xf32>
    %157 = arith.addf %156, %155 : vector<2x32xf32>
    %158 = arith.divf %156, %157 : vector<2x32xf32>
    %159 = vector.extract_strided_slice %152 {offsets = [0, 32], sizes = [2, 32], strides = [1, 1]} : vector<2x128xf32> to vector<2x32xf32>
    %160 = arith.negf %159 : vector<2x32xf32>
    %161 = math.exp %160 : vector<2x32xf32>
    %cst_107 = arith.constant 1.000000e+00 : f32
    %162 = vector.broadcast %cst_107 : f32 to vector<2x32xf32>
    %163 = arith.addf %162, %161 : vector<2x32xf32>
    %164 = arith.divf %162, %163 : vector<2x32xf32>
    %165 = vector.extract_strided_slice %152 {offsets = [0, 64], sizes = [2, 32], strides = [1, 1]} : vector<2x128xf32> to vector<2x32xf32>
    %166 = math.tanh %165 : vector<2x32xf32>
    %167 = vector.extract_strided_slice %152 {offsets = [0, 96], sizes = [2, 32], strides = [1, 1]} : vector<2x128xf32> to vector<2x32xf32>
    %168 = arith.negf %167 : vector<2x32xf32>
    %169 = math.exp %168 : vector<2x32xf32>
    %cst_108 = arith.constant 1.000000e+00 : f32
    %170 = vector.broadcast %cst_108 : f32 to vector<2x32xf32>
    %171 = arith.addf %170, %169 : vector<2x32xf32>
    %172 = arith.divf %170, %171 : vector<2x32xf32>
    %173 = arith.mulf %164, %146 : vector<2x32xf32>
    %174 = arith.mulf %158, %166 : vector<2x32xf32>
    %175 = arith.addf %173, %174 : vector<2x32xf32>
    %176 = math.tanh %175 : vector<2x32xf32>
    %177 = arith.mulf %172, %176 : vector<2x32xf32>
    %c4_109 = arith.constant 4 : index
    %c0_110 = arith.constant 0 : index
    %178 = vector.load %arg15[%c4_109, %c0_110] : memref<16x64xf32, #tpu.memory_space<vmem>>, vector<2x32xf32>
    tpu.vector_store %arg15[%c4_109, %c0_110], %177 {strides = array<i32>} : memref<16x64xf32, #tpu.memory_space<vmem>>, vector<2x32xf32>,
    %179 = vector.extract_strided_slice %87 {offsets = [6, 0], sizes = [2, 128], strides = [1, 1]} : vector<16x128xf32> to vector<2x128xf32>
    %cst_111 = arith.constant dense<0.000000e+00> : vector<2x128xf32>
    %180 = tpu.matmul %177, %89, %cst_111 {dimension_numbers = #tpu.dot_dimension_numbers<[1], [0], [0], [1], [0, 0, 1, 1], [], []>} : vector<2x32xf32>, vector<32x128xf32>, vector<2x128xf32> -> vector<2x128xf32>
    %181 = arith.addf %179, %180 : vector<2x128xf32>
    %182 = vector.extract_strided_slice %181 {offsets = [0, 0], sizes = [2, 32], strides = [1, 1]} : vector<2x128xf32> to vector<2x32xf32>
    %183 = arith.negf %182 : vector<2x32xf32>
    %184 = math.exp %183 : vector<2x32xf32>
    %cst_112 = arith.constant 1.000000e+00 : f32
    %185 = vector.broadcast %cst_112 : f32 to vector<2x32xf32>
    %186 = arith.addf %185, %184 : vector<2x32xf32>
    %187 = arith.divf %185, %186 : vector<2x32xf32>
    %188 = vector.extract_strided_slice %181 {offsets = [0, 32], sizes = [2, 32], strides = [1, 1]} : vector<2x128xf32> to vector<2x32xf32>
    %189 = arith.negf %188 : vector<2x32xf32>
    %190 = math.exp %189 : vector<2x32xf32>
    %cst_113 = arith.constant 1.000000e+00 : f32
    %191 = vector.broadcast %cst_113 : f32 to vector<2x32xf32>
    %192 = arith.addf %191, %190 : vector<2x32xf32>
    %193 = arith.divf %191, %192 : vector<2x32xf32>
    %194 = vector.extract_strided_slice %181 {offsets = [0, 64], sizes = [2, 32], strides = [1, 1]} : vector<2x128xf32> to vector<2x32xf32>
    %195 = math.tanh %194 : vector<2x32xf32>
    %196 = vector.extract_strided_slice %181 {offsets = [0, 96], sizes = [2, 32], strides = [1, 1]} : vector<2x128xf32> to vector<2x32xf32>
    %197 = arith.negf %196 : vector<2x32xf32>
    %198 = math.exp %197 : vector<2x32xf32>
    %cst_114 = arith.constant 1.000000e+00 : f32
    %199 = vector.broadcast %cst_114 : f32 to vector<2x32xf32>
    %200 = arith.addf %199, %198 : vector<2x32xf32>
    %201 = arith.divf %199, %200 : vector<2x32xf32>
    %202 = arith.mulf %193, %175 : vector<2x32xf32>
    %203 = arith.mulf %187, %195 : vector<2x32xf32>
    %204 = arith.addf %202, %203 : vector<2x32xf32>
    %205 = math.tanh %204 : vector<2x32xf32>
    %206 = arith.mulf %201, %205 : vector<2x32xf32>
    %c6_115 = arith.constant 6 : index
    %c0_116 = arith.constant 0 : index
    %207 = vector.load %arg15[%c6_115, %c0_116] : memref<16x64xf32, #tpu.memory_space<vmem>>, vector<2x32xf32>
    tpu.vector_store %arg15[%c6_115, %c0_116], %206 {strides = array<i32>} : memref<16x64xf32, #tpu.memory_space<vmem>>, vector<2x32xf32>,
    %208 = vector.extract_strided_slice %87 {offsets = [8, 0], sizes = [2, 128], strides = [1, 1]} : vector<16x128xf32> to vector<2x128xf32>
    %cst_117 = arith.constant dense<0.000000e+00> : vector<2x128xf32>
    %209 = tpu.matmul %206, %89, %cst_117 {dimension_numbers = #tpu.dot_dimension_numbers<[1], [0], [0], [1], [0, 0, 1, 1], [], []>} : vector<2x32xf32>, vector<32x128xf32>, vector<2x128xf32> -> vector<2x128xf32>
    %210 = arith.addf %208, %209 : vector<2x128xf32>
    %211 = vector.extract_strided_slice %210 {offsets = [0, 0], sizes = [2, 32], strides = [1, 1]} : vector<2x128xf32> to vector<2x32xf32>
    %212 = arith.negf %211 : vector<2x32xf32>
    %213 = math.exp %212 : vector<2x32xf32>
    %cst_118 = arith.constant 1.000000e+00 : f32
    %214 = vector.broadcast %cst_118 : f32 to vector<2x32xf32>
    %215 = arith.addf %214, %213 : vector<2x32xf32>
    %216 = arith.divf %214, %215 : vector<2x32xf32>
    %217 = vector.extract_strided_slice %210 {offsets = [0, 32], sizes = [2, 32], strides = [1, 1]} : vector<2x128xf32> to vector<2x32xf32>
    %218 = arith.negf %217 : vector<2x32xf32>
    %219 = math.exp %218 : vector<2x32xf32>
    %cst_119 = arith.constant 1.000000e+00 : f32
    %220 = vector.broadcast %cst_119 : f32 to vector<2x32xf32>
    %221 = arith.addf %220, %219 : vector<2x32xf32>
    %222 = arith.divf %220, %221 : vector<2x32xf32>
    %223 = vector.extract_strided_slice %210 {offsets = [0, 64], sizes = [2, 32], strides = [1, 1]} : vector<2x128xf32> to vector<2x32xf32>
    %224 = math.tanh %223 : vector<2x32xf32>
    %225 = vector.extract_strided_slice %210 {offsets = [0, 96], sizes = [2, 32], strides = [1, 1]} : vector<2x128xf32> to vector<2x32xf32>
    %226 = arith.negf %225 : vector<2x32xf32>
    %227 = math.exp %226 : vector<2x32xf32>
    %cst_120 = arith.constant 1.000000e+00 : f32
    %228 = vector.broadcast %cst_120 : f32 to vector<2x32xf32>
    %229 = arith.addf %228, %227 : vector<2x32xf32>
    %230 = arith.divf %228, %229 : vector<2x32xf32>
    %231 = arith.mulf %222, %204 : vector<2x32xf32>
    %232 = arith.mulf %216, %224 : vector<2x32xf32>
    %233 = arith.addf %231, %232 : vector<2x32xf32>
    %234 = math.tanh %233 : vector<2x32xf32>
    %235 = arith.mulf %230, %234 : vector<2x32xf32>
    %c8_121 = arith.constant 8 : index
    %c0_122 = arith.constant 0 : index
    %236 = vector.load %arg15[%c8_121, %c0_122] : memref<16x64xf32, #tpu.memory_space<vmem>>, vector<2x32xf32>
    tpu.vector_store %arg15[%c8_121, %c0_122], %235 {strides = array<i32>} : memref<16x64xf32, #tpu.memory_space<vmem>>, vector<2x32xf32>,
    %237 = vector.extract_strided_slice %87 {offsets = [10, 0], sizes = [2, 128], strides = [1, 1]} : vector<16x128xf32> to vector<2x128xf32>
    %cst_123 = arith.constant dense<0.000000e+00> : vector<2x128xf32>
    %238 = tpu.matmul %235, %89, %cst_123 {dimension_numbers = #tpu.dot_dimension_numbers<[1], [0], [0], [1], [0, 0, 1, 1], [], []>} : vector<2x32xf32>, vector<32x128xf32>, vector<2x128xf32> -> vector<2x128xf32>
    %239 = arith.addf %237, %238 : vector<2x128xf32>
    %240 = vector.extract_strided_slice %239 {offsets = [0, 0], sizes = [2, 32], strides = [1, 1]} : vector<2x128xf32> to vector<2x32xf32>
    %241 = arith.negf %240 : vector<2x32xf32>
    %242 = math.exp %241 : vector<2x32xf32>
    %cst_124 = arith.constant 1.000000e+00 : f32
    %243 = vector.broadcast %cst_124 : f32 to vector<2x32xf32>
    %244 = arith.addf %243, %242 : vector<2x32xf32>
    %245 = arith.divf %243, %244 : vector<2x32xf32>
    %246 = vector.extract_strided_slice %239 {offsets = [0, 32], sizes = [2, 32], strides = [1, 1]} : vector<2x128xf32> to vector<2x32xf32>
    %247 = arith.negf %246 : vector<2x32xf32>
    %248 = math.exp %247 : vector<2x32xf32>
    %cst_125 = arith.constant 1.000000e+00 : f32
    %249 = vector.broadcast %cst_125 : f32 to vector<2x32xf32>
    %250 = arith.addf %249, %248 : vector<2x32xf32>
    %251 = arith.divf %249, %250 : vector<2x32xf32>
    %252 = vector.extract_strided_slice %239 {offsets = [0, 64], sizes = [2, 32], strides = [1, 1]} : vector<2x128xf32> to vector<2x32xf32>
    %253 = math.tanh %252 : vector<2x32xf32>
    %254 = vector.extract_strided_slice %239 {offsets = [0, 96], sizes = [2, 32], strides = [1, 1]} : vector<2x128xf32> to vector<2x32xf32>
    %255 = arith.negf %254 : vector<2x32xf32>
    %256 = math.exp %255 : vector<2x32xf32>
    %cst_126 = arith.constant 1.000000e+00 : f32
    %257 = vector.broadcast %cst_126 : f32 to vector<2x32xf32>
    %258 = arith.addf %257, %256 : vector<2x32xf32>
    %259 = arith.divf %257, %258 : vector<2x32xf32>
    %260 = arith.mulf %251, %233 : vector<2x32xf32>
    %261 = arith.mulf %245, %253 : vector<2x32xf32>
    %262 = arith.addf %260, %261 : vector<2x32xf32>
    %263 = math.tanh %262 : vector<2x32xf32>
    %264 = arith.mulf %259, %263 : vector<2x32xf32>
    %c10_127 = arith.constant 10 : index
    %c0_128 = arith.constant 0 : index
    %265 = vector.load %arg15[%c10_127, %c0_128] : memref<16x64xf32, #tpu.memory_space<vmem>>, vector<2x32xf32>
    tpu.vector_store %arg15[%c10_127, %c0_128], %264 {strides = array<i32>} : memref<16x64xf32, #tpu.memory_space<vmem>>, vector<2x32xf32>,
    %266 = vector.extract_strided_slice %87 {offsets = [12, 0], sizes = [2, 128], strides = [1, 1]} : vector<16x128xf32> to vector<2x128xf32>
    %cst_129 = arith.constant dense<0.000000e+00> : vector<2x128xf32>
    %267 = tpu.matmul %264, %89, %cst_129 {dimension_numbers = #tpu.dot_dimension_numbers<[1], [0], [0], [1], [0, 0, 1, 1], [], []>} : vector<2x32xf32>, vector<32x128xf32>, vector<2x128xf32> -> vector<2x128xf32>
    %268 = arith.addf %266, %267 : vector<2x128xf32>
    %269 = vector.extract_strided_slice %268 {offsets = [0, 0], sizes = [2, 32], strides = [1, 1]} : vector<2x128xf32> to vector<2x32xf32>
    %270 = arith.negf %269 : vector<2x32xf32>
    %271 = math.exp %270 : vector<2x32xf32>
    %cst_130 = arith.constant 1.000000e+00 : f32
    %272 = vector.broadcast %cst_130 : f32 to vector<2x32xf32>
    %273 = arith.addf %272, %271 : vector<2x32xf32>
    %274 = arith.divf %272, %273 : vector<2x32xf32>
    %275 = vector.extract_strided_slice %268 {offsets = [0, 32], sizes = [2, 32], strides = [1, 1]} : vector<2x128xf32> to vector<2x32xf32>
    %276 = arith.negf %275 : vector<2x32xf32>
    %277 = math.exp %276 : vector<2x32xf32>
    %cst_131 = arith.constant 1.000000e+00 : f32
    %278 = vector.broadcast %cst_131 : f32 to vector<2x32xf32>
    %279 = arith.addf %278, %277 : vector<2x32xf32>
    %280 = arith.divf %278, %279 : vector<2x32xf32>
    %281 = vector.extract_strided_slice %268 {offsets = [0, 64], sizes = [2, 32], strides = [1, 1]} : vector<2x128xf32> to vector<2x32xf32>
    %282 = math.tanh %281 : vector<2x32xf32>
    %283 = vector.extract_strided_slice %268 {offsets = [0, 96], sizes = [2, 32], strides = [1, 1]} : vector<2x128xf32> to vector<2x32xf32>
    %284 = arith.negf %283 : vector<2x32xf32>
    %285 = math.exp %284 : vector<2x32xf32>
    %cst_132 = arith.constant 1.000000e+00 : f32
    %286 = vector.broadcast %cst_132 : f32 to vector<2x32xf32>
    %287 = arith.addf %286, %285 : vector<2x32xf32>
    %288 = arith.divf %286, %287 : vector<2x32xf32>
    %289 = arith.mulf %280, %262 : vector<2x32xf32>
    %290 = arith.mulf %274, %282 : vector<2x32xf32>
    %291 = arith.addf %289, %290 : vector<2x32xf32>
    %292 = math.tanh %291 : vector<2x32xf32>
    %293 = arith.mulf %288, %292 : vector<2x32xf32>
    %c12_133 = arith.constant 12 : index
    %c0_134 = arith.constant 0 : index
    %294 = vector.load %arg15[%c12_133, %c0_134] : memref<16x64xf32, #tpu.memory_space<vmem>>, vector<2x32xf32>
    tpu.vector_store %arg15[%c12_133, %c0_134], %293 {strides = array<i32>} : memref<16x64xf32, #tpu.memory_space<vmem>>, vector<2x32xf32>,
    %295 = vector.extract_strided_slice %87 {offsets = [14, 0], sizes = [2, 128], strides = [1, 1]} : vector<16x128xf32> to vector<2x128xf32>
    %cst_135 = arith.constant dense<0.000000e+00> : vector<2x128xf32>
    %296 = tpu.matmul %293, %89, %cst_135 {dimension_numbers = #tpu.dot_dimension_numbers<[1], [0], [0], [1], [0, 0, 1, 1], [], []>} : vector<2x32xf32>, vector<32x128xf32>, vector<2x128xf32> -> vector<2x128xf32>
    %297 = arith.addf %295, %296 : vector<2x128xf32>
    %298 = vector.extract_strided_slice %297 {offsets = [0, 0], sizes = [2, 32], strides = [1, 1]} : vector<2x128xf32> to vector<2x32xf32>
    %299 = arith.negf %298 : vector<2x32xf32>
    %300 = math.exp %299 : vector<2x32xf32>
    %cst_136 = arith.constant 1.000000e+00 : f32
    %301 = vector.broadcast %cst_136 : f32 to vector<2x32xf32>
    %302 = arith.addf %301, %300 : vector<2x32xf32>
    %303 = arith.divf %301, %302 : vector<2x32xf32>
    %304 = vector.extract_strided_slice %297 {offsets = [0, 32], sizes = [2, 32], strides = [1, 1]} : vector<2x128xf32> to vector<2x32xf32>
    %305 = arith.negf %304 : vector<2x32xf32>
    %306 = math.exp %305 : vector<2x32xf32>
    %cst_137 = arith.constant 1.000000e+00 : f32
    %307 = vector.broadcast %cst_137 : f32 to vector<2x32xf32>
    %308 = arith.addf %307, %306 : vector<2x32xf32>
    %309 = arith.divf %307, %308 : vector<2x32xf32>
    %310 = vector.extract_strided_slice %297 {offsets = [0, 64], sizes = [2, 32], strides = [1, 1]} : vector<2x128xf32> to vector<2x32xf32>
    %311 = math.tanh %310 : vector<2x32xf32>
    %312 = vector.extract_strided_slice %297 {offsets = [0, 96], sizes = [2, 32], strides = [1, 1]} : vector<2x128xf32> to vector<2x32xf32>
    %313 = arith.negf %312 : vector<2x32xf32>
    %314 = math.exp %313 : vector<2x32xf32>
    %cst_138 = arith.constant 1.000000e+00 : f32
    %315 = vector.broadcast %cst_138 : f32 to vector<2x32xf32>
    %316 = arith.addf %315, %314 : vector<2x32xf32>
    %317 = arith.divf %315, %316 : vector<2x32xf32>
    %318 = arith.mulf %309, %291 : vector<2x32xf32>
    %319 = arith.mulf %303, %311 : vector<2x32xf32>
    %320 = arith.addf %318, %319 : vector<2x32xf32>
    %321 = math.tanh %320 : vector<2x32xf32>
    %322 = arith.mulf %317, %321 : vector<2x32xf32>
    %c14_139 = arith.constant 14 : index
    %c0_140 = arith.constant 0 : index
    %323 = vector.load %arg15[%c14_139, %c0_140] : memref<16x64xf32, #tpu.memory_space<vmem>>, vector<2x32xf32>
    tpu.vector_store %arg15[%c14_139, %c0_140], %322 {strides = array<i32>} : memref<16x64xf32, #tpu.memory_space<vmem>>, vector<2x32xf32>,
    %c1_141 = arith.constant 1 : index
    %c0_142 = arith.constant 0 : index
    %c0_143 = arith.constant 0 : index
    %324 = vector.load %arg3[%c1_141, %c0_142, %c0_143] : memref<2x16x128xf32, #tpu.memory_space<vmem>>, vector<1x16x128xf32>
    %325 = vector.shape_cast %324 : vector<1x16x128xf32> to vector<16x128xf32>
    %cst_144 = arith.constant dense<0.000000e+00> : vector<16x128xf32>
    %326 = tpu.matmul %80, %325, %cst_144 {dimension_numbers = #tpu.dot_dimension_numbers<[1], [0], [0], [1], [0, 0, 1, 1], [], []>} : vector<16x16xf32>, vector<16x128xf32>, vector<16x128xf32> -> vector<16x128xf32>
    %c1_145 = arith.constant 1 : index
    %c0_146 = arith.constant 0 : index
    %c0_147 = arith.constant 0 : index
    %327 = vector.load %arg5[%c1_145, %c0_146, %c0_147] : memref<2x1x128xf32, #tpu.memory_space<vmem>>, vector<1x1x128xf32>
    %328 = vector.shape_cast %327 : vector<1x1x128xf32> to vector<1x128xf32>
    %329 = vector.broadcast %328 : vector<1x128xf32> to vector<16x128xf32>
    %330 = arith.addf %326, %329 : vector<16x128xf32>
    %c1_148 = arith.constant 1 : index
    %c0_149 = arith.constant 0 : index
    %c0_150 = arith.constant 0 : index
    %331 = vector.load %arg4[%c1_148, %c0_149, %c0_150] : memref<2x32x128xf32, #tpu.memory_space<vmem>>, vector<1x32x128xf32>
    %332 = vector.shape_cast %331 : vector<1x32x128xf32> to vector<32x128xf32>
    %cst_151 = arith.constant 0.000000e+00 : f32
    %333 = vector.broadcast %cst_151 : f32 to vector<2x32xf32>
    %cst_152 = arith.constant 0.000000e+00 : f32
    %334 = vector.broadcast %cst_152 : f32 to vector<2x32xf32>
    %335 = vector.extract_strided_slice %330 {offsets = [14, 0], sizes = [2, 128], strides = [1, 1]} : vector<16x128xf32> to vector<2x128xf32>
    %cst_153 = arith.constant dense<0.000000e+00> : vector<2x128xf32>
    %336 = tpu.matmul %333, %332, %cst_153 {dimension_numbers = #tpu.dot_dimension_numbers<[1], [0], [0], [1], [0, 0, 1, 1], [], []>} : vector<2x32xf32>, vector<32x128xf32>, vector<2x128xf32> -> vector<2x128xf32>
    %337 = arith.addf %335, %336 : vector<2x128xf32>
    %338 = vector.extract_strided_slice %337 {offsets = [0, 0], sizes = [2, 32], strides = [1, 1]} : vector<2x128xf32> to vector<2x32xf32>
    %339 = arith.negf %338 : vector<2x32xf32>
    %340 = math.exp %339 : vector<2x32xf32>
    %cst_154 = arith.constant 1.000000e+00 : f32
    %341 = vector.broadcast %cst_154 : f32 to vector<2x32xf32>
    %342 = arith.addf %341, %340 : vector<2x32xf32>
    %343 = arith.divf %341, %342 : vector<2x32xf32>
    %344 = vector.extract_strided_slice %337 {offsets = [0, 32], sizes = [2, 32], strides = [1, 1]} : vector<2x128xf32> to vector<2x32xf32>
    %345 = arith.negf %344 : vector<2x32xf32>
    %346 = math.exp %345 : vector<2x32xf32>
    %cst_155 = arith.constant 1.000000e+00 : f32
    %347 = vector.broadcast %cst_155 : f32 to vector<2x32xf32>
    %348 = arith.addf %347, %346 : vector<2x32xf32>
    %349 = arith.divf %347, %348 : vector<2x32xf32>
    %350 = vector.extract_strided_slice %337 {offsets = [0, 64], sizes = [2, 32], strides = [1, 1]} : vector<2x128xf32> to vector<2x32xf32>
    %351 = math.tanh %350 : vector<2x32xf32>
    %352 = vector.extract_strided_slice %337 {offsets = [0, 96], sizes = [2, 32], strides = [1, 1]} : vector<2x128xf32> to vector<2x32xf32>
    %353 = arith.negf %352 : vector<2x32xf32>
    %354 = math.exp %353 : vector<2x32xf32>
    %cst_156 = arith.constant 1.000000e+00 : f32
    %355 = vector.broadcast %cst_156 : f32 to vector<2x32xf32>
    %356 = arith.addf %355, %354 : vector<2x32xf32>
    %357 = arith.divf %355, %356 : vector<2x32xf32>
    %358 = arith.mulf %349, %334 : vector<2x32xf32>
    %359 = arith.mulf %343, %351 : vector<2x32xf32>
    %360 = arith.addf %358, %359 : vector<2x32xf32>
    %361 = math.tanh %360 : vector<2x32xf32>
    %362 = arith.mulf %357, %361 : vector<2x32xf32>
    %c14_157 = arith.constant 14 : index
    %c32 = arith.constant 32 : index
    %363 = vector.load %arg15[%c14_157, %c32] : memref<16x64xf32, #tpu.memory_space<vmem>>, vector<2x32xf32>
    tpu.vector_store %arg15[%c14_157, %c32], %362 {strides = array<i32>} : memref<16x64xf32, #tpu.memory_space<vmem>>, vector<2x32xf32>,
    %364 = vector.extract_strided_slice %330 {offsets = [12, 0], sizes = [2, 128], strides = [1, 1]} : vector<16x128xf32> to vector<2x128xf32>
    %cst_158 = arith.constant dense<0.000000e+00> : vector<2x128xf32>
    %365 = tpu.matmul %362, %332, %cst_158 {dimension_numbers = #tpu.dot_dimension_numbers<[1], [0], [0], [1], [0, 0, 1, 1], [], []>} : vector<2x32xf32>, vector<32x128xf32>, vector<2x128xf32> -> vector<2x128xf32>
    %366 = arith.addf %364, %365 : vector<2x128xf32>
    %367 = vector.extract_strided_slice %366 {offsets = [0, 0], sizes = [2, 32], strides = [1, 1]} : vector<2x128xf32> to vector<2x32xf32>
    %368 = arith.negf %367 : vector<2x32xf32>
    %369 = math.exp %368 : vector<2x32xf32>
    %cst_159 = arith.constant 1.000000e+00 : f32
    %370 = vector.broadcast %cst_159 : f32 to vector<2x32xf32>
    %371 = arith.addf %370, %369 : vector<2x32xf32>
    %372 = arith.divf %370, %371 : vector<2x32xf32>
    %373 = vector.extract_strided_slice %366 {offsets = [0, 32], sizes = [2, 32], strides = [1, 1]} : vector<2x128xf32> to vector<2x32xf32>
    %374 = arith.negf %373 : vector<2x32xf32>
    %375 = math.exp %374 : vector<2x32xf32>
    %cst_160 = arith.constant 1.000000e+00 : f32
    %376 = vector.broadcast %cst_160 : f32 to vector<2x32xf32>
    %377 = arith.addf %376, %375 : vector<2x32xf32>
    %378 = arith.divf %376, %377 : vector<2x32xf32>
    %379 = vector.extract_strided_slice %366 {offsets = [0, 64], sizes = [2, 32], strides = [1, 1]} : vector<2x128xf32> to vector<2x32xf32>
    %380 = math.tanh %379 : vector<2x32xf32>
    %381 = vector.extract_strided_slice %366 {offsets = [0, 96], sizes = [2, 32], strides = [1, 1]} : vector<2x128xf32> to vector<2x32xf32>
    %382 = arith.negf %381 : vector<2x32xf32>
    %383 = math.exp %382 : vector<2x32xf32>
    %cst_161 = arith.constant 1.000000e+00 : f32
    %384 = vector.broadcast %cst_161 : f32 to vector<2x32xf32>
    %385 = arith.addf %384, %383 : vector<2x32xf32>
    %386 = arith.divf %384, %385 : vector<2x32xf32>
    %387 = arith.mulf %378, %360 : vector<2x32xf32>
    %388 = arith.mulf %372, %380 : vector<2x32xf32>
    %389 = arith.addf %387, %388 : vector<2x32xf32>
    %390 = math.tanh %389 : vector<2x32xf32>
    %391 = arith.mulf %386, %390 : vector<2x32xf32>
    %c12_162 = arith.constant 12 : index
    %c32_163 = arith.constant 32 : index
    %392 = vector.load %arg15[%c12_162, %c32_163] : memref<16x64xf32, #tpu.memory_space<vmem>>, vector<2x32xf32>
    tpu.vector_store %arg15[%c12_162, %c32_163], %391 {strides = array<i32>} : memref<16x64xf32, #tpu.memory_space<vmem>>, vector<2x32xf32>,
    %393 = vector.extract_strided_slice %330 {offsets = [10, 0], sizes = [2, 128], strides = [1, 1]} : vector<16x128xf32> to vector<2x128xf32>
    %cst_164 = arith.constant dense<0.000000e+00> : vector<2x128xf32>
    %394 = tpu.matmul %391, %332, %cst_164 {dimension_numbers = #tpu.dot_dimension_numbers<[1], [0], [0], [1], [0, 0, 1, 1], [], []>} : vector<2x32xf32>, vector<32x128xf32>, vector<2x128xf32> -> vector<2x128xf32>
    %395 = arith.addf %393, %394 : vector<2x128xf32>
    %396 = vector.extract_strided_slice %395 {offsets = [0, 0], sizes = [2, 32], strides = [1, 1]} : vector<2x128xf32> to vector<2x32xf32>
    %397 = arith.negf %396 : vector<2x32xf32>
    %398 = math.exp %397 : vector<2x32xf32>
    %cst_165 = arith.constant 1.000000e+00 : f32
    %399 = vector.broadcast %cst_165 : f32 to vector<2x32xf32>
    %400 = arith.addf %399, %398 : vector<2x32xf32>
    %401 = arith.divf %399, %400 : vector<2x32xf32>
    %402 = vector.extract_strided_slice %395 {offsets = [0, 32], sizes = [2, 32], strides = [1, 1]} : vector<2x128xf32> to vector<2x32xf32>
    %403 = arith.negf %402 : vector<2x32xf32>
    %404 = math.exp %403 : vector<2x32xf32>
    %cst_166 = arith.constant 1.000000e+00 : f32
    %405 = vector.broadcast %cst_166 : f32 to vector<2x32xf32>
    %406 = arith.addf %405, %404 : vector<2x32xf32>
    %407 = arith.divf %405, %406 : vector<2x32xf32>
    %408 = vector.extract_strided_slice %395 {offsets = [0, 64], sizes = [2, 32], strides = [1, 1]} : vector<2x128xf32> to vector<2x32xf32>
    %409 = math.tanh %408 : vector<2x32xf32>
    %410 = vector.extract_strided_slice %395 {offsets = [0, 96], sizes = [2, 32], strides = [1, 1]} : vector<2x128xf32> to vector<2x32xf32>
    %411 = arith.negf %410 : vector<2x32xf32>
    %412 = math.exp %411 : vector<2x32xf32>
    %cst_167 = arith.constant 1.000000e+00 : f32
    %413 = vector.broadcast %cst_167 : f32 to vector<2x32xf32>
    %414 = arith.addf %413, %412 : vector<2x32xf32>
    %415 = arith.divf %413, %414 : vector<2x32xf32>
    %416 = arith.mulf %407, %389 : vector<2x32xf32>
    %417 = arith.mulf %401, %409 : vector<2x32xf32>
    %418 = arith.addf %416, %417 : vector<2x32xf32>
    %419 = math.tanh %418 : vector<2x32xf32>
    %420 = arith.mulf %415, %419 : vector<2x32xf32>
    %c10_168 = arith.constant 10 : index
    %c32_169 = arith.constant 32 : index
    %421 = vector.load %arg15[%c10_168, %c32_169] : memref<16x64xf32, #tpu.memory_space<vmem>>, vector<2x32xf32>
    tpu.vector_store %arg15[%c10_168, %c32_169], %420 {strides = array<i32>} : memref<16x64xf32, #tpu.memory_space<vmem>>, vector<2x32xf32>,
    %422 = vector.extract_strided_slice %330 {offsets = [8, 0], sizes = [2, 128], strides = [1, 1]} : vector<16x128xf32> to vector<2x128xf32>
    %cst_170 = arith.constant dense<0.000000e+00> : vector<2x128xf32>
    %423 = tpu.matmul %420, %332, %cst_170 {dimension_numbers = #tpu.dot_dimension_numbers<[1], [0], [0], [1], [0, 0, 1, 1], [], []>} : vector<2x32xf32>, vector<32x128xf32>, vector<2x128xf32> -> vector<2x128xf32>
    %424 = arith.addf %422, %423 : vector<2x128xf32>
    %425 = vector.extract_strided_slice %424 {offsets = [0, 0], sizes = [2, 32], strides = [1, 1]} : vector<2x128xf32> to vector<2x32xf32>
    %426 = arith.negf %425 : vector<2x32xf32>
    %427 = math.exp %426 : vector<2x32xf32>
    %cst_171 = arith.constant 1.000000e+00 : f32
    %428 = vector.broadcast %cst_171 : f32 to vector<2x32xf32>
    %429 = arith.addf %428, %427 : vector<2x32xf32>
    %430 = arith.divf %428, %429 : vector<2x32xf32>
    %431 = vector.extract_strided_slice %424 {offsets = [0, 32], sizes = [2, 32], strides = [1, 1]} : vector<2x128xf32> to vector<2x32xf32>
    %432 = arith.negf %431 : vector<2x32xf32>
    %433 = math.exp %432 : vector<2x32xf32>
    %cst_172 = arith.constant 1.000000e+00 : f32
    %434 = vector.broadcast %cst_172 : f32 to vector<2x32xf32>
    %435 = arith.addf %434, %433 : vector<2x32xf32>
    %436 = arith.divf %434, %435 : vector<2x32xf32>
    %437 = vector.extract_strided_slice %424 {offsets = [0, 64], sizes = [2, 32], strides = [1, 1]} : vector<2x128xf32> to vector<2x32xf32>
    %438 = math.tanh %437 : vector<2x32xf32>
    %439 = vector.extract_strided_slice %424 {offsets = [0, 96], sizes = [2, 32], strides = [1, 1]} : vector<2x128xf32> to vector<2x32xf32>
    %440 = arith.negf %439 : vector<2x32xf32>
    %441 = math.exp %440 : vector<2x32xf32>
    %cst_173 = arith.constant 1.000000e+00 : f32
    %442 = vector.broadcast %cst_173 : f32 to vector<2x32xf32>
    %443 = arith.addf %442, %441 : vector<2x32xf32>
    %444 = arith.divf %442, %443 : vector<2x32xf32>
    %445 = arith.mulf %436, %418 : vector<2x32xf32>
    %446 = arith.mulf %430, %438 : vector<2x32xf32>
    %447 = arith.addf %445, %446 : vector<2x32xf32>
    %448 = math.tanh %447 : vector<2x32xf32>
    %449 = arith.mulf %444, %448 : vector<2x32xf32>
    %c8_174 = arith.constant 8 : index
    %c32_175 = arith.constant 32 : index
    %450 = vector.load %arg15[%c8_174, %c32_175] : memref<16x64xf32, #tpu.memory_space<vmem>>, vector<2x32xf32>
    tpu.vector_store %arg15[%c8_174, %c32_175], %449 {strides = array<i32>} : memref<16x64xf32, #tpu.memory_space<vmem>>, vector<2x32xf32>,
    %451 = vector.extract_strided_slice %330 {offsets = [6, 0], sizes = [2, 128], strides = [1, 1]} : vector<16x128xf32> to vector<2x128xf32>
    %cst_176 = arith.constant dense<0.000000e+00> : vector<2x128xf32>
    %452 = tpu.matmul %449, %332, %cst_176 {dimension_numbers = #tpu.dot_dimension_numbers<[1], [0], [0], [1], [0, 0, 1, 1], [], []>} : vector<2x32xf32>, vector<32x128xf32>, vector<2x128xf32> -> vector<2x128xf32>
    %453 = arith.addf %451, %452 : vector<2x128xf32>
    %454 = vector.extract_strided_slice %453 {offsets = [0, 0], sizes = [2, 32], strides = [1, 1]} : vector<2x128xf32> to vector<2x32xf32>
    %455 = arith.negf %454 : vector<2x32xf32>
    %456 = math.exp %455 : vector<2x32xf32>
    %cst_177 = arith.constant 1.000000e+00 : f32
    %457 = vector.broadcast %cst_177 : f32 to vector<2x32xf32>
    %458 = arith.addf %457, %456 : vector<2x32xf32>
    %459 = arith.divf %457, %458 : vector<2x32xf32>
    %460 = vector.extract_strided_slice %453 {offsets = [0, 32], sizes = [2, 32], strides = [1, 1]} : vector<2x128xf32> to vector<2x32xf32>
    %461 = arith.negf %460 : vector<2x32xf32>
    %462 = math.exp %461 : vector<2x32xf32>
    %cst_178 = arith.constant 1.000000e+00 : f32
    %463 = vector.broadcast %cst_178 : f32 to vector<2x32xf32>
    %464 = arith.addf %463, %462 : vector<2x32xf32>
    %465 = arith.divf %463, %464 : vector<2x32xf32>
    %466 = vector.extract_strided_slice %453 {offsets = [0, 64], sizes = [2, 32], strides = [1, 1]} : vector<2x128xf32> to vector<2x32xf32>
    %467 = math.tanh %466 : vector<2x32xf32>
    %468 = vector.extract_strided_slice %453 {offsets = [0, 96], sizes = [2, 32], strides = [1, 1]} : vector<2x128xf32> to vector<2x32xf32>
    %469 = arith.negf %468 : vector<2x32xf32>
    %470 = math.exp %469 : vector<2x32xf32>
    %cst_179 = arith.constant 1.000000e+00 : f32
    %471 = vector.broadcast %cst_179 : f32 to vector<2x32xf32>
    %472 = arith.addf %471, %470 : vector<2x32xf32>
    %473 = arith.divf %471, %472 : vector<2x32xf32>
    %474 = arith.mulf %465, %447 : vector<2x32xf32>
    %475 = arith.mulf %459, %467 : vector<2x32xf32>
    %476 = arith.addf %474, %475 : vector<2x32xf32>
    %477 = math.tanh %476 : vector<2x32xf32>
    %478 = arith.mulf %473, %477 : vector<2x32xf32>
    %c6_180 = arith.constant 6 : index
    %c32_181 = arith.constant 32 : index
    %479 = vector.load %arg15[%c6_180, %c32_181] : memref<16x64xf32, #tpu.memory_space<vmem>>, vector<2x32xf32>
    tpu.vector_store %arg15[%c6_180, %c32_181], %478 {strides = array<i32>} : memref<16x64xf32, #tpu.memory_space<vmem>>, vector<2x32xf32>,
    %480 = vector.extract_strided_slice %330 {offsets = [4, 0], sizes = [2, 128], strides = [1, 1]} : vector<16x128xf32> to vector<2x128xf32>
    %cst_182 = arith.constant dense<0.000000e+00> : vector<2x128xf32>
    %481 = tpu.matmul %478, %332, %cst_182 {dimension_numbers = #tpu.dot_dimension_numbers<[1], [0], [0], [1], [0, 0, 1, 1], [], []>} : vector<2x32xf32>, vector<32x128xf32>, vector<2x128xf32> -> vector<2x128xf32>
    %482 = arith.addf %480, %481 : vector<2x128xf32>
    %483 = vector.extract_strided_slice %482 {offsets = [0, 0], sizes = [2, 32], strides = [1, 1]} : vector<2x128xf32> to vector<2x32xf32>
    %484 = arith.negf %483 : vector<2x32xf32>
    %485 = math.exp %484 : vector<2x32xf32>
    %cst_183 = arith.constant 1.000000e+00 : f32
    %486 = vector.broadcast %cst_183 : f32 to vector<2x32xf32>
    %487 = arith.addf %486, %485 : vector<2x32xf32>
    %488 = arith.divf %486, %487 : vector<2x32xf32>
    %489 = vector.extract_strided_slice %482 {offsets = [0, 32], sizes = [2, 32], strides = [1, 1]} : vector<2x128xf32> to vector<2x32xf32>
    %490 = arith.negf %489 : vector<2x32xf32>
    %491 = math.exp %490 : vector<2x32xf32>
    %cst_184 = arith.constant 1.000000e+00 : f32
    %492 = vector.broadcast %cst_184 : f32 to vector<2x32xf32>
    %493 = arith.addf %492, %491 : vector<2x32xf32>
    %494 = arith.divf %492, %493 : vector<2x32xf32>
    %495 = vector.extract_strided_slice %482 {offsets = [0, 64], sizes = [2, 32], strides = [1, 1]} : vector<2x128xf32> to vector<2x32xf32>
    %496 = math.tanh %495 : vector<2x32xf32>
    %497 = vector.extract_strided_slice %482 {offsets = [0, 96], sizes = [2, 32], strides = [1, 1]} : vector<2x128xf32> to vector<2x32xf32>
    %498 = arith.negf %497 : vector<2x32xf32>
    %499 = math.exp %498 : vector<2x32xf32>
    %cst_185 = arith.constant 1.000000e+00 : f32
    %500 = vector.broadcast %cst_185 : f32 to vector<2x32xf32>
    %501 = arith.addf %500, %499 : vector<2x32xf32>
    %502 = arith.divf %500, %501 : vector<2x32xf32>
    %503 = arith.mulf %494, %476 : vector<2x32xf32>
    %504 = arith.mulf %488, %496 : vector<2x32xf32>
    %505 = arith.addf %503, %504 : vector<2x32xf32>
    %506 = math.tanh %505 : vector<2x32xf32>
    %507 = arith.mulf %502, %506 : vector<2x32xf32>
    %c4_186 = arith.constant 4 : index
    %c32_187 = arith.constant 32 : index
    %508 = vector.load %arg15[%c4_186, %c32_187] : memref<16x64xf32, #tpu.memory_space<vmem>>, vector<2x32xf32>
    tpu.vector_store %arg15[%c4_186, %c32_187], %507 {strides = array<i32>} : memref<16x64xf32, #tpu.memory_space<vmem>>, vector<2x32xf32>,
    %509 = vector.extract_strided_slice %330 {offsets = [2, 0], sizes = [2, 128], strides = [1, 1]} : vector<16x128xf32> to vector<2x128xf32>
    %cst_188 = arith.constant dense<0.000000e+00> : vector<2x128xf32>
    %510 = tpu.matmul %507, %332, %cst_188 {dimension_numbers = #tpu.dot_dimension_numbers<[1], [0], [0], [1], [0, 0, 1, 1], [], []>} : vector<2x32xf32>, vector<32x128xf32>, vector<2x128xf32> -> vector<2x128xf32>
    %511 = arith.addf %509, %510 : vector<2x128xf32>
    %512 = vector.extract_strided_slice %511 {offsets = [0, 0], sizes = [2, 32], strides = [1, 1]} : vector<2x128xf32> to vector<2x32xf32>
    %513 = arith.negf %512 : vector<2x32xf32>
    %514 = math.exp %513 : vector<2x32xf32>
    %cst_189 = arith.constant 1.000000e+00 : f32
    %515 = vector.broadcast %cst_189 : f32 to vector<2x32xf32>
    %516 = arith.addf %515, %514 : vector<2x32xf32>
    %517 = arith.divf %515, %516 : vector<2x32xf32>
    %518 = vector.extract_strided_slice %511 {offsets = [0, 32], sizes = [2, 32], strides = [1, 1]} : vector<2x128xf32> to vector<2x32xf32>
    %519 = arith.negf %518 : vector<2x32xf32>
    %520 = math.exp %519 : vector<2x32xf32>
    %cst_190 = arith.constant 1.000000e+00 : f32
    %521 = vector.broadcast %cst_190 : f32 to vector<2x32xf32>
    %522 = arith.addf %521, %520 : vector<2x32xf32>
    %523 = arith.divf %521, %522 : vector<2x32xf32>
    %524 = vector.extract_strided_slice %511 {offsets = [0, 64], sizes = [2, 32], strides = [1, 1]} : vector<2x128xf32> to vector<2x32xf32>
    %525 = math.tanh %524 : vector<2x32xf32>
    %526 = vector.extract_strided_slice %511 {offsets = [0, 96], sizes = [2, 32], strides = [1, 1]} : vector<2x128xf32> to vector<2x32xf32>
    %527 = arith.negf %526 : vector<2x32xf32>
    %528 = math.exp %527 : vector<2x32xf32>
    %cst_191 = arith.constant 1.000000e+00 : f32
    %529 = vector.broadcast %cst_191 : f32 to vector<2x32xf32>
    %530 = arith.addf %529, %528 : vector<2x32xf32>
    %531 = arith.divf %529, %530 : vector<2x32xf32>
    %532 = arith.mulf %523, %505 : vector<2x32xf32>
    %533 = arith.mulf %517, %525 : vector<2x32xf32>
    %534 = arith.addf %532, %533 : vector<2x32xf32>
    %535 = math.tanh %534 : vector<2x32xf32>
    %536 = arith.mulf %531, %535 : vector<2x32xf32>
    %c2_192 = arith.constant 2 : index
    %c32_193 = arith.constant 32 : index
    %537 = vector.load %arg15[%c2_192, %c32_193] : memref<16x64xf32, #tpu.memory_space<vmem>>, vector<2x32xf32>
    tpu.vector_store %arg15[%c2_192, %c32_193], %536 {strides = array<i32>} : memref<16x64xf32, #tpu.memory_space<vmem>>, vector<2x32xf32>,
    %538 = vector.extract_strided_slice %330 {offsets = [0, 0], sizes = [2, 128], strides = [1, 1]} : vector<16x128xf32> to vector<2x128xf32>
    %cst_194 = arith.constant dense<0.000000e+00> : vector<2x128xf32>
    %539 = tpu.matmul %536, %332, %cst_194 {dimension_numbers = #tpu.dot_dimension_numbers<[1], [0], [0], [1], [0, 0, 1, 1], [], []>} : vector<2x32xf32>, vector<32x128xf32>, vector<2x128xf32> -> vector<2x128xf32>
    %540 = arith.addf %538, %539 : vector<2x128xf32>
    %541 = vector.extract_strided_slice %540 {offsets = [0, 0], sizes = [2, 32], strides = [1, 1]} : vector<2x128xf32> to vector<2x32xf32>
    %542 = arith.negf %541 : vector<2x32xf32>
    %543 = math.exp %542 : vector<2x32xf32>
    %cst_195 = arith.constant 1.000000e+00 : f32
    %544 = vector.broadcast %cst_195 : f32 to vector<2x32xf32>
    %545 = arith.addf %544, %543 : vector<2x32xf32>
    %546 = arith.divf %544, %545 : vector<2x32xf32>
    %547 = vector.extract_strided_slice %540 {offsets = [0, 32], sizes = [2, 32], strides = [1, 1]} : vector<2x128xf32> to vector<2x32xf32>
    %548 = arith.negf %547 : vector<2x32xf32>
    %549 = math.exp %548 : vector<2x32xf32>
    %cst_196 = arith.constant 1.000000e+00 : f32
    %550 = vector.broadcast %cst_196 : f32 to vector<2x32xf32>
    %551 = arith.addf %550, %549 : vector<2x32xf32>
    %552 = arith.divf %550, %551 : vector<2x32xf32>
    %553 = vector.extract_strided_slice %540 {offsets = [0, 64], sizes = [2, 32], strides = [1, 1]} : vector<2x128xf32> to vector<2x32xf32>
    %554 = math.tanh %553 : vector<2x32xf32>
    %555 = vector.extract_strided_slice %540 {offsets = [0, 96], sizes = [2, 32], strides = [1, 1]} : vector<2x128xf32> to vector<2x32xf32>
    %556 = arith.negf %555 : vector<2x32xf32>
    %557 = math.exp %556 : vector<2x32xf32>
    %cst_197 = arith.constant 1.000000e+00 : f32
    %558 = vector.broadcast %cst_197 : f32 to vector<2x32xf32>
    %559 = arith.addf %558, %557 : vector<2x32xf32>
    %560 = arith.divf %558, %559 : vector<2x32xf32>
    %561 = arith.mulf %552, %534 : vector<2x32xf32>
    %562 = arith.mulf %546, %554 : vector<2x32xf32>
    %563 = arith.addf %561, %562 : vector<2x32xf32>
    %564 = math.tanh %563 : vector<2x32xf32>
    %565 = arith.mulf %560, %564 : vector<2x32xf32>
    %c0_198 = arith.constant 0 : index
    %c32_199 = arith.constant 32 : index
    %566 = vector.load %arg15[%c0_198, %c32_199] : memref<16x64xf32, #tpu.memory_space<vmem>>, vector<2x32xf32>
    tpu.vector_store %arg15[%c0_198, %c32_199], %565 {strides = array<i32>} : memref<16x64xf32, #tpu.memory_space<vmem>>, vector<2x32xf32>,
    %c0_200 = arith.constant 0 : index
    %c0_201 = arith.constant 0 : index
    %567 = vector.load %arg15[%c0_200, %c0_201] : memref<16x64xf32, #tpu.memory_space<vmem>>, vector<16x64xf32>
    %c0_202 = arith.constant 0 : index
    %c0_203 = arith.constant 0 : index
    %c0_204 = arith.constant 0 : index
    %568 = vector.load %arg6[%c0_202, %c0_203, %c0_204] : memref<2x64x128xf32, #tpu.memory_space<vmem>>, vector<1x64x128xf32>
    %569 = vector.shape_cast %568 : vector<1x64x128xf32> to vector<64x128xf32>
    %cst_205 = arith.constant dense<0.000000e+00> : vector<16x128xf32>
    %570 = tpu.matmul %567, %569, %cst_205 {dimension_numbers = #tpu.dot_dimension_numbers<[1], [0], [0], [1], [0, 0, 1, 1], [], []>} : vector<16x64xf32>, vector<64x128xf32>, vector<16x128xf32> -> vector<16x128xf32>
    %c0_206 = arith.constant 0 : index
    %c0_207 = arith.constant 0 : index
    %c0_208 = arith.constant 0 : index
    %571 = vector.load %arg8[%c0_206, %c0_207, %c0_208] : memref<2x1x128xf32, #tpu.memory_space<vmem>>, vector<1x1x128xf32>
    %572 = vector.shape_cast %571 : vector<1x1x128xf32> to vector<1x128xf32>
    %573 = vector.broadcast %572 : vector<1x128xf32> to vector<16x128xf32>
    %574 = arith.addf %570, %573 : vector<16x128xf32>
    %c0_209 = arith.constant 0 : index
    %c0_210 = arith.constant 0 : index
    %c0_211 = arith.constant 0 : index
    %575 = vector.load %arg7[%c0_209, %c0_210, %c0_211] : memref<2x32x128xf32, #tpu.memory_space<vmem>>, vector<1x32x128xf32>
    %576 = vector.shape_cast %575 : vector<1x32x128xf32> to vector<32x128xf32>
    %cst_212 = arith.constant 0.000000e+00 : f32
    %577 = vector.broadcast %cst_212 : f32 to vector<2x32xf32>
    %cst_213 = arith.constant 0.000000e+00 : f32
    %578 = vector.broadcast %cst_213 : f32 to vector<2x32xf32>
    %579 = vector.extract_strided_slice %574 {offsets = [0, 0], sizes = [2, 128], strides = [1, 1]} : vector<16x128xf32> to vector<2x128xf32>
    %cst_214 = arith.constant dense<0.000000e+00> : vector<2x128xf32>
    %580 = tpu.matmul %577, %576, %cst_214 {dimension_numbers = #tpu.dot_dimension_numbers<[1], [0], [0], [1], [0, 0, 1, 1], [], []>} : vector<2x32xf32>, vector<32x128xf32>, vector<2x128xf32> -> vector<2x128xf32>
    %581 = arith.addf %579, %580 : vector<2x128xf32>
    %582 = vector.extract_strided_slice %581 {offsets = [0, 0], sizes = [2, 32], strides = [1, 1]} : vector<2x128xf32> to vector<2x32xf32>
    %583 = arith.negf %582 : vector<2x32xf32>
    %584 = math.exp %583 : vector<2x32xf32>
    %cst_215 = arith.constant 1.000000e+00 : f32
    %585 = vector.broadcast %cst_215 : f32 to vector<2x32xf32>
    %586 = arith.addf %585, %584 : vector<2x32xf32>
    %587 = arith.divf %585, %586 : vector<2x32xf32>
    %588 = vector.extract_strided_slice %581 {offsets = [0, 32], sizes = [2, 32], strides = [1, 1]} : vector<2x128xf32> to vector<2x32xf32>
    %589 = arith.negf %588 : vector<2x32xf32>
    %590 = math.exp %589 : vector<2x32xf32>
    %cst_216 = arith.constant 1.000000e+00 : f32
    %591 = vector.broadcast %cst_216 : f32 to vector<2x32xf32>
    %592 = arith.addf %591, %590 : vector<2x32xf32>
    %593 = arith.divf %591, %592 : vector<2x32xf32>
    %594 = vector.extract_strided_slice %581 {offsets = [0, 64], sizes = [2, 32], strides = [1, 1]} : vector<2x128xf32> to vector<2x32xf32>
    %595 = math.tanh %594 : vector<2x32xf32>
    %596 = vector.extract_strided_slice %581 {offsets = [0, 96], sizes = [2, 32], strides = [1, 1]} : vector<2x128xf32> to vector<2x32xf32>
    %597 = arith.negf %596 : vector<2x32xf32>
    %598 = math.exp %597 : vector<2x32xf32>
    %cst_217 = arith.constant 1.000000e+00 : f32
    %599 = vector.broadcast %cst_217 : f32 to vector<2x32xf32>
    %600 = arith.addf %599, %598 : vector<2x32xf32>
    %601 = arith.divf %599, %600 : vector<2x32xf32>
    %602 = arith.mulf %593, %578 : vector<2x32xf32>
    %603 = arith.mulf %587, %595 : vector<2x32xf32>
    %604 = arith.addf %602, %603 : vector<2x32xf32>
    %605 = math.tanh %604 : vector<2x32xf32>
    %606 = arith.mulf %601, %605 : vector<2x32xf32>
    %c0_218 = arith.constant 0 : index
    %c0_219 = arith.constant 0 : index
    %607 = vector.load %arg16[%c0_218, %c0_219] : memref<16x64xf32, #tpu.memory_space<vmem>>, vector<2x32xf32>
    tpu.vector_store %arg16[%c0_218, %c0_219], %606 {strides = array<i32>} : memref<16x64xf32, #tpu.memory_space<vmem>>, vector<2x32xf32>,
    %608 = vector.extract_strided_slice %574 {offsets = [2, 0], sizes = [2, 128], strides = [1, 1]} : vector<16x128xf32> to vector<2x128xf32>
    %cst_220 = arith.constant dense<0.000000e+00> : vector<2x128xf32>
    %609 = tpu.matmul %606, %576, %cst_220 {dimension_numbers = #tpu.dot_dimension_numbers<[1], [0], [0], [1], [0, 0, 1, 1], [], []>} : vector<2x32xf32>, vector<32x128xf32>, vector<2x128xf32> -> vector<2x128xf32>
    %610 = arith.addf %608, %609 : vector<2x128xf32>
    %611 = vector.extract_strided_slice %610 {offsets = [0, 0], sizes = [2, 32], strides = [1, 1]} : vector<2x128xf32> to vector<2x32xf32>
    %612 = arith.negf %611 : vector<2x32xf32>
    %613 = math.exp %612 : vector<2x32xf32>
    %cst_221 = arith.constant 1.000000e+00 : f32
    %614 = vector.broadcast %cst_221 : f32 to vector<2x32xf32>
    %615 = arith.addf %614, %613 : vector<2x32xf32>
    %616 = arith.divf %614, %615 : vector<2x32xf32>
    %617 = vector.extract_strided_slice %610 {offsets = [0, 32], sizes = [2, 32], strides = [1, 1]} : vector<2x128xf32> to vector<2x32xf32>
    %618 = arith.negf %617 : vector<2x32xf32>
    %619 = math.exp %618 : vector<2x32xf32>
    %cst_222 = arith.constant 1.000000e+00 : f32
    %620 = vector.broadcast %cst_222 : f32 to vector<2x32xf32>
    %621 = arith.addf %620, %619 : vector<2x32xf32>
    %622 = arith.divf %620, %621 : vector<2x32xf32>
    %623 = vector.extract_strided_slice %610 {offsets = [0, 64], sizes = [2, 32], strides = [1, 1]} : vector<2x128xf32> to vector<2x32xf32>
    %624 = math.tanh %623 : vector<2x32xf32>
    %625 = vector.extract_strided_slice %610 {offsets = [0, 96], sizes = [2, 32], strides = [1, 1]} : vector<2x128xf32> to vector<2x32xf32>
    %626 = arith.negf %625 : vector<2x32xf32>
    %627 = math.exp %626 : vector<2x32xf32>
    %cst_223 = arith.constant 1.000000e+00 : f32
    %628 = vector.broadcast %cst_223 : f32 to vector<2x32xf32>
    %629 = arith.addf %628, %627 : vector<2x32xf32>
    %630 = arith.divf %628, %629 : vector<2x32xf32>
    %631 = arith.mulf %622, %604 : vector<2x32xf32>
    %632 = arith.mulf %616, %624 : vector<2x32xf32>
    %633 = arith.addf %631, %632 : vector<2x32xf32>
    %634 = math.tanh %633 : vector<2x32xf32>
    %635 = arith.mulf %630, %634 : vector<2x32xf32>
    %c2_224 = arith.constant 2 : index
    %c0_225 = arith.constant 0 : index
    %636 = vector.load %arg16[%c2_224, %c0_225] : memref<16x64xf32, #tpu.memory_space<vmem>>, vector<2x32xf32>
    tpu.vector_store %arg16[%c2_224, %c0_225], %635 {strides = array<i32>} : memref<16x64xf32, #tpu.memory_space<vmem>>, vector<2x32xf32>,
    %637 = vector.extract_strided_slice %574 {offsets = [4, 0], sizes = [2, 128], strides = [1, 1]} : vector<16x128xf32> to vector<2x128xf32>
    %cst_226 = arith.constant dense<0.000000e+00> : vector<2x128xf32>
    %638 = tpu.matmul %635, %576, %cst_226 {dimension_numbers = #tpu.dot_dimension_numbers<[1], [0], [0], [1], [0, 0, 1, 1], [], []>} : vector<2x32xf32>, vector<32x128xf32>, vector<2x128xf32> -> vector<2x128xf32>
    %639 = arith.addf %637, %638 : vector<2x128xf32>
    %640 = vector.extract_strided_slice %639 {offsets = [0, 0], sizes = [2, 32], strides = [1, 1]} : vector<2x128xf32> to vector<2x32xf32>
    %641 = arith.negf %640 : vector<2x32xf32>
    %642 = math.exp %641 : vector<2x32xf32>
    %cst_227 = arith.constant 1.000000e+00 : f32
    %643 = vector.broadcast %cst_227 : f32 to vector<2x32xf32>
    %644 = arith.addf %643, %642 : vector<2x32xf32>
    %645 = arith.divf %643, %644 : vector<2x32xf32>
    %646 = vector.extract_strided_slice %639 {offsets = [0, 32], sizes = [2, 32], strides = [1, 1]} : vector<2x128xf32> to vector<2x32xf32>
    %647 = arith.negf %646 : vector<2x32xf32>
    %648 = math.exp %647 : vector<2x32xf32>
    %cst_228 = arith.constant 1.000000e+00 : f32
    %649 = vector.broadcast %cst_228 : f32 to vector<2x32xf32>
    %650 = arith.addf %649, %648 : vector<2x32xf32>
    %651 = arith.divf %649, %650 : vector<2x32xf32>
    %652 = vector.extract_strided_slice %639 {offsets = [0, 64], sizes = [2, 32], strides = [1, 1]} : vector<2x128xf32> to vector<2x32xf32>
    %653 = math.tanh %652 : vector<2x32xf32>
    %654 = vector.extract_strided_slice %639 {offsets = [0, 96], sizes = [2, 32], strides = [1, 1]} : vector<2x128xf32> to vector<2x32xf32>
    %655 = arith.negf %654 : vector<2x32xf32>
    %656 = math.exp %655 : vector<2x32xf32>
    %cst_229 = arith.constant 1.000000e+00 : f32
    %657 = vector.broadcast %cst_229 : f32 to vector<2x32xf32>
    %658 = arith.addf %657, %656 : vector<2x32xf32>
    %659 = arith.divf %657, %658 : vector<2x32xf32>
    %660 = arith.mulf %651, %633 : vector<2x32xf32>
    %661 = arith.mulf %645, %653 : vector<2x32xf32>
    %662 = arith.addf %660, %661 : vector<2x32xf32>
    %663 = math.tanh %662 : vector<2x32xf32>
    %664 = arith.mulf %659, %663 : vector<2x32xf32>
    %c4_230 = arith.constant 4 : index
    %c0_231 = arith.constant 0 : index
    %665 = vector.load %arg16[%c4_230, %c0_231] : memref<16x64xf32, #tpu.memory_space<vmem>>, vector<2x32xf32>
    tpu.vector_store %arg16[%c4_230, %c0_231], %664 {strides = array<i32>} : memref<16x64xf32, #tpu.memory_space<vmem>>, vector<2x32xf32>,
    %666 = vector.extract_strided_slice %574 {offsets = [6, 0], sizes = [2, 128], strides = [1, 1]} : vector<16x128xf32> to vector<2x128xf32>
    %cst_232 = arith.constant dense<0.000000e+00> : vector<2x128xf32>
    %667 = tpu.matmul %664, %576, %cst_232 {dimension_numbers = #tpu.dot_dimension_numbers<[1], [0], [0], [1], [0, 0, 1, 1], [], []>} : vector<2x32xf32>, vector<32x128xf32>, vector<2x128xf32> -> vector<2x128xf32>
    %668 = arith.addf %666, %667 : vector<2x128xf32>
    %669 = vector.extract_strided_slice %668 {offsets = [0, 0], sizes = [2, 32], strides = [1, 1]} : vector<2x128xf32> to vector<2x32xf32>
    %670 = arith.negf %669 : vector<2x32xf32>
    %671 = math.exp %670 : vector<2x32xf32>
    %cst_233 = arith.constant 1.000000e+00 : f32
    %672 = vector.broadcast %cst_233 : f32 to vector<2x32xf32>
    %673 = arith.addf %672, %671 : vector<2x32xf32>
    %674 = arith.divf %672, %673 : vector<2x32xf32>
    %675 = vector.extract_strided_slice %668 {offsets = [0, 32], sizes = [2, 32], strides = [1, 1]} : vector<2x128xf32> to vector<2x32xf32>
    %676 = arith.negf %675 : vector<2x32xf32>
    %677 = math.exp %676 : vector<2x32xf32>
    %cst_234 = arith.constant 1.000000e+00 : f32
    %678 = vector.broadcast %cst_234 : f32 to vector<2x32xf32>
    %679 = arith.addf %678, %677 : vector<2x32xf32>
    %680 = arith.divf %678, %679 : vector<2x32xf32>
    %681 = vector.extract_strided_slice %668 {offsets = [0, 64], sizes = [2, 32], strides = [1, 1]} : vector<2x128xf32> to vector<2x32xf32>
    %682 = math.tanh %681 : vector<2x32xf32>
    %683 = vector.extract_strided_slice %668 {offsets = [0, 96], sizes = [2, 32], strides = [1, 1]} : vector<2x128xf32> to vector<2x32xf32>
    %684 = arith.negf %683 : vector<2x32xf32>
    %685 = math.exp %684 : vector<2x32xf32>
    %cst_235 = arith.constant 1.000000e+00 : f32
    %686 = vector.broadcast %cst_235 : f32 to vector<2x32xf32>
    %687 = arith.addf %686, %685 : vector<2x32xf32>
    %688 = arith.divf %686, %687 : vector<2x32xf32>
    %689 = arith.mulf %680, %662 : vector<2x32xf32>
    %690 = arith.mulf %674, %682 : vector<2x32xf32>
    %691 = arith.addf %689, %690 : vector<2x32xf32>
    %692 = math.tanh %691 : vector<2x32xf32>
    %693 = arith.mulf %688, %692 : vector<2x32xf32>
    %c6_236 = arith.constant 6 : index
    %c0_237 = arith.constant 0 : index
    %694 = vector.load %arg16[%c6_236, %c0_237] : memref<16x64xf32, #tpu.memory_space<vmem>>, vector<2x32xf32>
    tpu.vector_store %arg16[%c6_236, %c0_237], %693 {strides = array<i32>} : memref<16x64xf32, #tpu.memory_space<vmem>>, vector<2x32xf32>,
    %695 = vector.extract_strided_slice %574 {offsets = [8, 0], sizes = [2, 128], strides = [1, 1]} : vector<16x128xf32> to vector<2x128xf32>
    %cst_238 = arith.constant dense<0.000000e+00> : vector<2x128xf32>
    %696 = tpu.matmul %693, %576, %cst_238 {dimension_numbers = #tpu.dot_dimension_numbers<[1], [0], [0], [1], [0, 0, 1, 1], [], []>} : vector<2x32xf32>, vector<32x128xf32>, vector<2x128xf32> -> vector<2x128xf32>
    %697 = arith.addf %695, %696 : vector<2x128xf32>
    %698 = vector.extract_strided_slice %697 {offsets = [0, 0], sizes = [2, 32], strides = [1, 1]} : vector<2x128xf32> to vector<2x32xf32>
    %699 = arith.negf %698 : vector<2x32xf32>
    %700 = math.exp %699 : vector<2x32xf32>
    %cst_239 = arith.constant 1.000000e+00 : f32
    %701 = vector.broadcast %cst_239 : f32 to vector<2x32xf32>
    %702 = arith.addf %701, %700 : vector<2x32xf32>
    %703 = arith.divf %701, %702 : vector<2x32xf32>
    %704 = vector.extract_strided_slice %697 {offsets = [0, 32], sizes = [2, 32], strides = [1, 1]} : vector<2x128xf32> to vector<2x32xf32>
    %705 = arith.negf %704 : vector<2x32xf32>
    %706 = math.exp %705 : vector<2x32xf32>
    %cst_240 = arith.constant 1.000000e+00 : f32
    %707 = vector.broadcast %cst_240 : f32 to vector<2x32xf32>
    %708 = arith.addf %707, %706 : vector<2x32xf32>
    %709 = arith.divf %707, %708 : vector<2x32xf32>
    %710 = vector.extract_strided_slice %697 {offsets = [0, 64], sizes = [2, 32], strides = [1, 1]} : vector<2x128xf32> to vector<2x32xf32>
    %711 = math.tanh %710 : vector<2x32xf32>
    %712 = vector.extract_strided_slice %697 {offsets = [0, 96], sizes = [2, 32], strides = [1, 1]} : vector<2x128xf32> to vector<2x32xf32>
    %713 = arith.negf %712 : vector<2x32xf32>
    %714 = math.exp %713 : vector<2x32xf32>
    %cst_241 = arith.constant 1.000000e+00 : f32
    %715 = vector.broadcast %cst_241 : f32 to vector<2x32xf32>
    %716 = arith.addf %715, %714 : vector<2x32xf32>
    %717 = arith.divf %715, %716 : vector<2x32xf32>
    %718 = arith.mulf %709, %691 : vector<2x32xf32>
    %719 = arith.mulf %703, %711 : vector<2x32xf32>
    %720 = arith.addf %718, %719 : vector<2x32xf32>
    %721 = math.tanh %720 : vector<2x32xf32>
    %722 = arith.mulf %717, %721 : vector<2x32xf32>
    %c8_242 = arith.constant 8 : index
    %c0_243 = arith.constant 0 : index
    %723 = vector.load %arg16[%c8_242, %c0_243] : memref<16x64xf32, #tpu.memory_space<vmem>>, vector<2x32xf32>
    tpu.vector_store %arg16[%c8_242, %c0_243], %722 {strides = array<i32>} : memref<16x64xf32, #tpu.memory_space<vmem>>, vector<2x32xf32>,
    %724 = vector.extract_strided_slice %574 {offsets = [10, 0], sizes = [2, 128], strides = [1, 1]} : vector<16x128xf32> to vector<2x128xf32>
    %cst_244 = arith.constant dense<0.000000e+00> : vector<2x128xf32>
    %725 = tpu.matmul %722, %576, %cst_244 {dimension_numbers = #tpu.dot_dimension_numbers<[1], [0], [0], [1], [0, 0, 1, 1], [], []>} : vector<2x32xf32>, vector<32x128xf32>, vector<2x128xf32> -> vector<2x128xf32>
    %726 = arith.addf %724, %725 : vector<2x128xf32>
    %727 = vector.extract_strided_slice %726 {offsets = [0, 0], sizes = [2, 32], strides = [1, 1]} : vector<2x128xf32> to vector<2x32xf32>
    %728 = arith.negf %727 : vector<2x32xf32>
    %729 = math.exp %728 : vector<2x32xf32>
    %cst_245 = arith.constant 1.000000e+00 : f32
    %730 = vector.broadcast %cst_245 : f32 to vector<2x32xf32>
    %731 = arith.addf %730, %729 : vector<2x32xf32>
    %732 = arith.divf %730, %731 : vector<2x32xf32>
    %733 = vector.extract_strided_slice %726 {offsets = [0, 32], sizes = [2, 32], strides = [1, 1]} : vector<2x128xf32> to vector<2x32xf32>
    %734 = arith.negf %733 : vector<2x32xf32>
    %735 = math.exp %734 : vector<2x32xf32>
    %cst_246 = arith.constant 1.000000e+00 : f32
    %736 = vector.broadcast %cst_246 : f32 to vector<2x32xf32>
    %737 = arith.addf %736, %735 : vector<2x32xf32>
    %738 = arith.divf %736, %737 : vector<2x32xf32>
    %739 = vector.extract_strided_slice %726 {offsets = [0, 64], sizes = [2, 32], strides = [1, 1]} : vector<2x128xf32> to vector<2x32xf32>
    %740 = math.tanh %739 : vector<2x32xf32>
    %741 = vector.extract_strided_slice %726 {offsets = [0, 96], sizes = [2, 32], strides = [1, 1]} : vector<2x128xf32> to vector<2x32xf32>
    %742 = arith.negf %741 : vector<2x32xf32>
    %743 = math.exp %742 : vector<2x32xf32>
    %cst_247 = arith.constant 1.000000e+00 : f32
    %744 = vector.broadcast %cst_247 : f32 to vector<2x32xf32>
    %745 = arith.addf %744, %743 : vector<2x32xf32>
    %746 = arith.divf %744, %745 : vector<2x32xf32>
    %747 = arith.mulf %738, %720 : vector<2x32xf32>
    %748 = arith.mulf %732, %740 : vector<2x32xf32>
    %749 = arith.addf %747, %748 : vector<2x32xf32>
    %750 = math.tanh %749 : vector<2x32xf32>
    %751 = arith.mulf %746, %750 : vector<2x32xf32>
    %c10_248 = arith.constant 10 : index
    %c0_249 = arith.constant 0 : index
    %752 = vector.load %arg16[%c10_248, %c0_249] : memref<16x64xf32, #tpu.memory_space<vmem>>, vector<2x32xf32>
    tpu.vector_store %arg16[%c10_248, %c0_249], %751 {strides = array<i32>} : memref<16x64xf32, #tpu.memory_space<vmem>>, vector<2x32xf32>,
    %753 = vector.extract_strided_slice %574 {offsets = [12, 0], sizes = [2, 128], strides = [1, 1]} : vector<16x128xf32> to vector<2x128xf32>
    %cst_250 = arith.constant dense<0.000000e+00> : vector<2x128xf32>
    %754 = tpu.matmul %751, %576, %cst_250 {dimension_numbers = #tpu.dot_dimension_numbers<[1], [0], [0], [1], [0, 0, 1, 1], [], []>} : vector<2x32xf32>, vector<32x128xf32>, vector<2x128xf32> -> vector<2x128xf32>
    %755 = arith.addf %753, %754 : vector<2x128xf32>
    %756 = vector.extract_strided_slice %755 {offsets = [0, 0], sizes = [2, 32], strides = [1, 1]} : vector<2x128xf32> to vector<2x32xf32>
    %757 = arith.negf %756 : vector<2x32xf32>
    %758 = math.exp %757 : vector<2x32xf32>
    %cst_251 = arith.constant 1.000000e+00 : f32
    %759 = vector.broadcast %cst_251 : f32 to vector<2x32xf32>
    %760 = arith.addf %759, %758 : vector<2x32xf32>
    %761 = arith.divf %759, %760 : vector<2x32xf32>
    %762 = vector.extract_strided_slice %755 {offsets = [0, 32], sizes = [2, 32], strides = [1, 1]} : vector<2x128xf32> to vector<2x32xf32>
    %763 = arith.negf %762 : vector<2x32xf32>
    %764 = math.exp %763 : vector<2x32xf32>
    %cst_252 = arith.constant 1.000000e+00 : f32
    %765 = vector.broadcast %cst_252 : f32 to vector<2x32xf32>
    %766 = arith.addf %765, %764 : vector<2x32xf32>
    %767 = arith.divf %765, %766 : vector<2x32xf32>
    %768 = vector.extract_strided_slice %755 {offsets = [0, 64], sizes = [2, 32], strides = [1, 1]} : vector<2x128xf32> to vector<2x32xf32>
    %769 = math.tanh %768 : vector<2x32xf32>
    %770 = vector.extract_strided_slice %755 {offsets = [0, 96], sizes = [2, 32], strides = [1, 1]} : vector<2x128xf32> to vector<2x32xf32>
    %771 = arith.negf %770 : vector<2x32xf32>
    %772 = math.exp %771 : vector<2x32xf32>
    %cst_253 = arith.constant 1.000000e+00 : f32
    %773 = vector.broadcast %cst_253 : f32 to vector<2x32xf32>
    %774 = arith.addf %773, %772 : vector<2x32xf32>
    %775 = arith.divf %773, %774 : vector<2x32xf32>
    %776 = arith.mulf %767, %749 : vector<2x32xf32>
    %777 = arith.mulf %761, %769 : vector<2x32xf32>
    %778 = arith.addf %776, %777 : vector<2x32xf32>
    %779 = math.tanh %778 : vector<2x32xf32>
    %780 = arith.mulf %775, %779 : vector<2x32xf32>
    %c12_254 = arith.constant 12 : index
    %c0_255 = arith.constant 0 : index
    %781 = vector.load %arg16[%c12_254, %c0_255] : memref<16x64xf32, #tpu.memory_space<vmem>>, vector<2x32xf32>
    tpu.vector_store %arg16[%c12_254, %c0_255], %780 {strides = array<i32>} : memref<16x64xf32, #tpu.memory_space<vmem>>, vector<2x32xf32>,
    %782 = vector.extract_strided_slice %574 {offsets = [14, 0], sizes = [2, 128], strides = [1, 1]} : vector<16x128xf32> to vector<2x128xf32>
    %cst_256 = arith.constant dense<0.000000e+00> : vector<2x128xf32>
    %783 = tpu.matmul %780, %576, %cst_256 {dimension_numbers = #tpu.dot_dimension_numbers<[1], [0], [0], [1], [0, 0, 1, 1], [], []>} : vector<2x32xf32>, vector<32x128xf32>, vector<2x128xf32> -> vector<2x128xf32>
    %784 = arith.addf %782, %783 : vector<2x128xf32>
    %785 = vector.extract_strided_slice %784 {offsets = [0, 0], sizes = [2, 32], strides = [1, 1]} : vector<2x128xf32> to vector<2x32xf32>
    %786 = arith.negf %785 : vector<2x32xf32>
    %787 = math.exp %786 : vector<2x32xf32>
    %cst_257 = arith.constant 1.000000e+00 : f32
    %788 = vector.broadcast %cst_257 : f32 to vector<2x32xf32>
    %789 = arith.addf %788, %787 : vector<2x32xf32>
    %790 = arith.divf %788, %789 : vector<2x32xf32>
    %791 = vector.extract_strided_slice %784 {offsets = [0, 32], sizes = [2, 32], strides = [1, 1]} : vector<2x128xf32> to vector<2x32xf32>
    %792 = arith.negf %791 : vector<2x32xf32>
    %793 = math.exp %792 : vector<2x32xf32>
    %cst_258 = arith.constant 1.000000e+00 : f32
    %794 = vector.broadcast %cst_258 : f32 to vector<2x32xf32>
    %795 = arith.addf %794, %793 : vector<2x32xf32>
    %796 = arith.divf %794, %795 : vector<2x32xf32>
    %797 = vector.extract_strided_slice %784 {offsets = [0, 64], sizes = [2, 32], strides = [1, 1]} : vector<2x128xf32> to vector<2x32xf32>
    %798 = math.tanh %797 : vector<2x32xf32>
    %799 = vector.extract_strided_slice %784 {offsets = [0, 96], sizes = [2, 32], strides = [1, 1]} : vector<2x128xf32> to vector<2x32xf32>
    %800 = arith.negf %799 : vector<2x32xf32>
    %801 = math.exp %800 : vector<2x32xf32>
    %cst_259 = arith.constant 1.000000e+00 : f32
    %802 = vector.broadcast %cst_259 : f32 to vector<2x32xf32>
    %803 = arith.addf %802, %801 : vector<2x32xf32>
    %804 = arith.divf %802, %803 : vector<2x32xf32>
    %805 = arith.mulf %796, %778 : vector<2x32xf32>
    %806 = arith.mulf %790, %798 : vector<2x32xf32>
    %807 = arith.addf %805, %806 : vector<2x32xf32>
    %808 = math.tanh %807 : vector<2x32xf32>
    %809 = arith.mulf %804, %808 : vector<2x32xf32>
    %c14_260 = arith.constant 14 : index
    %c0_261 = arith.constant 0 : index
    %810 = vector.load %arg16[%c14_260, %c0_261] : memref<16x64xf32, #tpu.memory_space<vmem>>, vector<2x32xf32>
    tpu.vector_store %arg16[%c14_260, %c0_261], %809 {strides = array<i32>} : memref<16x64xf32, #tpu.memory_space<vmem>>, vector<2x32xf32>,
    %c1_262 = arith.constant 1 : index
    %c0_263 = arith.constant 0 : index
    %c0_264 = arith.constant 0 : index
    %811 = vector.load %arg6[%c1_262, %c0_263, %c0_264] : memref<2x64x128xf32, #tpu.memory_space<vmem>>, vector<1x64x128xf32>
    %812 = vector.shape_cast %811 : vector<1x64x128xf32> to vector<64x128xf32>
    %cst_265 = arith.constant dense<0.000000e+00> : vector<16x128xf32>
    %813 = tpu.matmul %567, %812, %cst_265 {dimension_numbers = #tpu.dot_dimension_numbers<[1], [0], [0], [1], [0, 0, 1, 1], [], []>} : vector<16x64xf32>, vector<64x128xf32>, vector<16x128xf32> -> vector<16x128xf32>
    %c1_266 = arith.constant 1 : index
    %c0_267 = arith.constant 0 : index
    %c0_268 = arith.constant 0 : index
    %814 = vector.load %arg8[%c1_266, %c0_267, %c0_268] : memref<2x1x128xf32, #tpu.memory_space<vmem>>, vector<1x1x128xf32>
    %815 = vector.shape_cast %814 : vector<1x1x128xf32> to vector<1x128xf32>
    %816 = vector.broadcast %815 : vector<1x128xf32> to vector<16x128xf32>
    %817 = arith.addf %813, %816 : vector<16x128xf32>
    %c1_269 = arith.constant 1 : index
    %c0_270 = arith.constant 0 : index
    %c0_271 = arith.constant 0 : index
    %818 = vector.load %arg7[%c1_269, %c0_270, %c0_271] : memref<2x32x128xf32, #tpu.memory_space<vmem>>, vector<1x32x128xf32>
    %819 = vector.shape_cast %818 : vector<1x32x128xf32> to vector<32x128xf32>
    %cst_272 = arith.constant 0.000000e+00 : f32
    %820 = vector.broadcast %cst_272 : f32 to vector<2x32xf32>
    %cst_273 = arith.constant 0.000000e+00 : f32
    %821 = vector.broadcast %cst_273 : f32 to vector<2x32xf32>
    %822 = vector.extract_strided_slice %817 {offsets = [14, 0], sizes = [2, 128], strides = [1, 1]} : vector<16x128xf32> to vector<2x128xf32>
    %cst_274 = arith.constant dense<0.000000e+00> : vector<2x128xf32>
    %823 = tpu.matmul %820, %819, %cst_274 {dimension_numbers = #tpu.dot_dimension_numbers<[1], [0], [0], [1], [0, 0, 1, 1], [], []>} : vector<2x32xf32>, vector<32x128xf32>, vector<2x128xf32> -> vector<2x128xf32>
    %824 = arith.addf %822, %823 : vector<2x128xf32>
    %825 = vector.extract_strided_slice %824 {offsets = [0, 0], sizes = [2, 32], strides = [1, 1]} : vector<2x128xf32> to vector<2x32xf32>
    %826 = arith.negf %825 : vector<2x32xf32>
    %827 = math.exp %826 : vector<2x32xf32>
    %cst_275 = arith.constant 1.000000e+00 : f32
    %828 = vector.broadcast %cst_275 : f32 to vector<2x32xf32>
    %829 = arith.addf %828, %827 : vector<2x32xf32>
    %830 = arith.divf %828, %829 : vector<2x32xf32>
    %831 = vector.extract_strided_slice %824 {offsets = [0, 32], sizes = [2, 32], strides = [1, 1]} : vector<2x128xf32> to vector<2x32xf32>
    %832 = arith.negf %831 : vector<2x32xf32>
    %833 = math.exp %832 : vector<2x32xf32>
    %cst_276 = arith.constant 1.000000e+00 : f32
    %834 = vector.broadcast %cst_276 : f32 to vector<2x32xf32>
    %835 = arith.addf %834, %833 : vector<2x32xf32>
    %836 = arith.divf %834, %835 : vector<2x32xf32>
    %837 = vector.extract_strided_slice %824 {offsets = [0, 64], sizes = [2, 32], strides = [1, 1]} : vector<2x128xf32> to vector<2x32xf32>
    %838 = math.tanh %837 : vector<2x32xf32>
    %839 = vector.extract_strided_slice %824 {offsets = [0, 96], sizes = [2, 32], strides = [1, 1]} : vector<2x128xf32> to vector<2x32xf32>
    %840 = arith.negf %839 : vector<2x32xf32>
    %841 = math.exp %840 : vector<2x32xf32>
    %cst_277 = arith.constant 1.000000e+00 : f32
    %842 = vector.broadcast %cst_277 : f32 to vector<2x32xf32>
    %843 = arith.addf %842, %841 : vector<2x32xf32>
    %844 = arith.divf %842, %843 : vector<2x32xf32>
    %845 = arith.mulf %836, %821 : vector<2x32xf32>
    %846 = arith.mulf %830, %838 : vector<2x32xf32>
    %847 = arith.addf %845, %846 : vector<2x32xf32>
    %848 = math.tanh %847 : vector<2x32xf32>
    %849 = arith.mulf %844, %848 : vector<2x32xf32>
    %c14_278 = arith.constant 14 : index
    %c32_279 = arith.constant 32 : index
    %850 = vector.load %arg16[%c14_278, %c32_279] : memref<16x64xf32, #tpu.memory_space<vmem>>, vector<2x32xf32>
    tpu.vector_store %arg16[%c14_278, %c32_279], %849 {strides = array<i32>} : memref<16x64xf32, #tpu.memory_space<vmem>>, vector<2x32xf32>,
    %851 = vector.extract_strided_slice %817 {offsets = [12, 0], sizes = [2, 128], strides = [1, 1]} : vector<16x128xf32> to vector<2x128xf32>
    %cst_280 = arith.constant dense<0.000000e+00> : vector<2x128xf32>
    %852 = tpu.matmul %849, %819, %cst_280 {dimension_numbers = #tpu.dot_dimension_numbers<[1], [0], [0], [1], [0, 0, 1, 1], [], []>} : vector<2x32xf32>, vector<32x128xf32>, vector<2x128xf32> -> vector<2x128xf32>
    %853 = arith.addf %851, %852 : vector<2x128xf32>
    %854 = vector.extract_strided_slice %853 {offsets = [0, 0], sizes = [2, 32], strides = [1, 1]} : vector<2x128xf32> to vector<2x32xf32>
    %855 = arith.negf %854 : vector<2x32xf32>
    %856 = math.exp %855 : vector<2x32xf32>
    %cst_281 = arith.constant 1.000000e+00 : f32
    %857 = vector.broadcast %cst_281 : f32 to vector<2x32xf32>
    %858 = arith.addf %857, %856 : vector<2x32xf32>
    %859 = arith.divf %857, %858 : vector<2x32xf32>
    %860 = vector.extract_strided_slice %853 {offsets = [0, 32], sizes = [2, 32], strides = [1, 1]} : vector<2x128xf32> to vector<2x32xf32>
    %861 = arith.negf %860 : vector<2x32xf32>
    %862 = math.exp %861 : vector<2x32xf32>
    %cst_282 = arith.constant 1.000000e+00 : f32
    %863 = vector.broadcast %cst_282 : f32 to vector<2x32xf32>
    %864 = arith.addf %863, %862 : vector<2x32xf32>
    %865 = arith.divf %863, %864 : vector<2x32xf32>
    %866 = vector.extract_strided_slice %853 {offsets = [0, 64], sizes = [2, 32], strides = [1, 1]} : vector<2x128xf32> to vector<2x32xf32>
    %867 = math.tanh %866 : vector<2x32xf32>
    %868 = vector.extract_strided_slice %853 {offsets = [0, 96], sizes = [2, 32], strides = [1, 1]} : vector<2x128xf32> to vector<2x32xf32>
    %869 = arith.negf %868 : vector<2x32xf32>
    %870 = math.exp %869 : vector<2x32xf32>
    %cst_283 = arith.constant 1.000000e+00 : f32
    %871 = vector.broadcast %cst_283 : f32 to vector<2x32xf32>
    %872 = arith.addf %871, %870 : vector<2x32xf32>
    %873 = arith.divf %871, %872 : vector<2x32xf32>
    %874 = arith.mulf %865, %847 : vector<2x32xf32>
    %875 = arith.mulf %859, %867 : vector<2x32xf32>
    %876 = arith.addf %874, %875 : vector<2x32xf32>
    %877 = math.tanh %876 : vector<2x32xf32>
    %878 = arith.mulf %873, %877 : vector<2x32xf32>
    %c12_284 = arith.constant 12 : index
    %c32_285 = arith.constant 32 : index
    %879 = vector.load %arg16[%c12_284, %c32_285] : memref<16x64xf32, #tpu.memory_space<vmem>>, vector<2x32xf32>
    tpu.vector_store %arg16[%c12_284, %c32_285], %878 {strides = array<i32>} : memref<16x64xf32, #tpu.memory_space<vmem>>, vector<2x32xf32>,
    %880 = vector.extract_strided_slice %817 {offsets = [10, 0], sizes = [2, 128], strides = [1, 1]} : vector<16x128xf32> to vector<2x128xf32>
    %cst_286 = arith.constant dense<0.000000e+00> : vector<2x128xf32>
    %881 = tpu.matmul %878, %819, %cst_286 {dimension_numbers = #tpu.dot_dimension_numbers<[1], [0], [0], [1], [0, 0, 1, 1], [], []>} : vector<2x32xf32>, vector<32x128xf32>, vector<2x128xf32> -> vector<2x128xf32>
    %882 = arith.addf %880, %881 : vector<2x128xf32>
    %883 = vector.extract_strided_slice %882 {offsets = [0, 0], sizes = [2, 32], strides = [1, 1]} : vector<2x128xf32> to vector<2x32xf32>
    %884 = arith.negf %883 : vector<2x32xf32>
    %885 = math.exp %884 : vector<2x32xf32>
    %cst_287 = arith.constant 1.000000e+00 : f32
    %886 = vector.broadcast %cst_287 : f32 to vector<2x32xf32>
    %887 = arith.addf %886, %885 : vector<2x32xf32>
    %888 = arith.divf %886, %887 : vector<2x32xf32>
    %889 = vector.extract_strided_slice %882 {offsets = [0, 32], sizes = [2, 32], strides = [1, 1]} : vector<2x128xf32> to vector<2x32xf32>
    %890 = arith.negf %889 : vector<2x32xf32>
    %891 = math.exp %890 : vector<2x32xf32>
    %cst_288 = arith.constant 1.000000e+00 : f32
    %892 = vector.broadcast %cst_288 : f32 to vector<2x32xf32>
    %893 = arith.addf %892, %891 : vector<2x32xf32>
    %894 = arith.divf %892, %893 : vector<2x32xf32>
    %895 = vector.extract_strided_slice %882 {offsets = [0, 64], sizes = [2, 32], strides = [1, 1]} : vector<2x128xf32> to vector<2x32xf32>
    %896 = math.tanh %895 : vector<2x32xf32>
    %897 = vector.extract_strided_slice %882 {offsets = [0, 96], sizes = [2, 32], strides = [1, 1]} : vector<2x128xf32> to vector<2x32xf32>
    %898 = arith.negf %897 : vector<2x32xf32>
    %899 = math.exp %898 : vector<2x32xf32>
    %cst_289 = arith.constant 1.000000e+00 : f32
    %900 = vector.broadcast %cst_289 : f32 to vector<2x32xf32>
    %901 = arith.addf %900, %899 : vector<2x32xf32>
    %902 = arith.divf %900, %901 : vector<2x32xf32>
    %903 = arith.mulf %894, %876 : vector<2x32xf32>
    %904 = arith.mulf %888, %896 : vector<2x32xf32>
    %905 = arith.addf %903, %904 : vector<2x32xf32>
    %906 = math.tanh %905 : vector<2x32xf32>
    %907 = arith.mulf %902, %906 : vector<2x32xf32>
    %c10_290 = arith.constant 10 : index
    %c32_291 = arith.constant 32 : index
    %908 = vector.load %arg16[%c10_290, %c32_291] : memref<16x64xf32, #tpu.memory_space<vmem>>, vector<2x32xf32>
    tpu.vector_store %arg16[%c10_290, %c32_291], %907 {strides = array<i32>} : memref<16x64xf32, #tpu.memory_space<vmem>>, vector<2x32xf32>,
    %909 = vector.extract_strided_slice %817 {offsets = [8, 0], sizes = [2, 128], strides = [1, 1]} : vector<16x128xf32> to vector<2x128xf32>
    %cst_292 = arith.constant dense<0.000000e+00> : vector<2x128xf32>
    %910 = tpu.matmul %907, %819, %cst_292 {dimension_numbers = #tpu.dot_dimension_numbers<[1], [0], [0], [1], [0, 0, 1, 1], [], []>} : vector<2x32xf32>, vector<32x128xf32>, vector<2x128xf32> -> vector<2x128xf32>
    %911 = arith.addf %909, %910 : vector<2x128xf32>
    %912 = vector.extract_strided_slice %911 {offsets = [0, 0], sizes = [2, 32], strides = [1, 1]} : vector<2x128xf32> to vector<2x32xf32>
    %913 = arith.negf %912 : vector<2x32xf32>
    %914 = math.exp %913 : vector<2x32xf32>
    %cst_293 = arith.constant 1.000000e+00 : f32
    %915 = vector.broadcast %cst_293 : f32 to vector<2x32xf32>
    %916 = arith.addf %915, %914 : vector<2x32xf32>
    %917 = arith.divf %915, %916 : vector<2x32xf32>
    %918 = vector.extract_strided_slice %911 {offsets = [0, 32], sizes = [2, 32], strides = [1, 1]} : vector<2x128xf32> to vector<2x32xf32>
    %919 = arith.negf %918 : vector<2x32xf32>
    %920 = math.exp %919 : vector<2x32xf32>
    %cst_294 = arith.constant 1.000000e+00 : f32
    %921 = vector.broadcast %cst_294 : f32 to vector<2x32xf32>
    %922 = arith.addf %921, %920 : vector<2x32xf32>
    %923 = arith.divf %921, %922 : vector<2x32xf32>
    %924 = vector.extract_strided_slice %911 {offsets = [0, 64], sizes = [2, 32], strides = [1, 1]} : vector<2x128xf32> to vector<2x32xf32>
    %925 = math.tanh %924 : vector<2x32xf32>
    %926 = vector.extract_strided_slice %911 {offsets = [0, 96], sizes = [2, 32], strides = [1, 1]} : vector<2x128xf32> to vector<2x32xf32>
    %927 = arith.negf %926 : vector<2x32xf32>
    %928 = math.exp %927 : vector<2x32xf32>
    %cst_295 = arith.constant 1.000000e+00 : f32
    %929 = vector.broadcast %cst_295 : f32 to vector<2x32xf32>
    %930 = arith.addf %929, %928 : vector<2x32xf32>
    %931 = arith.divf %929, %930 : vector<2x32xf32>
    %932 = arith.mulf %923, %905 : vector<2x32xf32>
    %933 = arith.mulf %917, %925 : vector<2x32xf32>
    %934 = arith.addf %932, %933 : vector<2x32xf32>
    %935 = math.tanh %934 : vector<2x32xf32>
    %936 = arith.mulf %931, %935 : vector<2x32xf32>
    %c8_296 = arith.constant 8 : index
    %c32_297 = arith.constant 32 : index
    %937 = vector.load %arg16[%c8_296, %c32_297] : memref<16x64xf32, #tpu.memory_space<vmem>>, vector<2x32xf32>
    tpu.vector_store %arg16[%c8_296, %c32_297], %936 {strides = array<i32>} : memref<16x64xf32, #tpu.memory_space<vmem>>, vector<2x32xf32>,
    %938 = vector.extract_strided_slice %817 {offsets = [6, 0], sizes = [2, 128], strides = [1, 1]} : vector<16x128xf32> to vector<2x128xf32>
    %cst_298 = arith.constant dense<0.000000e+00> : vector<2x128xf32>
    %939 = tpu.matmul %936, %819, %cst_298 {dimension_numbers = #tpu.dot_dimension_numbers<[1], [0], [0], [1], [0, 0, 1, 1], [], []>} : vector<2x32xf32>, vector<32x128xf32>, vector<2x128xf32> -> vector<2x128xf32>
    %940 = arith.addf %938, %939 : vector<2x128xf32>
    %941 = vector.extract_strided_slice %940 {offsets = [0, 0], sizes = [2, 32], strides = [1, 1]} : vector<2x128xf32> to vector<2x32xf32>
    %942 = arith.negf %941 : vector<2x32xf32>
    %943 = math.exp %942 : vector<2x32xf32>
    %cst_299 = arith.constant 1.000000e+00 : f32
    %944 = vector.broadcast %cst_299 : f32 to vector<2x32xf32>
    %945 = arith.addf %944, %943 : vector<2x32xf32>
    %946 = arith.divf %944, %945 : vector<2x32xf32>
    %947 = vector.extract_strided_slice %940 {offsets = [0, 32], sizes = [2, 32], strides = [1, 1]} : vector<2x128xf32> to vector<2x32xf32>
    %948 = arith.negf %947 : vector<2x32xf32>
    %949 = math.exp %948 : vector<2x32xf32>
    %cst_300 = arith.constant 1.000000e+00 : f32
    %950 = vector.broadcast %cst_300 : f32 to vector<2x32xf32>
    %951 = arith.addf %950, %949 : vector<2x32xf32>
    %952 = arith.divf %950, %951 : vector<2x32xf32>
    %953 = vector.extract_strided_slice %940 {offsets = [0, 64], sizes = [2, 32], strides = [1, 1]} : vector<2x128xf32> to vector<2x32xf32>
    %954 = math.tanh %953 : vector<2x32xf32>
    %955 = vector.extract_strided_slice %940 {offsets = [0, 96], sizes = [2, 32], strides = [1, 1]} : vector<2x128xf32> to vector<2x32xf32>
    %956 = arith.negf %955 : vector<2x32xf32>
    %957 = math.exp %956 : vector<2x32xf32>
    %cst_301 = arith.constant 1.000000e+00 : f32
    %958 = vector.broadcast %cst_301 : f32 to vector<2x32xf32>
    %959 = arith.addf %958, %957 : vector<2x32xf32>
    %960 = arith.divf %958, %959 : vector<2x32xf32>
    %961 = arith.mulf %952, %934 : vector<2x32xf32>
    %962 = arith.mulf %946, %954 : vector<2x32xf32>
    %963 = arith.addf %961, %962 : vector<2x32xf32>
    %964 = math.tanh %963 : vector<2x32xf32>
    %965 = arith.mulf %960, %964 : vector<2x32xf32>
    %c6_302 = arith.constant 6 : index
    %c32_303 = arith.constant 32 : index
    %966 = vector.load %arg16[%c6_302, %c32_303] : memref<16x64xf32, #tpu.memory_space<vmem>>, vector<2x32xf32>
    tpu.vector_store %arg16[%c6_302, %c32_303], %965 {strides = array<i32>} : memref<16x64xf32, #tpu.memory_space<vmem>>, vector<2x32xf32>,
    %967 = vector.extract_strided_slice %817 {offsets = [4, 0], sizes = [2, 128], strides = [1, 1]} : vector<16x128xf32> to vector<2x128xf32>
    %cst_304 = arith.constant dense<0.000000e+00> : vector<2x128xf32>
    %968 = tpu.matmul %965, %819, %cst_304 {dimension_numbers = #tpu.dot_dimension_numbers<[1], [0], [0], [1], [0, 0, 1, 1], [], []>} : vector<2x32xf32>, vector<32x128xf32>, vector<2x128xf32> -> vector<2x128xf32>
    %969 = arith.addf %967, %968 : vector<2x128xf32>
    %970 = vector.extract_strided_slice %969 {offsets = [0, 0], sizes = [2, 32], strides = [1, 1]} : vector<2x128xf32> to vector<2x32xf32>
    %971 = arith.negf %970 : vector<2x32xf32>
    %972 = math.exp %971 : vector<2x32xf32>
    %cst_305 = arith.constant 1.000000e+00 : f32
    %973 = vector.broadcast %cst_305 : f32 to vector<2x32xf32>
    %974 = arith.addf %973, %972 : vector<2x32xf32>
    %975 = arith.divf %973, %974 : vector<2x32xf32>
    %976 = vector.extract_strided_slice %969 {offsets = [0, 32], sizes = [2, 32], strides = [1, 1]} : vector<2x128xf32> to vector<2x32xf32>
    %977 = arith.negf %976 : vector<2x32xf32>
    %978 = math.exp %977 : vector<2x32xf32>
    %cst_306 = arith.constant 1.000000e+00 : f32
    %979 = vector.broadcast %cst_306 : f32 to vector<2x32xf32>
    %980 = arith.addf %979, %978 : vector<2x32xf32>
    %981 = arith.divf %979, %980 : vector<2x32xf32>
    %982 = vector.extract_strided_slice %969 {offsets = [0, 64], sizes = [2, 32], strides = [1, 1]} : vector<2x128xf32> to vector<2x32xf32>
    %983 = math.tanh %982 : vector<2x32xf32>
    %984 = vector.extract_strided_slice %969 {offsets = [0, 96], sizes = [2, 32], strides = [1, 1]} : vector<2x128xf32> to vector<2x32xf32>
    %985 = arith.negf %984 : vector<2x32xf32>
    %986 = math.exp %985 : vector<2x32xf32>
    %cst_307 = arith.constant 1.000000e+00 : f32
    %987 = vector.broadcast %cst_307 : f32 to vector<2x32xf32>
    %988 = arith.addf %987, %986 : vector<2x32xf32>
    %989 = arith.divf %987, %988 : vector<2x32xf32>
    %990 = arith.mulf %981, %963 : vector<2x32xf32>
    %991 = arith.mulf %975, %983 : vector<2x32xf32>
    %992 = arith.addf %990, %991 : vector<2x32xf32>
    %993 = math.tanh %992 : vector<2x32xf32>
    %994 = arith.mulf %989, %993 : vector<2x32xf32>
    %c4_308 = arith.constant 4 : index
    %c32_309 = arith.constant 32 : index
    %995 = vector.load %arg16[%c4_308, %c32_309] : memref<16x64xf32, #tpu.memory_space<vmem>>, vector<2x32xf32>
    tpu.vector_store %arg16[%c4_308, %c32_309], %994 {strides = array<i32>} : memref<16x64xf32, #tpu.memory_space<vmem>>, vector<2x32xf32>,
    %996 = vector.extract_strided_slice %817 {offsets = [2, 0], sizes = [2, 128], strides = [1, 1]} : vector<16x128xf32> to vector<2x128xf32>
    %cst_310 = arith.constant dense<0.000000e+00> : vector<2x128xf32>
    %997 = tpu.matmul %994, %819, %cst_310 {dimension_numbers = #tpu.dot_dimension_numbers<[1], [0], [0], [1], [0, 0, 1, 1], [], []>} : vector<2x32xf32>, vector<32x128xf32>, vector<2x128xf32> -> vector<2x128xf32>
    %998 = arith.addf %996, %997 : vector<2x128xf32>
    %999 = vector.extract_strided_slice %998 {offsets = [0, 0], sizes = [2, 32], strides = [1, 1]} : vector<2x128xf32> to vector<2x32xf32>
    %1000 = arith.negf %999 : vector<2x32xf32>
    %1001 = math.exp %1000 : vector<2x32xf32>
    %cst_311 = arith.constant 1.000000e+00 : f32
    %1002 = vector.broadcast %cst_311 : f32 to vector<2x32xf32>
    %1003 = arith.addf %1002, %1001 : vector<2x32xf32>
    %1004 = arith.divf %1002, %1003 : vector<2x32xf32>
    %1005 = vector.extract_strided_slice %998 {offsets = [0, 32], sizes = [2, 32], strides = [1, 1]} : vector<2x128xf32> to vector<2x32xf32>
    %1006 = arith.negf %1005 : vector<2x32xf32>
    %1007 = math.exp %1006 : vector<2x32xf32>
    %cst_312 = arith.constant 1.000000e+00 : f32
    %1008 = vector.broadcast %cst_312 : f32 to vector<2x32xf32>
    %1009 = arith.addf %1008, %1007 : vector<2x32xf32>
    %1010 = arith.divf %1008, %1009 : vector<2x32xf32>
    %1011 = vector.extract_strided_slice %998 {offsets = [0, 64], sizes = [2, 32], strides = [1, 1]} : vector<2x128xf32> to vector<2x32xf32>
    %1012 = math.tanh %1011 : vector<2x32xf32>
    %1013 = vector.extract_strided_slice %998 {offsets = [0, 96], sizes = [2, 32], strides = [1, 1]} : vector<2x128xf32> to vector<2x32xf32>
    %1014 = arith.negf %1013 : vector<2x32xf32>
    %1015 = math.exp %1014 : vector<2x32xf32>
    %cst_313 = arith.constant 1.000000e+00 : f32
    %1016 = vector.broadcast %cst_313 : f32 to vector<2x32xf32>
    %1017 = arith.addf %1016, %1015 : vector<2x32xf32>
    %1018 = arith.divf %1016, %1017 : vector<2x32xf32>
    %1019 = arith.mulf %1010, %992 : vector<2x32xf32>
    %1020 = arith.mulf %1004, %1012 : vector<2x32xf32>
    %1021 = arith.addf %1019, %1020 : vector<2x32xf32>
    %1022 = math.tanh %1021 : vector<2x32xf32>
    %1023 = arith.mulf %1018, %1022 : vector<2x32xf32>
    %c2_314 = arith.constant 2 : index
    %c32_315 = arith.constant 32 : index
    %1024 = vector.load %arg16[%c2_314, %c32_315] : memref<16x64xf32, #tpu.memory_space<vmem>>, vector<2x32xf32>
    tpu.vector_store %arg16[%c2_314, %c32_315], %1023 {strides = array<i32>} : memref<16x64xf32, #tpu.memory_space<vmem>>, vector<2x32xf32>,
    %1025 = vector.extract_strided_slice %817 {offsets = [0, 0], sizes = [2, 128], strides = [1, 1]} : vector<16x128xf32> to vector<2x128xf32>
    %cst_316 = arith.constant dense<0.000000e+00> : vector<2x128xf32>
    %1026 = tpu.matmul %1023, %819, %cst_316 {dimension_numbers = #tpu.dot_dimension_numbers<[1], [0], [0], [1], [0, 0, 1, 1], [], []>} : vector<2x32xf32>, vector<32x128xf32>, vector<2x128xf32> -> vector<2x128xf32>
    %1027 = arith.addf %1025, %1026 : vector<2x128xf32>
    %1028 = vector.extract_strided_slice %1027 {offsets = [0, 0], sizes = [2, 32], strides = [1, 1]} : vector<2x128xf32> to vector<2x32xf32>
    %1029 = arith.negf %1028 : vector<2x32xf32>
    %1030 = math.exp %1029 : vector<2x32xf32>
    %cst_317 = arith.constant 1.000000e+00 : f32
    %1031 = vector.broadcast %cst_317 : f32 to vector<2x32xf32>
    %1032 = arith.addf %1031, %1030 : vector<2x32xf32>
    %1033 = arith.divf %1031, %1032 : vector<2x32xf32>
    %1034 = vector.extract_strided_slice %1027 {offsets = [0, 32], sizes = [2, 32], strides = [1, 1]} : vector<2x128xf32> to vector<2x32xf32>
    %1035 = arith.negf %1034 : vector<2x32xf32>
    %1036 = math.exp %1035 : vector<2x32xf32>
    %cst_318 = arith.constant 1.000000e+00 : f32
    %1037 = vector.broadcast %cst_318 : f32 to vector<2x32xf32>
    %1038 = arith.addf %1037, %1036 : vector<2x32xf32>
    %1039 = arith.divf %1037, %1038 : vector<2x32xf32>
    %1040 = vector.extract_strided_slice %1027 {offsets = [0, 64], sizes = [2, 32], strides = [1, 1]} : vector<2x128xf32> to vector<2x32xf32>
    %1041 = math.tanh %1040 : vector<2x32xf32>
    %1042 = vector.extract_strided_slice %1027 {offsets = [0, 96], sizes = [2, 32], strides = [1, 1]} : vector<2x128xf32> to vector<2x32xf32>
    %1043 = arith.negf %1042 : vector<2x32xf32>
    %1044 = math.exp %1043 : vector<2x32xf32>
    %cst_319 = arith.constant 1.000000e+00 : f32
    %1045 = vector.broadcast %cst_319 : f32 to vector<2x32xf32>
    %1046 = arith.addf %1045, %1044 : vector<2x32xf32>
    %1047 = arith.divf %1045, %1046 : vector<2x32xf32>
    %1048 = arith.mulf %1039, %1021 : vector<2x32xf32>
    %1049 = arith.mulf %1033, %1041 : vector<2x32xf32>
    %1050 = arith.addf %1048, %1049 : vector<2x32xf32>
    %1051 = math.tanh %1050 : vector<2x32xf32>
    %1052 = arith.mulf %1047, %1051 : vector<2x32xf32>
    %c0_320 = arith.constant 0 : index
    %c32_321 = arith.constant 32 : index
    %1053 = vector.load %arg16[%c0_320, %c32_321] : memref<16x64xf32, #tpu.memory_space<vmem>>, vector<2x32xf32>
    tpu.vector_store %arg16[%c0_320, %c32_321], %1052 {strides = array<i32>} : memref<16x64xf32, #tpu.memory_space<vmem>>, vector<2x32xf32>,
    %c0_322 = arith.constant 0 : index
    %c0_323 = arith.constant 0 : index
    %1054 = vector.load %arg16[%c0_322, %c0_323] : memref<16x64xf32, #tpu.memory_space<vmem>>, vector<16x64xf32>
    %c0_324 = arith.constant 0 : index
    %c0_325 = arith.constant 0 : index
    %1055 = vector.load %arg9[%c0_324, %c0_325] : memref<64x32xf32, #tpu.memory_space<vmem>>, vector<64x32xf32>
    %cst_326 = arith.constant dense<0.000000e+00> : vector<16x32xf32>
    %1056 = tpu.matmul %1054, %1055, %cst_326 {dimension_numbers = #tpu.dot_dimension_numbers<[1], [0], [0], [1], [0, 0, 1, 1], [], []>} : vector<16x64xf32>, vector<64x32xf32>, vector<16x32xf32> -> vector<16x32xf32>
    %c0_327 = arith.constant 0 : index
    %c0_328 = arith.constant 0 : index
    %1057 = vector.load %arg10[%c0_327, %c0_328] : memref<1x32xf32, #tpu.memory_space<vmem>>, vector<1x32xf32>
    %1058 = vector.broadcast %1057 : vector<1x32xf32> to vector<16x32xf32>
    %1059 = arith.addf %1056, %1058 : vector<16x32xf32>
    %cst_329 = arith.constant 0.000000e+00 : f32
    %1060 = vector.broadcast %cst_329 : f32 to vector<16x32xf32>
    %1061 = arith.maximumf %1059, %1060 : vector<16x32xf32>
    %cst_330 = arith.constant 0.000000e+00 : f32
    %1062 = vector.broadcast %cst_330 : f32 to vector<2x32xf32>
    %1063 = vector.extract_strided_slice %1061 {offsets = [0, 0], sizes = [2, 32], strides = [1, 1]} : vector<16x32xf32> to vector<2x32xf32>
    %1064 = arith.addf %1062, %1063 : vector<2x32xf32>
    %1065 = vector.extract_strided_slice %1061 {offsets = [2, 0], sizes = [2, 32], strides = [1, 1]} : vector<16x32xf32> to vector<2x32xf32>
    %1066 = arith.addf %1064, %1065 : vector<2x32xf32>
    %1067 = vector.extract_strided_slice %1061 {offsets = [4, 0], sizes = [2, 32], strides = [1, 1]} : vector<16x32xf32> to vector<2x32xf32>
    %1068 = arith.addf %1066, %1067 : vector<2x32xf32>
    %1069 = vector.extract_strided_slice %1061 {offsets = [6, 0], sizes = [2, 32], strides = [1, 1]} : vector<16x32xf32> to vector<2x32xf32>
    %1070 = arith.addf %1068, %1069 : vector<2x32xf32>
    %1071 = vector.extract_strided_slice %1061 {offsets = [8, 0], sizes = [2, 32], strides = [1, 1]} : vector<16x32xf32> to vector<2x32xf32>
    %1072 = arith.addf %1070, %1071 : vector<2x32xf32>
    %1073 = vector.extract_strided_slice %1061 {offsets = [10, 0], sizes = [2, 32], strides = [1, 1]} : vector<16x32xf32> to vector<2x32xf32>
    %1074 = arith.addf %1072, %1073 : vector<2x32xf32>
    %1075 = vector.extract_strided_slice %1061 {offsets = [12, 0], sizes = [2, 32], strides = [1, 1]} : vector<16x32xf32> to vector<2x32xf32>
    %1076 = arith.addf %1074, %1075 : vector<2x32xf32>
    %1077 = vector.extract_strided_slice %1061 {offsets = [14, 0], sizes = [2, 32], strides = [1, 1]} : vector<16x32xf32> to vector<2x32xf32>
    %1078 = arith.addf %1076, %1077 : vector<2x32xf32>
    %cst_331 = arith.constant 1.250000e-01 : f32
    %1079 = vector.broadcast %cst_331 : f32 to vector<2x32xf32>
    %1080 = arith.mulf %1078, %1079 : vector<2x32xf32>
    %c0_332 = arith.constant 0 : index
    %c0_333 = arith.constant 0 : index
    %1081 = vector.load %arg11[%c0_332, %c0_333] : memref<32x2xf32, #tpu.memory_space<vmem>>, vector<32x2xf32>
    %cst_334 = arith.constant dense<0.000000e+00> : vector<2x2xf32>
    %1082 = tpu.matmul %1080, %1081, %cst_334 {dimension_numbers = #tpu.dot_dimension_numbers<[1], [0], [0], [1], [0, 0, 1, 1], [], []>} : vector<2x32xf32>, vector<32x2xf32>, vector<2x2xf32> -> vector<2x2xf32>
    %c0_335 = arith.constant 0 : index
    %c0_336 = arith.constant 0 : index
    %1083 = vector.load %arg12[%c0_335, %c0_336] : memref<1x2xf32, #tpu.memory_space<vmem>>, vector<1x2xf32>
    %1084 = vector.broadcast %1083 : vector<1x2xf32> to vector<2x2xf32>
    %1085 = arith.addf %1082, %1084 : vector<2x2xf32>
    %c0_337 = arith.constant 0 : index
    %c0_338 = arith.constant 0 : index
    %1086 = vector.load %arg13[%c0_337, %c0_338] : memref<2x2xf32, #tpu.memory_space<vmem>>, vector<2x2xf32>
    tpu.vector_store %arg13[%c0_337, %c0_338], %1085 {strides = array<i32>} : memref<2x2xf32, #tpu.memory_space<vmem>>, vector<2x2xf32>,
    return
  }
  func.func @transform_0(%arg0: i32, %arg1: memref<2x8xi32, #tpu.memory_space<smem>>) -> (i32, i32, i32) {
    %c0_i32 = arith.constant 0 : i32
    %c0_i32_0 = arith.constant 0 : i32
    %c0_i32_1 = arith.constant 0 : i32
    %c0_i32_2 = arith.constant 0 : i32
    return %c0_i32, %c0_i32_0, %c0_i32_1 : i32, i32, i32
  }
  func.func @transform_1(%arg0: i32, %arg1: memref<2x8xi32, #tpu.memory_space<smem>>) -> (i32, i32, i32) {
    %c0_i32 = arith.constant 0 : i32
    %c0_i32_0 = arith.constant 0 : i32
    %c0_i32_1 = arith.constant 0 : i32
    %c0_i32_2 = arith.constant 0 : i32
    return %c0_i32, %c0_i32_0, %c0_i32_1 : i32, i32, i32
  }
  func.func @transform_2(%arg0: i32, %arg1: memref<2x8xi32, #tpu.memory_space<smem>>) -> (i32, i32, i32) {
    %c0_i32 = arith.constant 0 : i32
    %c0_i32_0 = arith.constant 0 : i32
    %c0_i32_1 = arith.constant 0 : i32
    %c0_i32_2 = arith.constant 0 : i32
    return %c0_i32, %c0_i32_0, %c0_i32_1 : i32, i32, i32
  }
  func.func @transform_3(%arg0: i32, %arg1: memref<2x8xi32, #tpu.memory_space<smem>>) -> (i32, i32, i32) {
    %c0_i32 = arith.constant 0 : i32
    %c0_i32_0 = arith.constant 0 : i32
    %c0_i32_1 = arith.constant 0 : i32
    %c0_i32_2 = arith.constant 0 : i32
    return %c0_i32, %c0_i32_0, %c0_i32_1 : i32, i32, i32
  }
  func.func @transform_4(%arg0: i32, %arg1: memref<2x8xi32, #tpu.memory_space<smem>>) -> (i32, i32, i32) {
    %c0_i32 = arith.constant 0 : i32
    %c0_i32_0 = arith.constant 0 : i32
    %c0_i32_1 = arith.constant 0 : i32
    %c0_i32_2 = arith.constant 0 : i32
    return %c0_i32, %c0_i32_0, %c0_i32_1 : i32, i32, i32
  }
  func.func @transform_5(%arg0: i32, %arg1: memref<2x8xi32, #tpu.memory_space<smem>>) -> (i32, i32, i32) {
    %c0_i32 = arith.constant 0 : i32
    %c0_i32_0 = arith.constant 0 : i32
    %c0_i32_1 = arith.constant 0 : i32
    %c0_i32_2 = arith.constant 0 : i32
    return %c0_i32, %c0_i32_0, %c0_i32_1 : i32, i32, i32
  }
  func.func @transform_6(%arg0: i32, %arg1: memref<2x8xi32, #tpu.memory_space<smem>>) -> (i32, i32, i32) {
    %c0_i32 = arith.constant 0 : i32
    %c0_i32_0 = arith.constant 0 : i32
    %c0_i32_1 = arith.constant 0 : i32
    %c0_i32_2 = arith.constant 0 : i32
    return %c0_i32, %c0_i32_0, %c0_i32_1 : i32, i32, i32
  }
  func.func @transform_7(%arg0: i32, %arg1: memref<2x8xi32, #tpu.memory_space<smem>>) -> (i32, i32) {
    %c0_i32 = arith.constant 0 : i32
    %c0_i32_0 = arith.constant 0 : i32
    %c0_i32_1 = arith.constant 0 : i32
    return %c0_i32, %c0_i32_0 : i32, i32
  }
  func.func @transform_8(%arg0: i32, %arg1: memref<2x8xi32, #tpu.memory_space<smem>>) -> (i32, i32) {
    %c0_i32 = arith.constant 0 : i32
    %c0_i32_0 = arith.constant 0 : i32
    %c0_i32_1 = arith.constant 0 : i32
    return %c0_i32, %c0_i32_0 : i32, i32
  }
  func.func @transform_9(%arg0: i32, %arg1: memref<2x8xi32, #tpu.memory_space<smem>>) -> (i32, i32) {
    %c0_i32 = arith.constant 0 : i32
    %c0_i32_0 = arith.constant 0 : i32
    %c0_i32_1 = arith.constant 0 : i32
    return %c0_i32, %c0_i32_0 : i32, i32
  }
  func.func @transform_10(%arg0: i32, %arg1: memref<2x8xi32, #tpu.memory_space<smem>>) -> (i32, i32) {
    %c0_i32 = arith.constant 0 : i32
    %c0_i32_0 = arith.constant 0 : i32
    %c0_i32_1 = arith.constant 0 : i32
    return %c0_i32, %c0_i32_0 : i32, i32
  }
  func.func @transform_11(%arg0: i32, %arg1: memref<2x8xi32, #tpu.memory_space<smem>>) -> (i32, i32) {
    %c0_i32 = arith.constant 0 : i32
    %c0_i32_0 = arith.constant 0 : i32
    %c0_i32_1 = arith.constant 0 : i32
    return %c0_i32, %c0_i32_0 : i32, i32
  }
}

</mosaic_0001>

<llo_original>
// kernel: model_forward.1
$region0: #{model_forward.1}
  #allocation0 [shape = 'u32[]', space=smem, size = 0x4, offset = 0x4, fixed_abs, tag = 'smem constant byte address 0x4 - core index']
  #allocation1 [shape = 'u32[144,128]{1,0:T(1,128)}', space=vmem, size = 0x12000, scoped, tag = 'internal scratch']
  #allocation2 [shape = 'f32[16,16]{1,0:T(8,128)}', space=vmem, size = 0x2000, scoped, tag = 'scratch operand']
  #allocation3 [shape = 'f32[16,64]{1,0:T(8,128)}', space=vmem, size = 0x2000, scoped, tag = 'scratch operand']
  #allocation4 [shape = 'f32[16,64]{1,0:T(8,128)}', space=vmem, size = 0x2000, scoped, tag = 'scratch operand']
  #allocation5 [shape = 's32[1]{0}', space=sflag, size = 0x4, scoped, tag = 'scoped memory for model_forward.1']
  #allocation6 [shape = 'u8[1024]{0}', space=smem, size = 0x400, scoped, tag = 'prefetched SMEM operand 0']
  %s0 = inlined_call_operand.hbm [shape: s32[2,8], index: 0, kind: input, shape index: {}]
  %s1 = inlined_call_operand.vmem [shape: f32[100,1,16], index: 1, kind: input, shape index: {}]
  %s2 = inlined_call_operand.hbm [shape: f32[2,16,128], index: 2, kind: input, shape index: {}]
  %s3 = inlined_call_operand.vmem [shape: f32[2,32,128], index: 3, kind: input, shape index: {}]
  %s4 = inlined_call_operand.hbm [shape: f32[2,1,128], index: 4, kind: input, shape index: {}]
  %s5 = inlined_call_operand.vmem [shape: f32[2,64,128], index: 5, kind: input, shape index: {}]
  %s6 = inlined_call_operand.vmem [shape: f32[2,32,128], index: 6, kind: input, shape index: {}]
  %s7 = inlined_call_operand.vmem [shape: f32[2,1,128], index: 7, kind: input, shape index: {}]
  %s8 = inlined_call_operand.vmem [shape: f32[64,32], index: 8, kind: input, shape index: {}]
  %s9 = inlined_call_operand.vmem [shape: f32[1,32], index: 9, kind: input, shape index: {}]
  %s10 = inlined_call_operand.vmem [shape: f32[32,2], index: 10, kind: input, shape index: {}]
  %s11 = inlined_call_operand.hbm [shape: f32[1,2], index: 11, kind: input, shape index: {}]
  %s12 = inlined_call_operand.hbm [shape: f32[2,2], index: 12, kind: output, shape index: {}]
  %s13 = sld [smem:[#allocation0]]
  $region66: #{model_forward.1} parent=0
    _
  %s15 = ssub.s32 1, %s13
  %s16 = scalar_select 0, %s15, %s13
  %18 = dma.hbm_to_smem %s0, 32, [#allocation6], [#allocation5]
  %19 = dma.done [#allocation5], 32
  %20 = sfence
  $region1: #{model_forward.1} parent=0
    #allocation7 [shape = 'u8[16384]{0}', space=vmem, size = 0x4000, scoped, tag = 'input window, operand 2, single buffered']
    #allocation8 [shape = 's32[1]{0}', space=sflag, size = 0x4, scoped, tag = 'scoped memory for model_forward.1']
    #allocation9 [shape = 's32[1]{0}', space=sflag, size = 0x4, scoped, tag = 'scoped memory for model_forward.1']
    #allocation10 [shape = 'u8[1024]{0}', space=vmem, size = 0x400, scoped, tag = 'input window, operand 4, single buffered']
    #allocation11 [shape = 's32[1]{0}', space=sflag, size = 0x4, scoped, tag = 'scoped memory for model_forward.1']
    #allocation12 [shape = 'u8[512]{0}', space=vmem, size = 0x400, scoped, tag = 'input window, operand 11, single buffered']
    #allocation13 [shape = 'u8[1024]{0}', space=vmem, size = 0x400, scoped, tag = 'output window, operand 0, single buffered']
    %21 = vsyncpa [#allocation8], 0
    %22 = vsyncpa [#allocation11], 0
    %23 = vsyncpa [#allocation9], 0
    // Predicated region
    $region2: #{model_forward.1} parent=1 // pred_check
      _
    $region3: #{model_forward.1} parent=1 // pred_check_branch
      %25 = sbr.rel (0) target = $region5
    $region4: #{model_forward.1} parent=1 // pred_region
      _
    $region5: #{model_forward.1} parent=1 // pred_fallthru
      _
    // Predicated region
    $region6: #{model_forward.1} parent=1 // pred_check
      _
    $region7: #{model_forward.1} parent=1 // pred_check_branch
      %27 = sbr.rel (0) target = $region9
    $region8: #{model_forward.1} parent=1 // pred_region
      %s29 = ssub.s32 512, 512
      %30 = vsyncadd [#allocation8], %s29
      %s31 = sshll.u32 [#allocation7], 4
      %s32 = int_to_ptr.vmem [resolvable:$true] %s31
      %37 = dma.hbm_to_vmem [thread:$0]  %s2, 512, %s32, [#allocation8], 128, 128, 8
    $region9: #{model_forward.1} parent=1 // pred_fallthru
      _
    // Predicated region
    $region10: #{model_forward.1} parent=1 // pred_check
      _
    $region11: #{model_forward.1} parent=1 // pred_check_branch
      %39 = sbr.rel (0) target = $region13
    $region12: #{model_forward.1} parent=1 // pred_region
      _
    $region13: #{model_forward.1} parent=1 // pred_fallthru
      _
    // Predicated region
    $region14: #{model_forward.1} parent=1 // pred_check
      _
    $region15: #{model_forward.1} parent=1 // pred_check_branch
      %41 = sbr.rel (0) target = $region17
    $region16: #{model_forward.1} parent=1 // pred_region
      %s43 = ssub.s32 32, 32
      %44 = vsyncadd [#allocation11], %s43
      %s45 = sshll.u32 [#allocation10], 4
      %s46 = int_to_ptr.vmem [resolvable:$true] %s45
      %51 = dma.hbm_to_vmem [thread:$0]  %s4, 32, %s46, [#allocation11], 16, 16, 1
    $region17: #{model_forward.1} parent=1 // pred_fallthru
      _
    // Predicated region
    $region18: #{model_forward.1} parent=1 // pred_check
      _
    $region19: #{model_forward.1} parent=1 // pred_check_branch
      %53 = sbr.rel (0) target = $region21
    $region20: #{model_forward.1} parent=1 // pred_region
      _
    $region21: #{model_forward.1} parent=1 // pred_fallthru
      _
    // Predicated region
    $region22: #{model_forward.1} parent=1 // pred_check
      _
    $region23: #{model_forward.1} parent=1 // pred_check_branch
      %55 = sbr.rel (0) target = $region25
    $region24: #{model_forward.1} parent=1 // pred_region
      _
    $region25: #{model_forward.1} parent=1 // pred_fallthru
      _
    // Predicated region
    $region26: #{model_forward.1} parent=1 // pred_check
      _
    $region27: #{model_forward.1} parent=1 // pred_check_branch
      %57 = sbr.rel (0) target = $region29
    $region28: #{model_forward.1} parent=1 // pred_region
      _
    $region29: #{model_forward.1} parent=1 // pred_fallthru
      _
    // Predicated region
    $region30: #{model_forward.1} parent=1 // pred_check
      _
    $region31: #{model_forward.1} parent=1 // pred_check_branch
      %59 = sbr.rel (0) target = $region33
    $region32: #{model_forward.1} parent=1 // pred_region
      _
    $region33: #{model_forward.1} parent=1 // pred_fallthru
      _
    // Predicated region
    $region34: #{model_forward.1} parent=1 // pred_check
      _
    $region35: #{model_forward.1} parent=1 // pred_check_branch
      %61 = sbr.rel (0) target = $region37
    $region36: #{model_forward.1} parent=1 // pred_region
      _
    $region37: #{model_forward.1} parent=1 // pred_fallthru
      _
    // Predicated region
    $region38: #{model_forward.1} parent=1 // pred_check
      _
    $region39: #{model_forward.1} parent=1 // pred_check_branch
      %63 = sbr.rel (0) target = $region41
    $region40: #{model_forward.1} parent=1 // pred_region
      _
    $region41: #{model_forward.1} parent=1 // pred_fallthru
      _
    // Predicated region
    $region42: #{model_forward.1} parent=1 // pred_check
      _
    $region43: #{model_forward.1} parent=1 // pred_check_branch
      %65 = sbr.rel (0) target = $region45
    $region44: #{model_forward.1} parent=1 // pred_region
      %s67 = ssub.s32 16, 16
      %68 = vsyncadd [#allocation11], %s67
      %s70 = sshll.u32 [#allocation12], 4
      %s71 = int_to_ptr.vmem [resolvable:$true] %s70
      %73 = dma.hbm_to_vmem [thread:$0]  %s11, 16, %s71, [#allocation11]
    $region45: #{model_forward.1} parent=1 // pred_fallthru
      _
    // Predicated region
    $region46: #{model_forward.1} parent=1 // pred_check
      _
    $region47: #{model_forward.1} parent=1 // pred_check_branch
      %75 = sbr.rel (0) target = $region49
    $region48: #{model_forward.1} parent=1 // pred_region
      %76 = dma.done [#allocation8], 512
    $region49: #{model_forward.1} parent=1 // pred_fallthru
      _
    // Predicated region
    $region50: #{model_forward.1} parent=1 // pred_check
      _
    $region51: #{model_forward.1} parent=1 // pred_check_branch
      %78 = sbr.rel (0) target = $region53
    $region52: #{model_forward.1} parent=1 // pred_region
      %79 = dma.done [#allocation11], 32
    $region53: #{model_forward.1} parent=1 // pred_fallthru
      _
    // Predicated region
    $region54: #{model_forward.1} parent=1 // pred_check
      _
    $region55: #{model_forward.1} parent=1 // pred_check_branch
      %81 = sbr.rel (0) target = $region57
    $region56: #{model_forward.1} parent=1 // pred_region
      %82 = dma.done [#allocation11], 16
    $region57: #{model_forward.1} parent=1 // pred_fallthru
      _
    %s83 = sld [smem:[#allocation6]]
    %s84 = scalar_lea.vmem %s1, %s83
    %v85 = vld [vmem:[%s84] sm:$0x1]
    %vm86 = vcmask 122880
    %87 = vst.msk [vmem:[#allocation2] sm:$0x1] %vm86, %v85
    %s88 = sld [smem:[#allocation6 + $0x80]]
    %s89 = scalar_lea.vmem %s1, %s88
    %v90 = vld [vmem:[%s89] sm:$0x1]
    %91 = vst.msk [vmem:[#allocation2 + $0x1] sm:$0x1] %vm86, %v90
    %s92 = sld [smem:[#allocation6 + $0x1]]
    %s93 = scalar_lea.vmem %s1, %s92
    %v94 = vld [vmem:[%s93] sm:$0x1]
    %95 = vst.msk [vmem:[#allocation2 + $0x2] sm:$0x1] %vm86, %v94
    %s96 = sld [smem:[#allocation6 + $0x81]]
    %s97 = scalar_lea.vmem %s1, %s96
    %v98 = vld [vmem:[%s97] sm:$0x1]
    %99 = vst.msk [vmem:[#allocation2 + $0x3] sm:$0x1] %vm86, %v98
    %s100 = sld [smem:[#allocation6 + $0x2]]
    %s101 = scalar_lea.vmem %s1, %s100
    %v102 = vld [vmem:[%s101] sm:$0x1]
    %103 = vst.msk [vmem:[#allocation2 + $0x4] sm:$0x1] %vm86, %v102
    %s104 = sld [smem:[#allocation6 + $0x82]]
    %s105 = scalar_lea.vmem %s1, %s104
    %v106 = vld [vmem:[%s105] sm:$0x1]
    %107 = vst.msk [vmem:[#allocation2 + $0x5] sm:$0x1] %vm86, %v106
    %s108 = sld [smem:[#allocation6 + $0x3]]
    %s109 = scalar_lea.vmem %s1, %s108
    %v110 = vld [vmem:[%s109] sm:$0x1]
    %111 = vst.msk [vmem:[#allocation2 + $0x6] sm:$0x1] %vm86, %v110
    %s112 = sld [smem:[#allocation6 + $0x83]]
    %s113 = scalar_lea.vmem %s1, %s112
    %v114 = vld [vmem:[%s113] sm:$0x1]
    %115 = vst.msk [vmem:[#allocation2 + $0x7] sm:$0x1] %vm86, %v114
    %s116 = sld [smem:[#allocation6 + $0x4]]
    %s117 = scalar_lea.vmem %s1, %s116
    %v118 = vld [vmem:[%s117] sm:$0x1]
    %119 = vst.msk [vmem:[#allocation2 + $0x8] sm:$0x1] %vm86, %v118
    %s120 = sld [smem:[#allocation6 + $0x84]]
    %s121 = scalar_lea.vmem %s1, %s120
    %v122 = vld [vmem:[%s121] sm:$0x1]
    %123 = vst.msk [vmem:[#allocation2 + $0x9] sm:$0x1] %vm86, %v122
    %s124 = sld [smem:[#allocation6 + $0x5]]
    %s125 = scalar_lea.vmem %s1, %s124
    %v126 = vld [vmem:[%s125] sm:$0x1]
    %127 = vst.msk [vmem:[#allocation2 + $0xa] sm:$0x1] %vm86, %v126
    %s128 = sld [smem:[#allocation6 + $0x85]]
    %s129 = scalar_lea.vmem %s1, %s128
    %v130 = vld [vmem:[%s129] sm:$0x1]
    %131 = vst.msk [vmem:[#allocation2 + $0xb] sm:$0x1] %vm86, %v130
    %s132 = sld [smem:[#allocation6 + $0x6]]
    %s133 = scalar_lea.vmem %s1, %s132
    %v134 = vld [vmem:[%s133] sm:$0x1]
    %135 = vst.msk [vmem:[#allocation2 + $0xc] sm:$0x1] %vm86, %v134
    %s136 = sld [smem:[#allocation6 + $0x86]]
    %s137 = scalar_lea.vmem %s1, %s136
    %v138 = vld [vmem:[%s137] sm:$0x1]
    %139 = vst.msk [vmem:[#allocation2 + $0xd] sm:$0x1] %vm86, %v138
    %s140 = sld [smem:[#allocation6 + $0x7]]
    %s141 = scalar_lea.vmem %s1, %s140
    %v142 = vld [vmem:[%s141] sm:$0x1]
    %143 = vst.msk [vmem:[#allocation2 + $0xe] sm:$0x1] %vm86, %v142
    %s144 = sld [smem:[#allocation6 + $0x87]]
    %s145 = scalar_lea.vmem %s1, %s144
    %v146 = vld [vmem:[%s145] sm:$0x1]
    %147 = vst.msk [vmem:[#allocation2 + $0xf] sm:$0x1] %vm86, %v146
    %v148 = vld [vmem:[#allocation2] sm:$0xff]
    %v149 = vld [vmem:[#allocation2 + $0x8] sm:$0xff]
    %v150 = vld [vmem:[#allocation7] sm:$0xff]
    %v151 = vld [vmem:[#allocation7 + $0x8] sm:$0xff]
    %v152 = vld [vmem:[#allocation10] sm:$0x1]
    %v154 = vlaneseq
    %v155 = vshrl.u32 %v154, 7
    %v156 = vsub.s32 0, %v155
    %v157 = vrot.slane %v152, %v156
    %vm159 = vcmask 130048
    %v161 = vsel %vm159, %v148, 0
    %v164 = vsel %vm159, %v149, 0
    %166 = vmatprep.subr.mxu0 0.0
    %167 = vmatpush1.msra.mxu0 %v150
    %168 = vmatprep.subr.mxu0 0.0
    %169 = vmatpush1.msra.mxu0 %v151
    %170 = vmatprep.subr.mxu0 0.0
    %171 = vmatpush1.msra.mxu0 0.0
    %172 = vmatprep.subr.mxu0 0.0
    %173 = vmatpush1.msra.mxu0 0.0
    %174 = vmatprep.subr.mxu0 0.0
    %175 = vmatpush1.msra.mxu0 0.0
    %176 = vmatprep.subr.mxu0 0.0
    %177 = vmatpush1.msra.mxu0 0.0
    %178 = vmatprep.subr.mxu0 0.0
    %179 = vmatpush1.msra.mxu0 0.0
    %180 = vmatprep.subr.mxu0 0.0
    %181 = vmatpush1.msra.mxu0 0.0
    %182 = vmatprep.subr.mxu0 0.0
    %183 = vmatpush1.msra.mxu0 0.0
    %184 = vmatprep.subr.mxu0 0.0
    %185 = vmatpush1.msra.mxu0 0.0
    %186 = vmatprep.subr.mxu0 0.0
    %187 = vmatpush1.msra.mxu0 0.0
    %188 = vmatprep.subr.mxu0 0.0
    %189 = vmatpush1.msra.mxu0 0.0
    %190 = vmatprep.subr.mxu0 0.0
    %191 = vmatpush1.msra.mxu0 0.0
    %192 = vmatprep.subr.mxu0 0.0
    %193 = vmatpush1.msra.mxu0 0.0
    %194 = vmatprep.subr.mxu0 0.0
    %195 = vmatpush1.msra.mxu0 0.0
    %196 = vmatprep.subr.mxu0 0.0
    %197 = vmatpush1.msra.mxu0 0.0
    %198 = vmatprep.subr.mxu0 0.0
    %199 = vmatpush1.msra.mxu0 0.0
    %200 = vmatprep.subr.mxu0 0.0
    %201 = vmatpush1.msra.mxu0 0.0
    %202 = vmatprep.subr.mxu0 0.0
    %203 = vmatpush1.msra.mxu0 0.0
    %204 = vmatprep.subr.mxu0 0.0
    %205 = vmatpush1.msra.mxu0 0.0
    %206 = vmatprep.subr.mxu0 0.0
    %207 = vmatpush1.msra.mxu0 0.0
    %208 = vmatprep.subr.mxu0 0.0
    %209 = vmatpush1.msra.mxu0 0.0
    %210 = vmatprep.subr.mxu0 0.0
    %211 = vmatpush1.msra.mxu0 0.0
    %212 = vmatprep.subr.mxu0 0.0
    %213 = vmatpush1.msra.mxu0 0.0
    %214 = vmatprep.subr.mxu0 0.0
    %215 = vmatpush1.msra.mxu0 0.0
    %216 = vmatprep.subr.mxu0 0.0
    %217 = vmatpush1.msra.mxu0 0.0
    %218 = vmatprep.subr.mxu0 0.0
    %219 = vmatpush1.msra.mxu0 0.0
    %220 = vmatprep.subr.mxu0 0.0
    %221 = vmatpush1.msra.mxu0 0.0
    %222 = vmatprep.subr.mxu0 0.0
    %223 = vmatpush1.msra.mxu0 0.0
    %224 = vmatprep.subr.mxu0 0.0
    %225 = vmatpush1.msra.mxu0 0.0
    %226 = vmatprep.subr.mxu0 0.0
    %227 = vmatpush1.msra.mxu0 0.0
    %228 = vmatprep.subr.mxu0 0.0
    %229 = vmatpush1.msra.mxu0 0.0
    %230 = vmatprep.mubr.f32.mxu0 0.0
    %231 = vmatmul.mubr.f32.gmra.mrb[0].mxu0 %v161
    %v232 = vpop.f32.mrb[0].mxu0
    %v233 = vadd.f32 %v157, %v232
    %v234 = vpop.f32.mrb[0].mxu0
    %235 = vmatprep.mubr.f32.mxu0 0.0
    %236 = vmatmul.mubr.f32.gmra.mrb[0].mxu0 %v164
    %v237 = vpop.f32.mrb[0].mxu0
    %v238 = vadd.f32 %v157, %v237
    %v239 = vpop.f32.mrb[0].mxu0
    %240 = vdwg.mxu0
    %v241 = vld [vmem:[%s3] sm:$0xff]
    %v242 = vld [vmem:[%s3 + $0x8] sm:$0xff]
    %v243 = vld [vmem:[%s3 + $0x10] sm:$0xff]
    %v244 = vld [vmem:[%s3 + $0x18] sm:$0xff]
    %vm245 = vcmask 261120
    %v247 = vsel %vm245, 0.0, 0
    %249 = vmatprep.subr.mxu0 0.0
    %250 = vmatpush1.msra.mxu0 %v241
    %251 = vmatprep.subr.mxu0 0.0
    %252 = vmatpush1.msra.mxu0 %v242
    %253 = vmatprep.subr.mxu0 0.0
    %254 = vmatpush1.msra.mxu0 %v243
    %255 = vmatprep.subr.mxu0 0.0
    %256 = vmatpush1.msra.mxu0 %v244
    %257 = vmatprep.subr.mxu0 0.0
    %258 = vmatpush1.msra.mxu0 0.0
    %259 = vmatprep.subr.mxu0 0.0
    %260 = vmatpush1.msra.mxu0 0.0
    %261 = vmatprep.subr.mxu0 0.0
    %262 = vmatpush1.msra.mxu0 0.0
    %263 = vmatprep.subr.mxu0 0.0
    %264 = vmatpush1.msra.mxu0 0.0
    %265 = vmatprep.subr.mxu0 0.0
    %266 = vmatpush1.msra.mxu0 0.0
    %267 = vmatprep.subr.mxu0 0.0
    %268 = vmatpush1.msra.mxu0 0.0
    %269 = vmatprep.subr.mxu0 0.0
    %270 = vmatpush1.msra.mxu0 0.0
    %271 = vmatprep.subr.mxu0 0.0
    %272 = vmatpush1.msra.mxu0 0.0
    %273 = vmatprep.subr.mxu0 0.0
    %274 = vmatpush1.msra.mxu0 0.0
    %275 = vmatprep.subr.mxu0 0.0
    %276 = vmatpush1.msra.mxu0 0.0
    %277 = vmatprep.subr.mxu0 0.0
    %278 = vmatpush1.msra.mxu0 0.0
    %279 = vmatprep.subr.mxu0 0.0
    %280 = vmatpush1.msra.mxu0 0.0
    %281 = vmatprep.subr.mxu0 0.0
    %282 = vmatpush1.msra.mxu0 0.0
    %283 = vmatprep.subr.mxu0 0.0
    %284 = vmatpush1.msra.mxu0 0.0
    %285 = vmatprep.subr.mxu0 0.0
    %286 = vmatpush1.msra.mxu0 0.0
    %287 = vmatprep.subr.mxu0 0.0
    %288 = vmatpush1.msra.mxu0 0.0
    %289 = vmatprep.subr.mxu0 0.0
    %290 = vmatpush1.msra.mxu0 0.0
    %291 = vmatprep.subr.mxu0 0.0
    %292 = vmatpush1.msra.mxu0 0.0
    %293 = vmatprep.subr.mxu0 0.0
    %294 = vmatpush1.msra.mxu0 0.0
    %295 = vmatprep.subr.mxu0 0.0
    %296 = vmatpush1.msra.mxu0 0.0
    %297 = vmatprep.subr.mxu0 0.0
    %298 = vmatpush1.msra.mxu0 0.0
    %299 = vmatprep.subr.mxu0 0.0
    %300 = vmatpush1.msra.mxu0 0.0
    %301 = vmatprep.subr.mxu0 0.0
    %302 = vmatpush1.msra.mxu0 0.0
    %303 = vmatprep.subr.mxu0 0.0
    %304 = vmatpush1.msra.mxu0 0.0
    %305 = vmatprep.subr.mxu0 0.0
    %306 = vmatpush1.msra.mxu0 0.0
    %307 = vmatprep.subr.mxu0 0.0
    %308 = vmatpush1.msra.mxu0 0.0
    %309 = vmatprep.subr.mxu0 0.0
    %310 = vmatpush1.msra.mxu0 0.0
    %311 = vmatprep.subr.mxu0 0.0
    %312 = vmatpush1.msra.mxu0 0.0
    %313 = vmatprep.mubr.f32.mxu0 0.0
    %314 = vmatmul.mubr.f32.gmra.mrb[0].mxu0 %v247
    %v315 = vpop.f32.mrb[0].mxu0
    %v316 = vadd.f32 0.0, %v315
    %v317 = vpop.f32.mrb[0].mxu0
    %318 = vdwg.mxu0
    %v319 = vadd.f32 %v233, %v316
    %v320 = vxor.u32 %v319, 2147483648
    %v321 = vmul.f32 %v320, 1.442695
    %v322 = vpow.pop %v321
    %v323 = vadd.f32 %v322, 1.0
    %v324 = vrcp.pop %v323
    %v325 = vmul.f32 1.0, %v324
    %v326 = vtanh.pop %v319
    %v327 = vmul.f32 %v325, 0.0
    %329 = vrot.lane.b32.xlu0 %v326, 64
    %v330 = vpop.permute.xlu0 %329
    %v332 = vmul.f32 %v325, %v330
    %334 = vrot.lane.b32.xlu0 %v332, 32
    %v335 = vpop.permute.xlu0 %334
    %v337 = vadd.f32 %v327, %v335
    %v338 = vtanh.pop %v337
    %340 = vrot.lane.b32.xlu0 %v338, 64
    %v341 = vpop.permute.xlu0 %340
    %v343 = vmul.f32 %v325, %v341
    %345 = vrot.lane.b32.xlu0 %v343, 32
    %v346 = vpop.permute.xlu0 %345
    %vm348 = vcmask 254976
    %349 = vst.msk [vmem:[#allocation3] sm:$0x3] %vm348, %v346
    %v350 = vsel %vm245, %v346, 0
    %352 = vmatprep.subr.mxu0 0.0
    %353 = vmatpush1.msra.mxu0 %v241
    %354 = vmatprep.subr.mxu0 0.0
    %355 = vmatpush1.msra.mxu0 %v242
    %356 = vmatprep.subr.mxu0 0.0
    %357 = vmatpush1.msra.mxu0 %v243
    %358 = vmatprep.subr.mxu0 0.0
    %359 = vmatpush1.msra.mxu0 %v244
    %360 = vmatprep.subr.mxu0 0.0
    %361 = vmatpush1.msra.mxu0 0.0
    %362 = vmatprep.subr.mxu0 0.0
    %363 = vmatpush1.msra.mxu0 0.0
    %364 = vmatprep.subr.mxu0 0.0
    %365 = vmatpush1.msra.mxu0 0.0
    %366 = vmatprep.subr.mxu0 0.0
    %367 = vmatpush1.msra.mxu0 0.0
    %368 = vmatprep.subr.mxu0 0.0
    %369 = vmatpush1.msra.mxu0 0.0
    %370 = vmatprep.subr.mxu0 0.0
    %371 = vmatpush1.msra.mxu0 0.0
    %372 = vmatprep.subr.mxu0 0.0
    %373 = vmatpush1.msra.mxu0 0.0
    %374 = vmatprep.subr.mxu0 0.0
    %375 = vmatpush1.msra.mxu0 0.0
    %376 = vmatprep.subr.mxu0 0.0
    %377 = vmatpush1.msra.mxu0 0.0
    %378 = vmatprep.subr.mxu0 0.0
    %379 = vmatpush1.msra.mxu0 0.0
    %380 = vmatprep.subr.mxu0 0.0
    %381 = vmatpush1.msra.mxu0 0.0
    %382 = vmatprep.subr.mxu0 0.0
    %383 = vmatpush1.msra.mxu0 0.0
    %384 = vmatprep.subr.mxu0 0.0
    %385 = vmatpush1.msra.mxu0 0.0
    %386 = vmatprep.subr.mxu0 0.0
    %387 = vmatpush1.msra.mxu0 0.0
    %388 = vmatprep.subr.mxu0 0.0
    %389 = vmatpush1.msra.mxu0 0.0
    %390 = vmatprep.subr.mxu0 0.0
    %391 = vmatpush1.msra.mxu0 0.0
    %392 = vmatprep.subr.mxu0 0.0
    %393 = vmatpush1.msra.mxu0 0.0
    %394 = vmatprep.subr.mxu0 0.0
    %395 = vmatpush1.msra.mxu0 0.0
    %396 = vmatprep.subr.mxu0 0.0
    %397 = vmatpush1.msra.mxu0 0.0
    %398 = vmatprep.subr.mxu0 0.0
    %399 = vmatpush1.msra.mxu0 0.0
    %400 = vmatprep.subr.mxu0 0.0
    %401 = vmatpush1.msra.mxu0 0.0
    %402 = vmatprep.subr.mxu0 0.0
    %403 = vmatpush1.msra.mxu0 0.0
    %404 = vmatprep.subr.mxu0 0.0
    %405 = vmatpush1.msra.mxu0 0.0
    %406 = vmatprep.subr.mxu0 0.0
    %407 = vmatpush1.msra.mxu0 0.0
    %408 = vmatprep.subr.mxu0 0.0
    %409 = vmatpush1.msra.mxu0 0.0
    %410 = vmatprep.subr.mxu0 0.0
    %411 = vmatpush1.msra.mxu0 0.0
    %412 = vmatprep.subr.mxu0 0.0
    %413 = vmatpush1.msra.mxu0 0.0
    %414 = vmatprep.subr.mxu0 0.0
    %415 = vmatpush1.msra.mxu0 0.0
    %416 = vmatprep.mubr.f32.mxu0 0.0
    %417 = vmatmul.mubr.f32.gmra.mrb[0].mxu0 %v350
    %v418 = vpop.f32.mrb[0].mxu0
    %v419 = vadd.f32 0.0, %v418
    %v420 = vpop.f32.mrb[0].mxu0
    %421 = vdwg.mxu0
    %v423 = vrot.slane %v419, 6
    %v425 = vadd.f32 %v233, %v423
    %v426 = vxor.u32 %v425, 2147483648
    %v427 = vmul.f32 %v426, 1.442695
    %v428 = vpow.pop %v427
    %v429 = vadd.f32 %v428, 1.0
    %v430 = vrcp.pop %v429
    %v431 = vmul.f32 1.0, %v430
    %v432 = vtanh.pop %v425
    %v434 = vrot.slane %v337, 6
    %v436 = vmul.f32 %v431, %v434
    %438 = vrot.lane.b32.xlu0 %v432, 64
    %v439 = vpop.permute.xlu0 %438
    %v441 = vmul.f32 %v431, %v439
    %443 = vrot.lane.b32.xlu0 %v441, 32
    %v444 = vpop.permute.xlu0 %443
    %v446 = vadd.f32 %v436, %v444
    %v447 = vtanh.pop %v446
    %449 = vrot.lane.b32.xlu0 %v447, 64
    %v450 = vpop.permute.xlu0 %449
    %v452 = vmul.f32 %v431, %v450
    %454 = vrot.lane.b32.xlu0 %v452, 32
    %v455 = vpop.permute.xlu0 %454
    %vm457 = vcmask 257026
    %458 = vst.msk [vmem:[#allocation3] sm:$0xc] %vm457, %v455
    %v459 = vrot.slane %v452, 2
    %460 = vrot.lane.b32.xlu0 %v459, 32
    %v461 = vpop.permute.xlu0 %460
    %v462 = vsel %vm245, %v461, 0
    %464 = vmatprep.subr.mxu0 0.0
    %465 = vmatpush1.msra.mxu0 %v241
    %466 = vmatprep.subr.mxu0 0.0
    %467 = vmatpush1.msra.mxu0 %v242
    %468 = vmatprep.subr.mxu0 0.0
    %469 = vmatpush1.msra.mxu0 %v243
    %470 = vmatprep.subr.mxu0 0.0
    %471 = vmatpush1.msra.mxu0 %v244
    %472 = vmatprep.subr.mxu0 0.0
    %473 = vmatpush1.msra.mxu0 0.0
    %474 = vmatprep.subr.mxu0 0.0
    %475 = vmatpush1.msra.mxu0 0.0
    %476 = vmatprep.subr.mxu0 0.0
    %477 = vmatpush1.msra.mxu0 0.0
    %478 = vmatprep.subr.mxu0 0.0
    %479 = vmatpush1.msra.mxu0 0.0
    %480 = vmatprep.subr.mxu0 0.0
    %481 = vmatpush1.msra.mxu0 0.0
    %482 = vmatprep.subr.mxu0 0.0
    %483 = vmatpush1.msra.mxu0 0.0
    %484 = vmatprep.subr.mxu0 0.0
    %485 = vmatpush1.msra.mxu0 0.0
    %486 = vmatprep.subr.mxu0 0.0
    %487 = vmatpush1.msra.mxu0 0.0
    %488 = vmatprep.subr.mxu0 0.0
    %489 = vmatpush1.msra.mxu0 0.0
    %490 = vmatprep.subr.mxu0 0.0
    %491 = vmatpush1.msra.mxu0 0.0
    %492 = vmatprep.subr.mxu0 0.0
    %493 = vmatpush1.msra.mxu0 0.0
    %494 = vmatprep.subr.mxu0 0.0
    %495 = vmatpush1.msra.mxu0 0.0
    %496 = vmatprep.subr.mxu0 0.0
    %497 = vmatpush1.msra.mxu0 0.0
    %498 = vmatprep.subr.mxu0 0.0
    %499 = vmatpush1.msra.mxu0 0.0
    %500 = vmatprep.subr.mxu0 0.0
    %501 = vmatpush1.msra.mxu0 0.0
    %502 = vmatprep.subr.mxu0 0.0
    %503 = vmatpush1.msra.mxu0 0.0
    %504 = vmatprep.subr.mxu0 0.0
    %505 = vmatpush1.msra.mxu0 0.0
    %506 = vmatprep.subr.mxu0 0.0
    %507 = vmatpush1.msra.mxu0 0.0
    %508 = vmatprep.subr.mxu0 0.0
    %509 = vmatpush1.msra.mxu0 0.0
    %510 = vmatprep.subr.mxu0 0.0
    %511 = vmatpush1.msra.mxu0 0.0
    %512 = vmatprep.subr.mxu0 0.0
    %513 = vmatpush1.msra.mxu0 0.0
    %514 = vmatprep.subr.mxu0 0.0
    %515 = vmatpush1.msra.mxu0 0.0
    %516 = vmatprep.subr.mxu0 0.0
    %517 = vmatpush1.msra.mxu0 0.0
    %518 = vmatprep.subr.mxu0 0.0
    %519 = vmatpush1.msra.mxu0 0.0
    %520 = vmatprep.subr.mxu0 0.0
    %521 = vmatpush1.msra.mxu0 0.0
    %522 = vmatprep.subr.mxu0 0.0
    %523 = vmatpush1.msra.mxu0 0.0
    %524 = vmatprep.subr.mxu0 0.0
    %525 = vmatpush1.msra.mxu0 0.0
    %526 = vmatprep.subr.mxu0 0.0
    %527 = vmatpush1.msra.mxu0 0.0
    %528 = vmatprep.mubr.f32.mxu0 0.0
    %529 = vmatmul.mubr.f32.gmra.mrb[0].mxu0 %v462
    %v530 = vpop.f32.mrb[0].mxu0
    %v531 = vadd.f32 0.0, %v530
    %v532 = vpop.f32.mrb[0].mxu0
    %533 = vdwg.mxu0
    %v535 = vrot.slane %v531, 4
    %v537 = vadd.f32 %v233, %v535
    %v538 = vxor.u32 %v537, 2147483648
    %v539 = vmul.f32 %v538, 1.442695
    %v540 = vpow.pop %v539
    %v541 = vadd.f32 %v540, 1.0
    %v542 = vrcp.pop %v541
    %v543 = vmul.f32 1.0, %v542
    %v544 = vtanh.pop %v537
    %v546 = vrot.slane %v446, 6
    %v548 = vmul.f32 %v543, %v546
    %550 = vrot.lane.b32.xlu0 %v544, 64
    %v551 = vpop.permute.xlu0 %550
    %v553 = vmul.f32 %v543, %v551
    %555 = vrot.lane.b32.xlu0 %v553, 32
    %v556 = vpop.permute.xlu0 %555
    %v558 = vadd.f32 %v548, %v556
    %v559 = vtanh.pop %v558
    %561 = vrot.lane.b32.xlu0 %v559, 64
    %v562 = vpop.permute.xlu0 %561
    %v564 = vmul.f32 %v543, %v562
    %566 = vrot.lane.b32.xlu0 %v564, 32
    %v567 = vpop.permute.xlu0 %566
    %vm569 = vcmask 259076
    %570 = vst.msk [vmem:[#allocation3] sm:$0x30] %vm569, %v567
    %v571 = vrot.slane %v564, 4
    %572 = vrot.lane.b32.xlu0 %v571, 32
    %v573 = vpop.permute.xlu0 %572
    %v574 = vsel %vm245, %v573, 0
    %576 = vmatprep.subr.mxu0 0.0
    %577 = vmatpush1.msra.mxu0 %v241
    %578 = vmatprep.subr.mxu0 0.0
    %579 = vmatpush1.msra.mxu0 %v242
    %580 = vmatprep.subr.mxu0 0.0
    %581 = vmatpush1.msra.mxu0 %v243
    %582 = vmatprep.subr.mxu0 0.0
    %583 = vmatpush1.msra.mxu0 %v244
    %584 = vmatprep.subr.mxu0 0.0
    %585 = vmatpush1.msra.mxu0 0.0
    %586 = vmatprep.subr.mxu0 0.0
    %587 = vmatpush1.msra.mxu0 0.0
    %588 = vmatprep.subr.mxu0 0.0
    %589 = vmatpush1.msra.mxu0 0.0
    %590 = vmatprep.subr.mxu0 0.0
    %591 = vmatpush1.msra.mxu0 0.0
    %592 = vmatprep.subr.mxu0 0.0
    %593 = vmatpush1.msra.mxu0 0.0
    %594 = vmatprep.subr.mxu0 0.0
    %595 = vmatpush1.msra.mxu0 0.0
    %596 = vmatprep.subr.mxu0 0.0
    %597 = vmatpush1.msra.mxu0 0.0
    %598 = vmatprep.subr.mxu0 0.0
    %599 = vmatpush1.msra.mxu0 0.0
    %600 = vmatprep.subr.mxu0 0.0
    %601 = vmatpush1.msra.mxu0 0.0
    %602 = vmatprep.subr.mxu0 0.0
    %603 = vmatpush1.msra.mxu0 0.0
    %604 = vmatprep.subr.mxu0 0.0
    %605 = vmatpush1.msra.mxu0 0.0
    %606 = vmatprep.subr.mxu0 0.0
    %607 = vmatpush1.msra.mxu0 0.0
    %608 = vmatprep.subr.mxu0 0.0
    %609 = vmatpush1.msra.mxu0 0.0
    %610 = vmatprep.subr.mxu0 0.0
    %611 = vmatpush1.msra.mxu0 0.0
    %612 = vmatprep.subr.mxu0 0.0
    %613 = vmatpush1.msra.mxu0 0.0
    %614 = vmatprep.subr.mxu0 0.0
    %615 = vmatpush1.msra.mxu0 0.0
    %616 = vmatprep.subr.mxu0 0.0
    %617 = vmatpush1.msra.mxu0 0.0
    %618 = vmatprep.subr.mxu0 0.0
    %619 = vmatpush1.msra.mxu0 0.0
    %620 = vmatprep.subr.mxu0 0.0
    %621 = vmatpush1.msra.mxu0 0.0
    %622 = vmatprep.subr.mxu0 0.0
    %623 = vmatpush1.msra.mxu0 0.0
    %624 = vmatprep.subr.mxu0 0.0
    %625 = vmatpush1.msra.mxu0 0.0
    %626 = vmatprep.subr.mxu0 0.0
    %627 = vmatpush1.msra.mxu0 0.0
    %628 = vmatprep.subr.mxu0 0.0
    %629 = vmatpush1.msra.mxu0 0.0
    %630 = vmatprep.subr.mxu0 0.0
    %631 = vmatpush1.msra.mxu0 0.0
    %632 = vmatprep.subr.mxu0 0.0
    %633 = vmatpush1.msra.mxu0 0.0
    %634 = vmatprep.subr.mxu0 0.0
    %635 = vmatpush1.msra.mxu0 0.0
    %636 = vmatprep.subr.mxu0 0.0
    %637 = vmatpush1.msra.mxu0 0.0
    %638 = vmatprep.subr.mxu0 0.0
    %639 = vmatpush1.msra.mxu0 0.0
    %640 = vmatprep.mubr.f32.mxu0 0.0
    %641 = vmatmul.mubr.f32.gmra.mrb[0].mxu0 %v574
    %v642 = vpop.f32.mrb[0].mxu0
    %v643 = vadd.f32 0.0, %v642
    %v644 = vpop.f32.mrb[0].mxu0
    %645 = vdwg.mxu0
    %v647 = vrot.slane %v643, 2
    %v649 = vadd.f32 %v233, %v647
    %v650 = vxor.u32 %v649, 2147483648
    %v651 = vmul.f32 %v650, 1.442695
    %v652 = vpow.pop %v651
    %v653 = vadd.f32 %v652, 1.0
    %v654 = vrcp.pop %v653
    %v655 = vmul.f32 1.0, %v654
    %v656 = vtanh.pop %v649
    %v658 = vrot.slane %v558, 6
    %v660 = vmul.f32 %v655, %v658
    %662 = vrot.lane.b32.xlu0 %v656, 64
    %v663 = vpop.permute.xlu0 %662
    %v665 = vmul.f32 %v655, %v663
    %667 = vrot.lane.b32.xlu0 %v665, 32
    %v668 = vpop.permute.xlu0 %667
    %v670 = vadd.f32 %v660, %v668
    %v671 = vtanh.pop %v670
    %673 = vrot.lane.b32.xlu0 %v671, 64
    %v674 = vpop.permute.xlu0 %673
    %v676 = vmul.f32 %v655, %v674
    %678 = vrot.lane.b32.xlu0 %v676, 32
    %v679 = vpop.permute.xlu0 %678
    %vm681 = vcmask 261126
    %682 = vst.msk [vmem:[#allocation3] sm:$0xc0] %vm681, %v679
    %v683 = vrot.slane %v676, 6
    %684 = vrot.lane.b32.xlu0 %v683, 32
    %v685 = vpop.permute.xlu0 %684
    %v686 = vsel %vm245, %v685, 0
    %688 = vmatprep.subr.mxu0 0.0
    %689 = vmatpush1.msra.mxu0 %v241
    %690 = vmatprep.subr.mxu0 0.0
    %691 = vmatpush1.msra.mxu0 %v242
    %692 = vmatprep.subr.mxu0 0.0
    %693 = vmatpush1.msra.mxu0 %v243
    %694 = vmatprep.subr.mxu0 0.0
    %695 = vmatpush1.msra.mxu0 %v244
    %696 = vmatprep.subr.mxu0 0.0
    %697 = vmatpush1.msra.mxu0 0.0
    %698 = vmatprep.subr.mxu0 0.0
    %699 = vmatpush1.msra.mxu0 0.0
    %700 = vmatprep.subr.mxu0 0.0
    %701 = vmatpush1.msra.mxu0 0.0
    %702 = vmatprep.subr.mxu0 0.0
    %703 = vmatpush1.msra.mxu0 0.0
    %704 = vmatprep.subr.mxu0 0.0
    %705 = vmatpush1.msra.mxu0 0.0
    %706 = vmatprep.subr.mxu0 0.0
    %707 = vmatpush1.msra.mxu0 0.0
    %708 = vmatprep.subr.mxu0 0.0
    %709 = vmatpush1.msra.mxu0 0.0
    %710 = vmatprep.subr.mxu0 0.0
    %711 = vmatpush1.msra.mxu0 0.0
    %712 = vmatprep.subr.mxu0 0.0
    %713 = vmatpush1.msra.mxu0 0.0
    %714 = vmatprep.subr.mxu0 0.0
    %715 = vmatpush1.msra.mxu0 0.0
    %716 = vmatprep.subr.mxu0 0.0
    %717 = vmatpush1.msra.mxu0 0.0
    %718 = vmatprep.subr.mxu0 0.0
    %719 = vmatpush1.msra.mxu0 0.0
    %720 = vmatprep.subr.mxu0 0.0
    %721 = vmatpush1.msra.mxu0 0.0
    %722 = vmatprep.subr.mxu0 0.0
    %723 = vmatpush1.msra.mxu0 0.0
    %724 = vmatprep.subr.mxu0 0.0
    %725 = vmatpush1.msra.mxu0 0.0
    %726 = vmatprep.subr.mxu0 0.0
    %727 = vmatpush1.msra.mxu0 0.0
    %728 = vmatprep.subr.mxu0 0.0
    %729 = vmatpush1.msra.mxu0 0.0
    %730 = vmatprep.subr.mxu0 0.0
    %731 = vmatpush1.msra.mxu0 0.0
    %732 = vmatprep.subr.mxu0 0.0
    %733 = vmatpush1.msra.mxu0 0.0
    %734 = vmatprep.subr.mxu0 0.0
    %735 = vmatpush1.msra.mxu0 0.0
    %736 = vmatprep.subr.mxu0 0.0
    %737 = vmatpush1.msra.mxu0 0.0
    %738 = vmatprep.subr.mxu0 0.0
    %739 = vmatpush1.msra.mxu0 0.0
    %740 = vmatprep.subr.mxu0 0.0
    %741 = vmatpush1.msra.mxu0 0.0
    %742 = vmatprep.subr.mxu0 0.0
    %743 = vmatpush1.msra.mxu0 0.0
    %744 = vmatprep.subr.mxu0 0.0
    %745 = vmatpush1.msra.mxu0 0.0
    %746 = vmatprep.subr.mxu0 0.0
    %747 = vmatpush1.msra.mxu0 0.0
    %748 = vmatprep.subr.mxu0 0.0
    %749 = vmatpush1.msra.mxu0 0.0
    %750 = vmatprep.subr.mxu0 0.0
    %751 = vmatpush1.msra.mxu0 0.0
    %752 = vmatprep.mubr.f32.mxu0 0.0
    %753 = vmatmul.mubr.f32.gmra.mrb[0].mxu0 %v686
    %v754 = vpop.f32.mrb[0].mxu0
    %v755 = vadd.f32 0.0, %v754
    %v756 = vpop.f32.mrb[0].mxu0
    %757 = vdwg.mxu0
    %v758 = vadd.f32 %v238, %v755
    %v759 = vxor.u32 %v758, 2147483648
    %v760 = vmul.f32 %v759, 1.442695
    %v761 = vpow.pop %v760
    %v762 = vadd.f32 %v761, 1.0
    %v763 = vrcp.pop %v762
    %v764 = vmul.f32 1.0, %v763
    %v765 = vtanh.pop %v758
    %v767 = vrot.slane %v670, 6
    %v769 = vmul.f32 %v764, %v767
    %771 = vrot.lane.b32.xlu0 %v765, 64
    %v772 = vpop.permute.xlu0 %771
    %v774 = vmul.f32 %v764, %v772
    %776 = vrot.lane.b32.xlu0 %v774, 32
    %v777 = vpop.permute.xlu0 %776
    %v779 = vadd.f32 %v769, %v777
    %v780 = vtanh.pop %v779
    %782 = vrot.lane.b32.xlu0 %v780, 64
    %v783 = vpop.permute.xlu0 %782
    %v785 = vmul.f32 %v764, %v783
    %787 = vrot.lane.b32.xlu0 %v785, 32
    %v788 = vpop.permute.xlu0 %787
    %790 = vst.msk [vmem:[#allocation3 + $0x8] sm:$0x3] %vm348, %v788
    %v791 = vsel %vm245, %v788, 0
    %793 = vmatprep.subr.mxu0 0.0
    %794 = vmatpush1.msra.mxu0 %v241
    %795 = vmatprep.subr.mxu0 0.0
    %796 = vmatpush1.msra.mxu0 %v242
    %797 = vmatprep.subr.mxu0 0.0
    %798 = vmatpush1.msra.mxu0 %v243
    %799 = vmatprep.subr.mxu0 0.0
    %800 = vmatpush1.msra.mxu0 %v244
    %801 = vmatprep.subr.mxu0 0.0
    %802 = vmatpush1.msra.mxu0 0.0
    %803 = vmatprep.subr.mxu0 0.0
    %804 = vmatpush1.msra.mxu0 0.0
    %805 = vmatprep.subr.mxu0 0.0
    %806 = vmatpush1.msra.mxu0 0.0
    %807 = vmatprep.subr.mxu0 0.0
    %808 = vmatpush1.msra.mxu0 0.0
    %809 = vmatprep.subr.mxu0 0.0
    %810 = vmatpush1.msra.mxu0 0.0
    %811 = vmatprep.subr.mxu0 0.0
    %812 = vmatpush1.msra.mxu0 0.0
    %813 = vmatprep.subr.mxu0 0.0
    %814 = vmatpush1.msra.mxu0 0.0
    %815 = vmatprep.subr.mxu0 0.0
    %816 = vmatpush1.msra.mxu0 0.0
    %817 = vmatprep.subr.mxu0 0.0
    %818 = vmatpush1.msra.mxu0 0.0
    %819 = vmatprep.subr.mxu0 0.0
    %820 = vmatpush1.msra.mxu0 0.0
    %821 = vmatprep.subr.mxu0 0.0
    %822 = vmatpush1.msra.mxu0 0.0
    %823 = vmatprep.subr.mxu0 0.0
    %824 = vmatpush1.msra.mxu0 0.0
    %825 = vmatprep.subr.mxu0 0.0
    %826 = vmatpush1.msra.mxu0 0.0
    %827 = vmatprep.subr.mxu0 0.0
    %828 = vmatpush1.msra.mxu0 0.0
    %829 = vmatprep.subr.mxu0 0.0
    %830 = vmatpush1.msra.mxu0 0.0
    %831 = vmatprep.subr.mxu0 0.0
    %832 = vmatpush1.msra.mxu0 0.0
    %833 = vmatprep.subr.mxu0 0.0
    %834 = vmatpush1.msra.mxu0 0.0
    %835 = vmatprep.subr.mxu0 0.0
    %836 = vmatpush1.msra.mxu0 0.0
    %837 = vmatprep.subr.mxu0 0.0
    %838 = vmatpush1.msra.mxu0 0.0
    %839 = vmatprep.subr.mxu0 0.0
    %840 = vmatpush1.msra.mxu0 0.0
    %841 = vmatprep.subr.mxu0 0.0
    %842 = vmatpush1.msra.mxu0 0.0
    %843 = vmatprep.subr.mxu0 0.0
    %844 = vmatpush1.msra.mxu0 0.0
    %845 = vmatprep.subr.mxu0 0.0
    %846 = vmatpush1.msra.mxu0 0.0
    %847 = vmatprep.subr.mxu0 0.0
    %848 = vmatpush1.msra.mxu0 0.0
    %849 = vmatprep.subr.mxu0 0.0
    %850 = vmatpush1.msra.mxu0 0.0
    %851 = vmatprep.subr.mxu0 0.0
    %852 = vmatpush1.msra.mxu0 0.0
    %853 = vmatprep.subr.mxu0 0.0
    %854 = vmatpush1.msra.mxu0 0.0
    %855 = vmatprep.subr.mxu0 0.0
    %856 = vmatpush1.msra.mxu0 0.0
    %857 = vmatprep.mubr.f32.mxu0 0.0
    %858 = vmatmul.mubr.f32.gmra.mrb[0].mxu0 %v791
    %v859 = vpop.f32.mrb[0].mxu0
    %v860 = vadd.f32 0.0, %v859
    %v861 = vpop.f32.mrb[0].mxu0
    %862 = vdwg.mxu0
    %v864 = vrot.slane %v860, 6
    %v866 = vadd.f32 %v238, %v864
    %v867 = vxor.u32 %v866, 2147483648
    %v868 = vmul.f32 %v867, 1.442695
    %v869 = vpow.pop %v868
    %v870 = vadd.f32 %v869, 1.0
    %v871 = vrcp.pop %v870
    %v872 = vmul.f32 1.0, %v871
    %v873 = vtanh.pop %v866
    %v875 = vrot.slane %v779, 6
    %v877 = vmul.f32 %v872, %v875
    %879 = vrot.lane.b32.xlu0 %v873, 64
    %v880 = vpop.permute.xlu0 %879
    %v882 = vmul.f32 %v872, %v880
    %884 = vrot.lane.b32.xlu0 %v882, 32
    %v885 = vpop.permute.xlu0 %884
    %v887 = vadd.f32 %v877, %v885
    %v888 = vtanh.pop %v887
    %890 = vrot.lane.b32.xlu0 %v888, 64
    %v891 = vpop.permute.xlu0 %890
    %v893 = vmul.f32 %v872, %v891
    %895 = vrot.lane.b32.xlu0 %v893, 32
    %v896 = vpop.permute.xlu0 %895
    %898 = vst.msk [vmem:[#allocation3 + $0x8] sm:$0xc] %vm457, %v896
    %v899 = vrot.slane %v893, 2
    %900 = vrot.lane.b32.xlu0 %v899, 32
    %v901 = vpop.permute.xlu0 %900
    %v902 = vsel %vm245, %v901, 0
    %904 = vmatprep.subr.mxu0 0.0
    %905 = vmatpush1.msra.mxu0 %v241
    %906 = vmatprep.subr.mxu0 0.0
    %907 = vmatpush1.msra.mxu0 %v242
    %908 = vmatprep.subr.mxu0 0.0
    %909 = vmatpush1.msra.mxu0 %v243
    %910 = vmatprep.subr.mxu0 0.0
    %911 = vmatpush1.msra.mxu0 %v244
    %912 = vmatprep.subr.mxu0 0.0
    %913 = vmatpush1.msra.mxu0 0.0
    %914 = vmatprep.subr.mxu0 0.0
    %915 = vmatpush1.msra.mxu0 0.0
    %916 = vmatprep.subr.mxu0 0.0
    %917 = vmatpush1.msra.mxu0 0.0
    %918 = vmatprep.subr.mxu0 0.0
    %919 = vmatpush1.msra.mxu0 0.0
    %920 = vmatprep.subr.mxu0 0.0
    %921 = vmatpush1.msra.mxu0 0.0
    %922 = vmatprep.subr.mxu0 0.0
    %923 = vmatpush1.msra.mxu0 0.0
    %924 = vmatprep.subr.mxu0 0.0
    %925 = vmatpush1.msra.mxu0 0.0
    %926 = vmatprep.subr.mxu0 0.0
    %927 = vmatpush1.msra.mxu0 0.0
    %928 = vmatprep.subr.mxu0 0.0
    %929 = vmatpush1.msra.mxu0 0.0
    %930 = vmatprep.subr.mxu0 0.0
    %931 = vmatpush1.msra.mxu0 0.0
    %932 = vmatprep.subr.mxu0 0.0
    %933 = vmatpush1.msra.mxu0 0.0
    %934 = vmatprep.subr.mxu0 0.0
    %935 = vmatpush1.msra.mxu0 0.0
    %936 = vmatprep.subr.mxu0 0.0
    %937 = vmatpush1.msra.mxu0 0.0
    %938 = vmatprep.subr.mxu0 0.0
    %939 = vmatpush1.msra.mxu0 0.0
    %940 = vmatprep.subr.mxu0 0.0
    %941 = vmatpush1.msra.mxu0 0.0
    %942 = vmatprep.subr.mxu0 0.0
    %943 = vmatpush1.msra.mxu0 0.0
    %944 = vmatprep.subr.mxu0 0.0
    %945 = vmatpush1.msra.mxu0 0.0
    %946 = vmatprep.subr.mxu0 0.0
    %947 = vmatpush1.msra.mxu0 0.0
    %948 = vmatprep.subr.mxu0 0.0
    %949 = vmatpush1.msra.mxu0 0.0
    %950 = vmatprep.subr.mxu0 0.0
    %951 = vmatpush1.msra.mxu0 0.0
    %952 = vmatprep.subr.mxu0 0.0
    %953 = vmatpush1.msra.mxu0 0.0
    %954 = vmatprep.subr.mxu0 0.0
    %955 = vmatpush1.msra.mxu0 0.0
    %956 = vmatprep.subr.mxu0 0.0
    %957 = vmatpush1.msra.mxu0 0.0
    %958 = vmatprep.subr.mxu0 0.0
    %959 = vmatpush1.msra.mxu0 0.0
    %960 = vmatprep.subr.mxu0 0.0
    %961 = vmatpush1.msra.mxu0 0.0
    %962 = vmatprep.subr.mxu0 0.0
    %963 = vmatpush1.msra.mxu0 0.0
    %964 = vmatprep.subr.mxu0 0.0
    %965 = vmatpush1.msra.mxu0 0.0
    %966 = vmatprep.subr.mxu0 0.0
    %967 = vmatpush1.msra.mxu0 0.0
    %968 = vmatprep.mubr.f32.mxu0 0.0
    %969 = vmatmul.mubr.f32.gmra.mrb[0].mxu0 %v902
    %v970 = vpop.f32.mrb[0].mxu0
    %v971 = vadd.f32 0.0, %v970
    %v972 = vpop.f32.mrb[0].mxu0
    %973 = vdwg.mxu0
    %v975 = vrot.slane %v971, 4
    %v977 = vadd.f32 %v238, %v975
    %v978 = vxor.u32 %v977, 2147483648
    %v979 = vmul.f32 %v978, 1.442695
    %v980 = vpow.pop %v979
    %v981 = vadd.f32 %v980, 1.0
    %v982 = vrcp.pop %v981
    %v983 = vmul.f32 1.0, %v982
    %v984 = vtanh.pop %v977
    %v986 = vrot.slane %v887, 6
    %v988 = vmul.f32 %v983, %v986
    %990 = vrot.lane.b32.xlu0 %v984, 64
    %v991 = vpop.permute.xlu0 %990
    %v993 = vmul.f32 %v983, %v991
    %995 = vrot.lane.b32.xlu0 %v993, 32
    %v996 = vpop.permute.xlu0 %995
    %v998 = vadd.f32 %v988, %v996
    %v999 = vtanh.pop %v998
    %1001 = vrot.lane.b32.xlu0 %v999, 64
    %v1002 = vpop.permute.xlu0 %1001
    %v1004 = vmul.f32 %v983, %v1002
    %1006 = vrot.lane.b32.xlu0 %v1004, 32
    %v1007 = vpop.permute.xlu0 %1006
    %1009 = vst.msk [vmem:[#allocation3 + $0x8] sm:$0x30] %vm569, %v1007
    %v1010 = vrot.slane %v1004, 4
    %1011 = vrot.lane.b32.xlu0 %v1010, 32
    %v1012 = vpop.permute.xlu0 %1011
    %v1013 = vsel %vm245, %v1012, 0
    %1015 = vmatprep.subr.mxu0 0.0
    %1016 = vmatpush1.msra.mxu0 %v241
    %1017 = vmatprep.subr.mxu0 0.0
    %1018 = vmatpush1.msra.mxu0 %v242
    %1019 = vmatprep.subr.mxu0 0.0
    %1020 = vmatpush1.msra.mxu0 %v243
    %1021 = vmatprep.subr.mxu0 0.0
    %1022 = vmatpush1.msra.mxu0 %v244
    %1023 = vmatprep.subr.mxu0 0.0
    %1024 = vmatpush1.msra.mxu0 0.0
    %1025 = vmatprep.subr.mxu0 0.0
    %1026 = vmatpush1.msra.mxu0 0.0
    %1027 = vmatprep.subr.mxu0 0.0
    %1028 = vmatpush1.msra.mxu0 0.0
    %1029 = vmatprep.subr.mxu0 0.0
    %1030 = vmatpush1.msra.mxu0 0.0
    %1031 = vmatprep.subr.mxu0 0.0
    %1032 = vmatpush1.msra.mxu0 0.0
    %1033 = vmatprep.subr.mxu0 0.0
    %1034 = vmatpush1.msra.mxu0 0.0
    %1035 = vmatprep.subr.mxu0 0.0
    %1036 = vmatpush1.msra.mxu0 0.0
    %1037 = vmatprep.subr.mxu0 0.0
    %1038 = vmatpush1.msra.mxu0 0.0
    %1039 = vmatprep.subr.mxu0 0.0
    %1040 = vmatpush1.msra.mxu0 0.0
    %1041 = vmatprep.subr.mxu0 0.0
    %1042 = vmatpush1.msra.mxu0 0.0
    %1043 = vmatprep.subr.mxu0 0.0
    %1044 = vmatpush1.msra.mxu0 0.0
    %1045 = vmatprep.subr.mxu0 0.0
    %1046 = vmatpush1.msra.mxu0 0.0
    %1047 = vmatprep.subr.mxu0 0.0
    %1048 = vmatpush1.msra.mxu0 0.0
    %1049 = vmatprep.subr.mxu0 0.0
    %1050 = vmatpush1.msra.mxu0 0.0
    %1051 = vmatprep.subr.mxu0 0.0
    %1052 = vmatpush1.msra.mxu0 0.0
    %1053 = vmatprep.subr.mxu0 0.0
    %1054 = vmatpush1.msra.mxu0 0.0
    %1055 = vmatprep.subr.mxu0 0.0
    %1056 = vmatpush1.msra.mxu0 0.0
    %1057 = vmatprep.subr.mxu0 0.0
    %1058 = vmatpush1.msra.mxu0 0.0
    %1059 = vmatprep.subr.mxu0 0.0
    %1060 = vmatpush1.msra.mxu0 0.0
    %1061 = vmatprep.subr.mxu0 0.0
    %1062 = vmatpush1.msra.mxu0 0.0
    %1063 = vmatprep.subr.mxu0 0.0
    %1064 = vmatpush1.msra.mxu0 0.0
    %1065 = vmatprep.subr.mxu0 0.0
    %1066 = vmatpush1.msra.mxu0 0.0
    %1067 = vmatprep.subr.mxu0 0.0
    %1068 = vmatpush1.msra.mxu0 0.0
    %1069 = vmatprep.subr.mxu0 0.0
    %1070 = vmatpush1.msra.mxu0 0.0
    %1071 = vmatprep.subr.mxu0 0.0
    %1072 = vmatpush1.msra.mxu0 0.0
    %1073 = vmatprep.subr.mxu0 0.0
    %1074 = vmatpush1.msra.mxu0 0.0
    %1075 = vmatprep.subr.mxu0 0.0
    %1076 = vmatpush1.msra.mxu0 0.0
    %1077 = vmatprep.subr.mxu0 0.0
    %1078 = vmatpush1.msra.mxu0 0.0
    %1079 = vmatprep.mubr.f32.mxu0 0.0
    %1080 = vmatmul.mubr.f32.gmra.mrb[0].mxu0 %v1013
    %v1081 = vpop.f32.mrb[0].mxu0
    %v1082 = vadd.f32 0.0, %v1081
    %v1083 = vpop.f32.mrb[0].mxu0
    %1084 = vdwg.mxu0
    %v1086 = vrot.slane %v1082, 2
    %v1088 = vadd.f32 %v238, %v1086
    %v1089 = vxor.u32 %v1088, 2147483648
    %v1090 = vmul.f32 %v1089, 1.442695
    %v1091 = vpow.pop %v1090
    %v1092 = vadd.f32 %v1091, 1.0
    %v1093 = vrcp.pop %v1092
    %v1094 = vmul.f32 1.0, %v1093
    %v1095 = vtanh.pop %v1088
    %v1097 = vrot.slane %v998, 6
    %v1099 = vmul.f32 %v1094, %v1097
    %1101 = vrot.lane.b32.xlu0 %v1095, 64
    %v1102 = vpop.permute.xlu0 %1101
    %v1104 = vmul.f32 %v1094, %v1102
    %1106 = vrot.lane.b32.xlu0 %v1104, 32
    %v1107 = vpop.permute.xlu0 %1106
    %v1109 = vadd.f32 %v1099, %v1107
    %v1110 = vtanh.pop %v1109
    %1112 = vrot.lane.b32.xlu0 %v1110, 64
    %v1113 = vpop.permute.xlu0 %1112
    %v1115 = vmul.f32 %v1094, %v1113
    %1117 = vrot.lane.b32.xlu0 %v1115, 32
    %v1118 = vpop.permute.xlu0 %1117
    %1120 = vst.msk [vmem:[#allocation3 + $0x8] sm:$0xc0] %vm681, %v1118
    %s1121 = scalar_lea.vmem [#allocation7], 16
    %v1122 = vld [vmem:[%s1121] sm:$0xff]
    %v1123 = vld [vmem:[%s1121 + $0x8] sm:$0xff]
    %s1124 = scalar_lea.vmem [#allocation10], 1
    %v1125 = vld [vmem:[%s1124] sm:$0x1]
    %v1127 = vlaneseq
    %v1128 = vshrl.u32 %v1127, 7
    %v1129 = vsub.s32 0, %v1128
    %v1130 = vrot.slane %v1125, %v1129
    %1132 = vmatprep.subr.mxu0 0.0
    %1133 = vmatpush1.msra.mxu0 %v1122
    %1134 = vmatprep.subr.mxu0 0.0
    %1135 = vmatpush1.msra.mxu0 %v1123
    %1136 = vmatprep.subr.mxu0 0.0
    %1137 = vmatpush1.msra.mxu0 0.0
    %1138 = vmatprep.subr.mxu0 0.0
    %1139 = vmatpush1.msra.mxu0 0.0
    %1140 = vmatprep.subr.mxu0 0.0
    %1141 = vmatpush1.msra.mxu0 0.0
    %1142 = vmatprep.subr.mxu0 0.0
    %1143 = vmatpush1.msra.mxu0 0.0
    %1144 = vmatprep.subr.mxu0 0.0
    %1145 = vmatpush1.msra.mxu0 0.0
    %1146 = vmatprep.subr.mxu0 0.0
    %1147 = vmatpush1.msra.mxu0 0.0
    %1148 = vmatprep.subr.mxu0 0.0
    %1149 = vmatpush1.msra.mxu0 0.0
    %1150 = vmatprep.subr.mxu0 0.0
    %1151 = vmatpush1.msra.mxu0 0.0
    %1152 = vmatprep.subr.mxu0 0.0
    %1153 = vmatpush1.msra.mxu0 0.0
    %1154 = vmatprep.subr.mxu0 0.0
    %1155 = vmatpush1.msra.mxu0 0.0
    %1156 = vmatprep.subr.mxu0 0.0
    %1157 = vmatpush1.msra.mxu0 0.0
    %1158 = vmatprep.subr.mxu0 0.0
    %1159 = vmatpush1.msra.mxu0 0.0
    %1160 = vmatprep.subr.mxu0 0.0
    %1161 = vmatpush1.msra.mxu0 0.0
    %1162 = vmatprep.subr.mxu0 0.0
    %1163 = vmatpush1.msra.mxu0 0.0
    %1164 = vmatprep.subr.mxu0 0.0
    %1165 = vmatpush1.msra.mxu0 0.0
    %1166 = vmatprep.subr.mxu0 0.0
    %1167 = vmatpush1.msra.mxu0 0.0
    %1168 = vmatprep.subr.mxu0 0.0
    %1169 = vmatpush1.msra.mxu0 0.0
    %1170 = vmatprep.subr.mxu0 0.0
    %1171 = vmatpush1.msra.mxu0 0.0
    %1172 = vmatprep.subr.mxu0 0.0
    %1173 = vmatpush1.msra.mxu0 0.0
    %1174 = vmatprep.subr.mxu0 0.0
    %1175 = vmatpush1.msra.mxu0 0.0
    %1176 = vmatprep.subr.mxu0 0.0
    %1177 = vmatpush1.msra.mxu0 0.0
    %1178 = vmatprep.subr.mxu0 0.0
    %1179 = vmatpush1.msra.mxu0 0.0
    %1180 = vmatprep.subr.mxu0 0.0
    %1181 = vmatpush1.msra.mxu0 0.0
    %1182 = vmatprep.subr.mxu0 0.0
    %1183 = vmatpush1.msra.mxu0 0.0
    %1184 = vmatprep.subr.mxu0 0.0
    %1185 = vmatpush1.msra.mxu0 0.0
    %1186 = vmatprep.subr.mxu0 0.0
    %1187 = vmatpush1.msra.mxu0 0.0
    %1188 = vmatprep.subr.mxu0 0.0
    %1189 = vmatpush1.msra.mxu0 0.0
    %1190 = vmatprep.subr.mxu0 0.0
    %1191 = vmatpush1.msra.mxu0 0.0
    %1192 = vmatprep.subr.mxu0 0.0
    %1193 = vmatpush1.msra.mxu0 0.0
    %1194 = vmatprep.subr.mxu0 0.0
    %1195 = vmatpush1.msra.mxu0 0.0
    %1196 = vmatprep.mubr.f32.mxu0 0.0
    %1197 = vmatmul.mubr.f32.gmra.mrb[0].mxu0 %v161
    %v1198 = vpop.f32.mrb[0].mxu0
    %v1199 = vadd.f32 %v1130, %v1198
    %v1200 = vpop.f32.mrb[0].mxu0
    %1201 = vmatprep.mubr.f32.mxu0 0.0
    %1202 = vmatmul.mubr.f32.gmra.mrb[0].mxu0 %v164
    %v1203 = vpop.f32.mrb[0].mxu0
    %v1204 = vadd.f32 %v1130, %v1203
    %v1205 = vpop.f32.mrb[0].mxu0
    %1206 = vdwg.mxu0
    %s1207 = scalar_lea.vmem %s3, 32
    %v1208 = vld [vmem:[%s1207] sm:$0xff]
    %v1209 = vld [vmem:[%s1207 + $0x8] sm:$0xff]
    %v1210 = vld [vmem:[%s1207 + $0x10] sm:$0xff]
    %v1211 = vld [vmem:[%s1207 + $0x18] sm:$0xff]
    %1212 = vmatprep.subr.mxu0 0.0
    %1213 = vmatpush1.msra.mxu0 %v1208
    %1214 = vmatprep.subr.mxu0 0.0
    %1215 = vmatpush1.msra.mxu0 %v1209
    %1216 = vmatprep.subr.mxu0 0.0
    %1217 = vmatpush1.msra.mxu0 %v1210
    %1218 = vmatprep.subr.mxu0 0.0
    %1219 = vmatpush1.msra.mxu0 %v1211
    %1220 = vmatprep.subr.mxu0 0.0
    %1221 = vmatpush1.msra.mxu0 0.0
    %1222 = vmatprep.subr.mxu0 0.0
    %1223 = vmatpush1.msra.mxu0 0.0
    %1224 = vmatprep.subr.mxu0 0.0
    %1225 = vmatpush1.msra.mxu0 0.0
    %1226 = vmatprep.subr.mxu0 0.0
    %1227 = vmatpush1.msra.mxu0 0.0
    %1228 = vmatprep.subr.mxu0 0.0
    %1229 = vmatpush1.msra.mxu0 0.0
    %1230 = vmatprep.subr.mxu0 0.0
    %1231 = vmatpush1.msra.mxu0 0.0
    %1232 = vmatprep.subr.mxu0 0.0
    %1233 = vmatpush1.msra.mxu0 0.0
    %1234 = vmatprep.subr.mxu0 0.0
    %1235 = vmatpush1.msra.mxu0 0.0
    %1236 = vmatprep.subr.mxu0 0.0
    %1237 = vmatpush1.msra.mxu0 0.0
    %1238 = vmatprep.subr.mxu0 0.0
    %1239 = vmatpush1.msra.mxu0 0.0
    %1240 = vmatprep.subr.mxu0 0.0
    %1241 = vmatpush1.msra.mxu0 0.0
    %1242 = vmatprep.subr.mxu0 0.0
    %1243 = vmatpush1.msra.mxu0 0.0
    %1244 = vmatprep.subr.mxu0 0.0
    %1245 = vmatpush1.msra.mxu0 0.0
    %1246 = vmatprep.subr.mxu0 0.0
    %1247 = vmatpush1.msra.mxu0 0.0
    %1248 = vmatprep.subr.mxu0 0.0
    %1249 = vmatpush1.msra.mxu0 0.0
    %1250 = vmatprep.subr.mxu0 0.0
    %1251 = vmatpush1.msra.mxu0 0.0
    %1252 = vmatprep.subr.mxu0 0.0
    %1253 = vmatpush1.msra.mxu0 0.0
    %1254 = vmatprep.subr.mxu0 0.0
    %1255 = vmatpush1.msra.mxu0 0.0
    %1256 = vmatprep.subr.mxu0 0.0
    %1257 = vmatpush1.msra.mxu0 0.0
    %1258 = vmatprep.subr.mxu0 0.0
    %1259 = vmatpush1.msra.mxu0 0.0
    %1260 = vmatprep.subr.mxu0 0.0
    %1261 = vmatpush1.msra.mxu0 0.0
    %1262 = vmatprep.subr.mxu0 0.0
    %1263 = vmatpush1.msra.mxu0 0.0
    %1264 = vmatprep.subr.mxu0 0.0
    %1265 = vmatpush1.msra.mxu0 0.0
    %1266 = vmatprep.subr.mxu0 0.0
    %1267 = vmatpush1.msra.mxu0 0.0
    %1268 = vmatprep.subr.mxu0 0.0
    %1269 = vmatpush1.msra.mxu0 0.0
    %1270 = vmatprep.subr.mxu0 0.0
    %1271 = vmatpush1.msra.mxu0 0.0
    %1272 = vmatprep.subr.mxu0 0.0
    %1273 = vmatpush1.msra.mxu0 0.0
    %1274 = vmatprep.subr.mxu0 0.0
    %1275 = vmatpush1.msra.mxu0 0.0
    %1276 = vmatprep.mubr.f32.mxu0 0.0
    %1277 = vmatmul.mubr.f32.gmra.mrb[0].mxu0 %v247
    %v1278 = vpop.f32.mrb[0].mxu0
    %v1279 = vadd.f32 0.0, %v1278
    %v1280 = vpop.f32.mrb[0].mxu0
    %1281 = vdwg.mxu0
    %v1283 = vrot.slane %v1279, 2
    %v1285 = vadd.f32 %v1204, %v1283
    %v1286 = vxor.u32 %v1285, 2147483648
    %v1287 = vmul.f32 %v1286, 1.442695
    %v1288 = vpow.pop %v1287
    %v1289 = vadd.f32 %v1288, 1.0
    %v1290 = vrcp.pop %v1289
    %v1291 = vmul.f32 1.0, %v1290
    %v1292 = vtanh.pop %v1285
    %v1293 = vmul.f32 %v1291, 0.0
    %1295 = vrot.lane.b32.xlu0 %v1292, 64
    %v1296 = vpop.permute.xlu0 %1295
    %v1298 = vmul.f32 %v1291, %v1296
    %1300 = vrot.lane.b32.xlu0 %v1298, 32
    %v1301 = vpop.permute.xlu0 %1300
    %v1303 = vadd.f32 %v1293, %v1301
    %v1304 = vtanh.pop %v1303
    %1306 = vrot.lane.b32.xlu0 %v1304, 64
    %v1307 = vpop.permute.xlu0 %1306
    %v1309 = vmul.f32 %v1291, %v1307
    %1311 = vrot.lane.b32.xlu0 %v1309, 64
    %v1312 = vpop.permute.xlu0 %1311
    %vm1314 = vcmask 523526
    %1315 = vst.msk [vmem:[#allocation3 + $0x8] sm:$0xc0] %vm1314, %v1312
    %v1316 = vrot.slane %v1309, 6
    %1317 = vrot.lane.b32.xlu0 %v1316, 32
    %v1318 = vpop.permute.xlu0 %1317
    %v1319 = vsel %vm245, %v1318, 0
    %1321 = vmatprep.subr.mxu0 0.0
    %1322 = vmatpush1.msra.mxu0 %v1208
    %1323 = vmatprep.subr.mxu0 0.0
    %1324 = vmatpush1.msra.mxu0 %v1209
    %1325 = vmatprep.subr.mxu0 0.0
    %1326 = vmatpush1.msra.mxu0 %v1210
    %1327 = vmatprep.subr.mxu0 0.0
    %1328 = vmatpush1.msra.mxu0 %v1211
    %1329 = vmatprep.subr.mxu0 0.0
    %1330 = vmatpush1.msra.mxu0 0.0
    %1331 = vmatprep.subr.mxu0 0.0
    %1332 = vmatpush1.msra.mxu0 0.0
    %1333 = vmatprep.subr.mxu0 0.0
    %1334 = vmatpush1.msra.mxu0 0.0
    %1335 = vmatprep.subr.mxu0 0.0
    %1336 = vmatpush1.msra.mxu0 0.0
    %1337 = vmatprep.subr.mxu0 0.0
    %1338 = vmatpush1.msra.mxu0 0.0
    %1339 = vmatprep.subr.mxu0 0.0
    %1340 = vmatpush1.msra.mxu0 0.0
    %1341 = vmatprep.subr.mxu0 0.0
    %1342 = vmatpush1.msra.mxu0 0.0
    %1343 = vmatprep.subr.mxu0 0.0
    %1344 = vmatpush1.msra.mxu0 0.0
    %1345 = vmatprep.subr.mxu0 0.0
    %1346 = vmatpush1.msra.mxu0 0.0
    %1347 = vmatprep.subr.mxu0 0.0
    %1348 = vmatpush1.msra.mxu0 0.0
    %1349 = vmatprep.subr.mxu0 0.0
    %1350 = vmatpush1.msra.mxu0 0.0
    %1351 = vmatprep.subr.mxu0 0.0
    %1352 = vmatpush1.msra.mxu0 0.0
    %1353 = vmatprep.subr.mxu0 0.0
    %1354 = vmatpush1.msra.mxu0 0.0
    %1355 = vmatprep.subr.mxu0 0.0
    %1356 = vmatpush1.msra.mxu0 0.0
    %1357 = vmatprep.subr.mxu0 0.0
    %1358 = vmatpush1.msra.mxu0 0.0
    %1359 = vmatprep.subr.mxu0 0.0
    %1360 = vmatpush1.msra.mxu0 0.0
    %1361 = vmatprep.subr.mxu0 0.0
    %1362 = vmatpush1.msra.mxu0 0.0
    %1363 = vmatprep.subr.mxu0 0.0
    %1364 = vmatpush1.msra.mxu0 0.0
    %1365 = vmatprep.subr.mxu0 0.0
    %1366 = vmatpush1.msra.mxu0 0.0
    %1367 = vmatprep.subr.mxu0 0.0
    %1368 = vmatpush1.msra.mxu0 0.0
    %1369 = vmatprep.subr.mxu0 0.0
    %1370 = vmatpush1.msra.mxu0 0.0
    %1371 = vmatprep.subr.mxu0 0.0
    %1372 = vmatpush1.msra.mxu0 0.0
    %1373 = vmatprep.subr.mxu0 0.0
    %1374 = vmatpush1.msra.mxu0 0.0
    %1375 = vmatprep.subr.mxu0 0.0
    %1376 = vmatpush1.msra.mxu0 0.0
    %1377 = vmatprep.subr.mxu0 0.0
    %1378 = vmatpush1.msra.mxu0 0.0
    %1379 = vmatprep.subr.mxu0 0.0
    %1380 = vmatpush1.msra.mxu0 0.0
    %1381 = vmatprep.subr.mxu0 0.0
    %1382 = vmatpush1.msra.mxu0 0.0
    %1383 = vmatprep.subr.mxu0 0.0
    %1384 = vmatpush1.msra.mxu0 0.0
    %1385 = vmatprep.mubr.f32.mxu0 0.0
    %1386 = vmatmul.mubr.f32.gmra.mrb[0].mxu0 %v1319
    %v1387 = vpop.f32.mrb[0].mxu0
    %v1388 = vadd.f32 0.0, %v1387
    %v1389 = vpop.f32.mrb[0].mxu0
    %1390 = vdwg.mxu0
    %v1392 = vrot.slane %v1388, 4
    %v1394 = vadd.f32 %v1204, %v1392
    %v1395 = vxor.u32 %v1394, 2147483648
    %v1396 = vmul.f32 %v1395, 1.442695
    %v1397 = vpow.pop %v1396
    %v1398 = vadd.f32 %v1397, 1.0
    %v1399 = vrcp.pop %v1398
    %v1400 = vmul.f32 1.0, %v1399
    %v1401 = vtanh.pop %v1394
    %v1403 = vrot.slane %v1303, 2
    %v1405 = vmul.f32 %v1400, %v1403
    %1407 = vrot.lane.b32.xlu0 %v1401, 64
    %v1408 = vpop.permute.xlu0 %1407
    %v1410 = vmul.f32 %v1400, %v1408
    %1412 = vrot.lane.b32.xlu0 %v1410, 32
    %v1413 = vpop.permute.xlu0 %1412
    %v1415 = vadd.f32 %v1405, %v1413
    %v1416 = vtanh.pop %v1415
    %1418 = vrot.lane.b32.xlu0 %v1416, 64
    %v1419 = vpop.permute.xlu0 %1418
    %v1421 = vmul.f32 %v1400, %v1419
    %1423 = vrot.lane.b32.xlu0 %v1421, 64
    %v1424 = vpop.permute.xlu0 %1423
    %vm1426 = vcmask 521476
    %1427 = vst.msk [vmem:[#allocation3 + $0x8] sm:$0x30] %vm1426, %v1424
    %v1428 = vrot.slane %v1421, 4
    %1429 = vrot.lane.b32.xlu0 %v1428, 32
    %v1430 = vpop.permute.xlu0 %1429
    %v1431 = vsel %vm245, %v1430, 0
    %1433 = vmatprep.subr.mxu0 0.0
    %1434 = vmatpush1.msra.mxu0 %v1208
    %1435 = vmatprep.subr.mxu0 0.0
    %1436 = vmatpush1.msra.mxu0 %v1209
    %1437 = vmatprep.subr.mxu0 0.0
    %1438 = vmatpush1.msra.mxu0 %v1210
    %1439 = vmatprep.subr.mxu0 0.0
    %1440 = vmatpush1.msra.mxu0 %v1211
    %1441 = vmatprep.subr.mxu0 0.0
    %1442 = vmatpush1.msra.mxu0 0.0
    %1443 = vmatprep.subr.mxu0 0.0
    %1444 = vmatpush1.msra.mxu0 0.0
    %1445 = vmatprep.subr.mxu0 0.0
    %1446 = vmatpush1.msra.mxu0 0.0
    %1447 = vmatprep.subr.mxu0 0.0
    %1448 = vmatpush1.msra.mxu0 0.0
    %1449 = vmatprep.subr.mxu0 0.0
    %1450 = vmatpush1.msra.mxu0 0.0
    %1451 = vmatprep.subr.mxu0 0.0
    %1452 = vmatpush1.msra.mxu0 0.0
    %1453 = vmatprep.subr.mxu0 0.0
    %1454 = vmatpush1.msra.mxu0 0.0
    %1455 = vmatprep.subr.mxu0 0.0
    %1456 = vmatpush1.msra.mxu0 0.0
    %1457 = vmatprep.subr.mxu0 0.0
    %1458 = vmatpush1.msra.mxu0 0.0
    %1459 = vmatprep.subr.mxu0 0.0
    %1460 = vmatpush1.msra.mxu0 0.0
    %1461 = vmatprep.subr.mxu0 0.0
    %1462 = vmatpush1.msra.mxu0 0.0
    %1463 = vmatprep.subr.mxu0 0.0
    %1464 = vmatpush1.msra.mxu0 0.0
    %1465 = vmatprep.subr.mxu0 0.0
    %1466 = vmatpush1.msra.mxu0 0.0
    %1467 = vmatprep.subr.mxu0 0.0
    %1468 = vmatpush1.msra.mxu0 0.0
    %1469 = vmatprep.subr.mxu0 0.0
    %1470 = vmatpush1.msra.mxu0 0.0
    %1471 = vmatprep.subr.mxu0 0.0
    %1472 = vmatpush1.msra.mxu0 0.0
    %1473 = vmatprep.subr.mxu0 0.0
    %1474 = vmatpush1.msra.mxu0 0.0
    %1475 = vmatprep.subr.mxu0 0.0
    %1476 = vmatpush1.msra.mxu0 0.0
    %1477 = vmatprep.subr.mxu0 0.0
    %1478 = vmatpush1.msra.mxu0 0.0
    %1479 = vmatprep.subr.mxu0 0.0
    %1480 = vmatpush1.msra.mxu0 0.0
    %1481 = vmatprep.subr.mxu0 0.0
    %1482 = vmatpush1.msra.mxu0 0.0
    %1483 = vmatprep.subr.mxu0 0.0
    %1484 = vmatpush1.msra.mxu0 0.0
    %1485 = vmatprep.subr.mxu0 0.0
    %1486 = vmatpush1.msra.mxu0 0.0
    %1487 = vmatprep.subr.mxu0 0.0
    %1488 = vmatpush1.msra.mxu0 0.0
    %1489 = vmatprep.subr.mxu0 0.0
    %1490 = vmatpush1.msra.mxu0 0.0
    %1491 = vmatprep.subr.mxu0 0.0
    %1492 = vmatpush1.msra.mxu0 0.0
    %1493 = vmatprep.subr.mxu0 0.0
    %1494 = vmatpush1.msra.mxu0 0.0
    %1495 = vmatprep.subr.mxu0 0.0
    %1496 = vmatpush1.msra.mxu0 0.0
    %1497 = vmatprep.mubr.f32.mxu0 0.0
    %1498 = vmatmul.mubr.f32.gmra.mrb[0].mxu0 %v1431
    %v1499 = vpop.f32.mrb[0].mxu0
    %v1500 = vadd.f32 0.0, %v1499
    %v1501 = vpop.f32.mrb[0].mxu0
    %1502 = vdwg.mxu0
    %v1504 = vrot.slane %v1500, 6
    %v1506 = vadd.f32 %v1204, %v1504
    %v1507 = vxor.u32 %v1506, 2147483648
    %v1508 = vmul.f32 %v1507, 1.442695
    %v1509 = vpow.pop %v1508
    %v1510 = vadd.f32 %v1509, 1.0
    %v1511 = vrcp.pop %v1510
    %v1512 = vmul.f32 1.0, %v1511
    %v1513 = vtanh.pop %v1506
    %v1515 = vrot.slane %v1415, 2
    %v1517 = vmul.f32 %v1512, %v1515
    %1519 = vrot.lane.b32.xlu0 %v1513, 64
    %v1520 = vpop.permute.xlu0 %1519
    %v1522 = vmul.f32 %v1512, %v1520
    %1524 = vrot.lane.b32.xlu0 %v1522, 32
    %v1525 = vpop.permute.xlu0 %1524
    %v1527 = vadd.f32 %v1517, %v1525
    %v1528 = vtanh.pop %v1527
    %1530 = vrot.lane.b32.xlu0 %v1528, 64
    %v1531 = vpop.permute.xlu0 %1530
    %v1533 = vmul.f32 %v1512, %v1531
    %1535 = vrot.lane.b32.xlu0 %v1533, 64
    %v1536 = vpop.permute.xlu0 %1535
    %vm1538 = vcmask 519426
    %1539 = vst.msk [vmem:[#allocation3 + $0x8] sm:$0xc] %vm1538, %v1536
    %v1540 = vrot.slane %v1533, 2
    %1541 = vrot.lane.b32.xlu0 %v1540, 32
    %v1542 = vpop.permute.xlu0 %1541
    %v1543 = vsel %vm245, %v1542, 0
    %1545 = vmatprep.subr.mxu0 0.0
    %1546 = vmatpush1.msra.mxu0 %v1208
    %1547 = vmatprep.subr.mxu0 0.0
    %1548 = vmatpush1.msra.mxu0 %v1209
    %1549 = vmatprep.subr.mxu0 0.0
    %1550 = vmatpush1.msra.mxu0 %v1210
    %1551 = vmatprep.subr.mxu0 0.0
    %1552 = vmatpush1.msra.mxu0 %v1211
    %1553 = vmatprep.subr.mxu0 0.0
    %1554 = vmatpush1.msra.mxu0 0.0
    %1555 = vmatprep.subr.mxu0 0.0
    %1556 = vmatpush1.msra.mxu0 0.0
    %1557 = vmatprep.subr.mxu0 0.0
    %1558 = vmatpush1.msra.mxu0 0.0
    %1559 = vmatprep.subr.mxu0 0.0
    %1560 = vmatpush1.msra.mxu0 0.0
    %1561 = vmatprep.subr.mxu0 0.0
    %1562 = vmatpush1.msra.mxu0 0.0
    %1563 = vmatprep.subr.mxu0 0.0
    %1564 = vmatpush1.msra.mxu0 0.0
    %1565 = vmatprep.subr.mxu0 0.0
    %1566 = vmatpush1.msra.mxu0 0.0
    %1567 = vmatprep.subr.mxu0 0.0
    %1568 = vmatpush1.msra.mxu0 0.0
    %1569 = vmatprep.subr.mxu0 0.0
    %1570 = vmatpush1.msra.mxu0 0.0
    %1571 = vmatprep.subr.mxu0 0.0
    %1572 = vmatpush1.msra.mxu0 0.0
    %1573 = vmatprep.subr.mxu0 0.0
    %1574 = vmatpush1.msra.mxu0 0.0
    %1575 = vmatprep.subr.mxu0 0.0
    %1576 = vmatpush1.msra.mxu0 0.0
    %1577 = vmatprep.subr.mxu0 0.0
    %1578 = vmatpush1.msra.mxu0 0.0
    %1579 = vmatprep.subr.mxu0 0.0
    %1580 = vmatpush1.msra.mxu0 0.0
    %1581 = vmatprep.subr.mxu0 0.0
    %1582 = vmatpush1.msra.mxu0 0.0
    %1583 = vmatprep.subr.mxu0 0.0
    %1584 = vmatpush1.msra.mxu0 0.0
    %1585 = vmatprep.subr.mxu0 0.0
    %1586 = vmatpush1.msra.mxu0 0.0
    %1587 = vmatprep.subr.mxu0 0.0
    %1588 = vmatpush1.msra.mxu0 0.0
    %1589 = vmatprep.subr.mxu0 0.0
    %1590 = vmatpush1.msra.mxu0 0.0
    %1591 = vmatprep.subr.mxu0 0.0
    %1592 = vmatpush1.msra.mxu0 0.0
    %1593 = vmatprep.subr.mxu0 0.0
    %1594 = vmatpush1.msra.mxu0 0.0
    %1595 = vmatprep.subr.mxu0 0.0
    %1596 = vmatpush1.msra.mxu0 0.0
    %1597 = vmatprep.subr.mxu0 0.0
    %1598 = vmatpush1.msra.mxu0 0.0
    %1599 = vmatprep.subr.mxu0 0.0
    %1600 = vmatpush1.msra.mxu0 0.0
    %1601 = vmatprep.subr.mxu0 0.0
    %1602 = vmatpush1.msra.mxu0 0.0
    %1603 = vmatprep.subr.mxu0 0.0
    %1604 = vmatpush1.msra.mxu0 0.0
    %1605 = vmatprep.subr.mxu0 0.0
    %1606 = vmatpush1.msra.mxu0 0.0
    %1607 = vmatprep.subr.mxu0 0.0
    %1608 = vmatpush1.msra.mxu0 0.0
    %1609 = vmatprep.mubr.f32.mxu0 0.0
    %1610 = vmatmul.mubr.f32.gmra.mrb[0].mxu0 %v1543
    %v1611 = vpop.f32.mrb[0].mxu0
    %v1612 = vadd.f32 0.0, %v1611
    %v1613 = vpop.f32.mrb[0].mxu0
    %1614 = vdwg.mxu0
    %v1615 = vadd.f32 %v1204, %v1612
    %v1616 = vxor.u32 %v1615, 2147483648
    %v1617 = vmul.f32 %v1616, 1.442695
    %v1618 = vpow.pop %v1617
    %v1619 = vadd.f32 %v1618, 1.0
    %v1620 = vrcp.pop %v1619
    %v1621 = vmul.f32 1.0, %v1620
    %v1622 = vtanh.pop %v1615
    %v1624 = vrot.slane %v1527, 2
    %v1626 = vmul.f32 %v1621, %v1624
    %1628 = vrot.lane.b32.xlu0 %v1622, 64
    %v1629 = vpop.permute.xlu0 %1628
    %v1631 = vmul.f32 %v1621, %v1629
    %1633 = vrot.lane.b32.xlu0 %v1631, 32
    %v1634 = vpop.permute.xlu0 %1633
    %v1636 = vadd.f32 %v1626, %v1634
    %v1637 = vtanh.pop %v1636
    %1639 = vrot.lane.b32.xlu0 %v1637, 64
    %v1640 = vpop.permute.xlu0 %1639
    %v1642 = vmul.f32 %v1621, %v1640
    %1644 = vrot.lane.b32.xlu0 %v1642, 64
    %v1645 = vpop.permute.xlu0 %1644
    %vm1647 = vcmask 517376
    %1648 = vst.msk [vmem:[#allocation3 + $0x8] sm:$0x3] %vm1647, %v1645
    %1649 = vrot.lane.b32.xlu0 %v1642, 32
    %v1650 = vpop.permute.xlu0 %1649
    %v1651 = vsel %vm245, %v1650, 0
    %1653 = vmatprep.subr.mxu0 0.0
    %1654 = vmatpush1.msra.mxu0 %v1208
    %1655 = vmatprep.subr.mxu0 0.0
    %1656 = vmatpush1.msra.mxu0 %v1209
    %1657 = vmatprep.subr.mxu0 0.0
    %1658 = vmatpush1.msra.mxu0 %v1210
    %1659 = vmatprep.subr.mxu0 0.0
    %1660 = vmatpush1.msra.mxu0 %v1211
    %1661 = vmatprep.subr.mxu0 0.0
    %1662 = vmatpush1.msra.mxu0 0.0
    %1663 = vmatprep.subr.mxu0 0.0
    %1664 = vmatpush1.msra.mxu0 0.0
    %1665 = vmatprep.subr.mxu0 0.0
    %1666 = vmatpush1.msra.mxu0 0.0
    %1667 = vmatprep.subr.mxu0 0.0
    %1668 = vmatpush1.msra.mxu0 0.0
    %1669 = vmatprep.subr.mxu0 0.0
    %1670 = vmatpush1.msra.mxu0 0.0
    %1671 = vmatprep.subr.mxu0 0.0
    %1672 = vmatpush1.msra.mxu0 0.0
    %1673 = vmatprep.subr.mxu0 0.0
    %1674 = vmatpush1.msra.mxu0 0.0
    %1675 = vmatprep.subr.mxu0 0.0
    %1676 = vmatpush1.msra.mxu0 0.0
    %1677 = vmatprep.subr.mxu0 0.0
    %1678 = vmatpush1.msra.mxu0 0.0
    %1679 = vmatprep.subr.mxu0 0.0
    %1680 = vmatpush1.msra.mxu0 0.0
    %1681 = vmatprep.subr.mxu0 0.0
    %1682 = vmatpush1.msra.mxu0 0.0
    %1683 = vmatprep.subr.mxu0 0.0
    %1684 = vmatpush1.msra.mxu0 0.0
    %1685 = vmatprep.subr.mxu0 0.0
    %1686 = vmatpush1.msra.mxu0 0.0
    %1687 = vmatprep.subr.mxu0 0.0
    %1688 = vmatpush1.msra.mxu0 0.0
    %1689 = vmatprep.subr.mxu0 0.0
    %1690 = vmatpush1.msra.mxu0 0.0
    %1691 = vmatprep.subr.mxu0 0.0
    %1692 = vmatpush1.msra.mxu0 0.0
    %1693 = vmatprep.subr.mxu0 0.0
    %1694 = vmatpush1.msra.mxu0 0.0
    %1695 = vmatprep.subr.mxu0 0.0
    %1696 = vmatpush1.msra.mxu0 0.0
    %1697 = vmatprep.subr.mxu0 0.0
    %1698 = vmatpush1.msra.mxu0 0.0
    %1699 = vmatprep.subr.mxu0 0.0
    %1700 = vmatpush1.msra.mxu0 0.0
    %1701 = vmatprep.subr.mxu0 0.0
    %1702 = vmatpush1.msra.mxu0 0.0
    %1703 = vmatprep.subr.mxu0 0.0
    %1704 = vmatpush1.msra.mxu0 0.0
    %1705 = vmatprep.subr.mxu0 0.0
    %1706 = vmatpush1.msra.mxu0 0.0
    %1707 = vmatprep.subr.mxu0 0.0
    %1708 = vmatpush1.msra.mxu0 0.0
    %1709 = vmatprep.subr.mxu0 0.0
    %1710 = vmatpush1.msra.mxu0 0.0
    %1711 = vmatprep.subr.mxu0 0.0
    %1712 = vmatpush1.msra.mxu0 0.0
    %1713 = vmatprep.subr.mxu0 0.0
    %1714 = vmatpush1.msra.mxu0 0.0
    %1715 = vmatprep.subr.mxu0 0.0
    %1716 = vmatpush1.msra.mxu0 0.0
    %1717 = vmatprep.mubr.f32.mxu0 0.0
    %1718 = vmatmul.mubr.f32.gmra.mrb[0].mxu0 %v1651
    %v1719 = vpop.f32.mrb[0].mxu0
    %v1720 = vadd.f32 0.0, %v1719
    %v1721 = vpop.f32.mrb[0].mxu0
    %1722 = vdwg.mxu0
    %v1724 = vrot.slane %v1720, 2
    %v1726 = vadd.f32 %v1199, %v1724
    %v1727 = vxor.u32 %v1726, 2147483648
    %v1728 = vmul.f32 %v1727, 1.442695
    %v1729 = vpow.pop %v1728
    %v1730 = vadd.f32 %v1729, 1.0
    %v1731 = vrcp.pop %v1730
    %v1732 = vmul.f32 1.0, %v1731
    %v1733 = vtanh.pop %v1726
    %v1735 = vrot.slane %v1636, 2
    %v1737 = vmul.f32 %v1732, %v1735
    %1739 = vrot.lane.b32.xlu0 %v1733, 64
    %v1740 = vpop.permute.xlu0 %1739
    %v1742 = vmul.f32 %v1732, %v1740
    %1744 = vrot.lane.b32.xlu0 %v1742, 32
    %v1745 = vpop.permute.xlu0 %1744
    %v1747 = vadd.f32 %v1737, %v1745
    %v1748 = vtanh.pop %v1747
    %1750 = vrot.lane.b32.xlu0 %v1748, 64
    %v1751 = vpop.permute.xlu0 %1750
    %v1753 = vmul.f32 %v1732, %v1751
    %1755 = vrot.lane.b32.xlu0 %v1753, 64
    %v1756 = vpop.permute.xlu0 %1755
    %1758 = vst.msk [vmem:[#allocation3] sm:$0xc0] %vm1314, %v1756
    %v1759 = vrot.slane %v1753, 6
    %1760 = vrot.lane.b32.xlu0 %v1759, 32
    %v1761 = vpop.permute.xlu0 %1760
    %v1762 = vsel %vm245, %v1761, 0
    %1764 = vmatprep.subr.mxu0 0.0
    %1765 = vmatpush1.msra.mxu0 %v1208
    %1766 = vmatprep.subr.mxu0 0.0
    %1767 = vmatpush1.msra.mxu0 %v1209
    %1768 = vmatprep.subr.mxu0 0.0
    %1769 = vmatpush1.msra.mxu0 %v1210
    %1770 = vmatprep.subr.mxu0 0.0
    %1771 = vmatpush1.msra.mxu0 %v1211
    %1772 = vmatprep.subr.mxu0 0.0
    %1773 = vmatpush1.msra.mxu0 0.0
    %1774 = vmatprep.subr.mxu0 0.0
    %1775 = vmatpush1.msra.mxu0 0.0
    %1776 = vmatprep.subr.mxu0 0.0
    %1777 = vmatpush1.msra.mxu0 0.0
    %1778 = vmatprep.subr.mxu0 0.0
    %1779 = vmatpush1.msra.mxu0 0.0
    %1780 = vmatprep.subr.mxu0 0.0
    %1781 = vmatpush1.msra.mxu0 0.0
    %1782 = vmatprep.subr.mxu0 0.0
    %1783 = vmatpush1.msra.mxu0 0.0
    %1784 = vmatprep.subr.mxu0 0.0
    %1785 = vmatpush1.msra.mxu0 0.0
    %1786 = vmatprep.subr.mxu0 0.0
    %1787 = vmatpush1.msra.mxu0 0.0
    %1788 = vmatprep.subr.mxu0 0.0
    %1789 = vmatpush1.msra.mxu0 0.0
    %1790 = vmatprep.subr.mxu0 0.0
    %1791 = vmatpush1.msra.mxu0 0.0
    %1792 = vmatprep.subr.mxu0 0.0
    %1793 = vmatpush1.msra.mxu0 0.0
    %1794 = vmatprep.subr.mxu0 0.0
    %1795 = vmatpush1.msra.mxu0 0.0
    %1796 = vmatprep.subr.mxu0 0.0
    %1797 = vmatpush1.msra.mxu0 0.0
    %1798 = vmatprep.subr.mxu0 0.0
    %1799 = vmatpush1.msra.mxu0 0.0
    %1800 = vmatprep.subr.mxu0 0.0
    %1801 = vmatpush1.msra.mxu0 0.0
    %1802 = vmatprep.subr.mxu0 0.0
    %1803 = vmatpush1.msra.mxu0 0.0
    %1804 = vmatprep.subr.mxu0 0.0
    %1805 = vmatpush1.msra.mxu0 0.0
    %1806 = vmatprep.subr.mxu0 0.0
    %1807 = vmatpush1.msra.mxu0 0.0
    %1808 = vmatprep.subr.mxu0 0.0
    %1809 = vmatpush1.msra.mxu0 0.0
    %1810 = vmatprep.subr.mxu0 0.0
    %1811 = vmatpush1.msra.mxu0 0.0
    %1812 = vmatprep.subr.mxu0 0.0
    %1813 = vmatpush1.msra.mxu0 0.0
    %1814 = vmatprep.subr.mxu0 0.0
    %1815 = vmatpush1.msra.mxu0 0.0
    %1816 = vmatprep.subr.mxu0 0.0
    %1817 = vmatpush1.msra.mxu0 0.0
    %1818 = vmatprep.subr.mxu0 0.0
    %1819 = vmatpush1.msra.mxu0 0.0
    %1820 = vmatprep.subr.mxu0 0.0
    %1821 = vmatpush1.msra.mxu0 0.0
    %1822 = vmatprep.subr.mxu0 0.0
    %1823 = vmatpush1.msra.mxu0 0.0
    %1824 = vmatprep.subr.mxu0 0.0
    %1825 = vmatpush1.msra.mxu0 0.0
    %1826 = vmatprep.subr.mxu0 0.0
    %1827 = vmatpush1.msra.mxu0 0.0
    %1828 = vmatprep.mubr.f32.mxu0 0.0
    %1829 = vmatmul.mubr.f32.gmra.mrb[0].mxu0 %v1762
    %v1830 = vpop.f32.mrb[0].mxu0
    %v1831 = vadd.f32 0.0, %v1830
    %v1832 = vpop.f32.mrb[0].mxu0
    %1833 = vdwg.mxu0
    %v1835 = vrot.slane %v1831, 4
    %v1837 = vadd.f32 %v1199, %v1835
    %v1838 = vxor.u32 %v1837, 2147483648
    %v1839 = vmul.f32 %v1838, 1.442695
    %v1840 = vpow.pop %v1839
    %v1841 = vadd.f32 %v1840, 1.0
    %v1842 = vrcp.pop %v1841
    %v1843 = vmul.f32 1.0, %v1842
    %v1844 = vtanh.pop %v1837
    %v1846 = vrot.slane %v1747, 2
    %v1848 = vmul.f32 %v1843, %v1846
    %1850 = vrot.lane.b32.xlu0 %v1844, 64
    %v1851 = vpop.permute.xlu0 %1850
    %v1853 = vmul.f32 %v1843, %v1851
    %1855 = vrot.lane.b32.xlu0 %v1853, 32
    %v1856 = vpop.permute.xlu0 %1855
    %v1858 = vadd.f32 %v1848, %v1856
    %v1859 = vtanh.pop %v1858
    %1861 = vrot.lane.b32.xlu0 %v1859, 64
    %v1862 = vpop.permute.xlu0 %1861
    %v1864 = vmul.f32 %v1843, %v1862
    %1866 = vrot.lane.b32.xlu0 %v1864, 64
    %v1867 = vpop.permute.xlu0 %1866
    %1869 = vst.msk [vmem:[#allocation3] sm:$0x30] %vm1426, %v1867
    %v1870 = vrot.slane %v1864, 4
    %1871 = vrot.lane.b32.xlu0 %v1870, 32
    %v1872 = vpop.permute.xlu0 %1871
    %v1873 = vsel %vm245, %v1872, 0
    %1875 = vmatprep.subr.mxu0 0.0
    %1876 = vmatpush1.msra.mxu0 %v1208
    %1877 = vmatprep.subr.mxu0 0.0
    %1878 = vmatpush1.msra.mxu0 %v1209
    %1879 = vmatprep.subr.mxu0 0.0
    %1880 = vmatpush1.msra.mxu0 %v1210
    %1881 = vmatprep.subr.mxu0 0.0
    %1882 = vmatpush1.msra.mxu0 %v1211
    %1883 = vmatprep.subr.mxu0 0.0
    %1884 = vmatpush1.msra.mxu0 0.0
    %1885 = vmatprep.subr.mxu0 0.0
    %1886 = vmatpush1.msra.mxu0 0.0
    %1887 = vmatprep.subr.mxu0 0.0
    %1888 = vmatpush1.msra.mxu0 0.0
    %1889 = vmatprep.subr.mxu0 0.0
    %1890 = vmatpush1.msra.mxu0 0.0
    %1891 = vmatprep.subr.mxu0 0.0
    %1892 = vmatpush1.msra.mxu0 0.0
    %1893 = vmatprep.subr.mxu0 0.0
    %1894 = vmatpush1.msra.mxu0 0.0
    %1895 = vmatprep.subr.mxu0 0.0
    %1896 = vmatpush1.msra.mxu0 0.0
    %1897 = vmatprep.subr.mxu0 0.0
    %1898 = vmatpush1.msra.mxu0 0.0
    %1899 = vmatprep.subr.mxu0 0.0
    %1900 = vmatpush1.msra.mxu0 0.0
    %1901 = vmatprep.subr.mxu0 0.0
    %1902 = vmatpush1.msra.mxu0 0.0
    %1903 = vmatprep.subr.mxu0 0.0
    %1904 = vmatpush1.msra.mxu0 0.0
    %1905 = vmatprep.subr.mxu0 0.0
    %1906 = vmatpush1.msra.mxu0 0.0
    %1907 = vmatprep.subr.mxu0 0.0
    %1908 = vmatpush1.msra.mxu0 0.0
    %1909 = vmatprep.subr.mxu0 0.0
    %1910 = vmatpush1.msra.mxu0 0.0
    %1911 = vmatprep.subr.mxu0 0.0
    %1912 = vmatpush1.msra.mxu0 0.0
    %1913 = vmatprep.subr.mxu0 0.0
    %1914 = vmatpush1.msra.mxu0 0.0
    %1915 = vmatprep.subr.mxu0 0.0
    %1916 = vmatpush1.msra.mxu0 0.0
    %1917 = vmatprep.subr.mxu0 0.0
    %1918 = vmatpush1.msra.mxu0 0.0
    %1919 = vmatprep.subr.mxu0 0.0
    %1920 = vmatpush1.msra.mxu0 0.0
    %1921 = vmatprep.subr.mxu0 0.0
    %1922 = vmatpush1.msra.mxu0 0.0
    %1923 = vmatprep.subr.mxu0 0.0
    %1924 = vmatpush1.msra.mxu0 0.0
    %1925 = vmatprep.subr.mxu0 0.0
    %1926 = vmatpush1.msra.mxu0 0.0
    %1927 = vmatprep.subr.mxu0 0.0
    %1928 = vmatpush1.msra.mxu0 0.0
    %1929 = vmatprep.subr.mxu0 0.0
    %1930 = vmatpush1.msra.mxu0 0.0
    %1931 = vmatprep.subr.mxu0 0.0
    %1932 = vmatpush1.msra.mxu0 0.0
    %1933 = vmatprep.subr.mxu0 0.0
    %1934 = vmatpush1.msra.mxu0 0.0
    %1935 = vmatprep.subr.mxu0 0.0
    %1936 = vmatpush1.msra.mxu0 0.0
    %1937 = vmatprep.subr.mxu0 0.0
    %1938 = vmatpush1.msra.mxu0 0.0
    %1939 = vmatprep.mubr.f32.mxu0 0.0
    %1940 = vmatmul.mubr.f32.gmra.mrb[0].mxu0 %v1873
    %v1941 = vpop.f32.mrb[0].mxu0
    %v1942 = vadd.f32 0.0, %v1941
    %v1943 = vpop.f32.mrb[0].mxu0
    %1944 = vdwg.mxu0
    %v1946 = vrot.slane %v1942, 6
    %v1948 = vadd.f32 %v1199, %v1946
    %v1949 = vxor.u32 %v1948, 2147483648
    %v1950 = vmul.f32 %v1949, 1.442695
    %v1951 = vpow.pop %v1950
    %v1952 = vadd.f32 %v1951, 1.0
    %v1953 = vrcp.pop %v1952
    %v1954 = vmul.f32 1.0, %v1953
    %v1955 = vtanh.pop %v1948
    %v1957 = vrot.slane %v1858, 2
    %v1959 = vmul.f32 %v1954, %v1957
    %1961 = vrot.lane.b32.xlu0 %v1955, 64
    %v1962 = vpop.permute.xlu0 %1961
    %v1964 = vmul.f32 %v1954, %v1962
    %1966 = vrot.lane.b32.xlu0 %v1964, 32
    %v1967 = vpop.permute.xlu0 %1966
    %v1969 = vadd.f32 %v1959, %v1967
    %v1970 = vtanh.pop %v1969
    %1972 = vrot.lane.b32.xlu0 %v1970, 64
    %v1973 = vpop.permute.xlu0 %1972
    %v1975 = vmul.f32 %v1954, %v1973
    %1977 = vrot.lane.b32.xlu0 %v1975, 64
    %v1978 = vpop.permute.xlu0 %1977
    %1980 = vst.msk [vmem:[#allocation3] sm:$0xc] %vm1538, %v1978
    %v1981 = vrot.slane %v1975, 2
    %1982 = vrot.lane.b32.xlu0 %v1981, 32
    %v1983 = vpop.permute.xlu0 %1982
    %v1984 = vsel %vm245, %v1983, 0
    %1986 = vmatprep.subr.mxu0 0.0
    %1987 = vmatpush1.msra.mxu0 %v1208
    %1988 = vmatprep.subr.mxu0 0.0
    %1989 = vmatpush1.msra.mxu0 %v1209
    %1990 = vmatprep.subr.mxu0 0.0
    %1991 = vmatpush1.msra.mxu0 %v1210
    %1992 = vmatprep.subr.mxu0 0.0
    %1993 = vmatpush1.msra.mxu0 %v1211
    %1994 = vmatprep.subr.mxu0 0.0
    %1995 = vmatpush1.msra.mxu0 0.0
    %1996 = vmatprep.subr.mxu0 0.0
    %1997 = vmatpush1.msra.mxu0 0.0
    %1998 = vmatprep.subr.mxu0 0.0
    %1999 = vmatpush1.msra.mxu0 0.0
    %2000 = vmatprep.subr.mxu0 0.0
    %2001 = vmatpush1.msra.mxu0 0.0
    %2002 = vmatprep.subr.mxu0 0.0
    %2003 = vmatpush1.msra.mxu0 0.0
    %2004 = vmatprep.subr.mxu0 0.0
    %2005 = vmatpush1.msra.mxu0 0.0
    %2006 = vmatprep.subr.mxu0 0.0
    %2007 = vmatpush1.msra.mxu0 0.0
    %2008 = vmatprep.subr.mxu0 0.0
    %2009 = vmatpush1.msra.mxu0 0.0
    %2010 = vmatprep.subr.mxu0 0.0
    %2011 = vmatpush1.msra.mxu0 0.0
    %2012 = vmatprep.subr.mxu0 0.0
    %2013 = vmatpush1.msra.mxu0 0.0
    %2014 = vmatprep.subr.mxu0 0.0
    %2015 = vmatpush1.msra.mxu0 0.0
    %2016 = vmatprep.subr.mxu0 0.0
    %2017 = vmatpush1.msra.mxu0 0.0
    %2018 = vmatprep.subr.mxu0 0.0
    %2019 = vmatpush1.msra.mxu0 0.0
    %2020 = vmatprep.subr.mxu0 0.0
    %2021 = vmatpush1.msra.mxu0 0.0
    %2022 = vmatprep.subr.mxu0 0.0
    %2023 = vmatpush1.msra.mxu0 0.0
    %2024 = vmatprep.subr.mxu0 0.0
    %2025 = vmatpush1.msra.mxu0 0.0
    %2026 = vmatprep.subr.mxu0 0.0
    %2027 = vmatpush1.msra.mxu0 0.0
    %2028 = vmatprep.subr.mxu0 0.0
    %2029 = vmatpush1.msra.mxu0 0.0
    %2030 = vmatprep.subr.mxu0 0.0
    %2031 = vmatpush1.msra.mxu0 0.0
    %2032 = vmatprep.subr.mxu0 0.0
    %2033 = vmatpush1.msra.mxu0 0.0
    %2034 = vmatprep.subr.mxu0 0.0
    %2035 = vmatpush1.msra.mxu0 0.0
    %2036 = vmatprep.subr.mxu0 0.0
    %2037 = vmatpush1.msra.mxu0 0.0
    %2038 = vmatprep.subr.mxu0 0.0
    %2039 = vmatpush1.msra.mxu0 0.0
    %2040 = vmatprep.subr.mxu0 0.0
    %2041 = vmatpush1.msra.mxu0 0.0
    %2042 = vmatprep.subr.mxu0 0.0
    %2043 = vmatpush1.msra.mxu0 0.0
    %2044 = vmatprep.subr.mxu0 0.0
    %2045 = vmatpush1.msra.mxu0 0.0
    %2046 = vmatprep.subr.mxu0 0.0
    %2047 = vmatpush1.msra.mxu0 0.0
    %2048 = vmatprep.subr.mxu0 0.0
    %2049 = vmatpush1.msra.mxu0 0.0
    %2050 = vmatprep.mubr.f32.mxu0 0.0
    %2051 = vmatmul.mubr.f32.gmra.mrb[0].mxu0 %v1984
    %v2052 = vpop.f32.mrb[0].mxu0
    %v2053 = vadd.f32 0.0, %v2052
    %v2054 = vpop.f32.mrb[0].mxu0
    %2055 = vdwg.mxu0
    %v2056 = vadd.f32 %v1199, %v2053
    %v2057 = vxor.u32 %v2056, 2147483648
    %v2058 = vmul.f32 %v2057, 1.442695
    %v2059 = vpow.pop %v2058
    %v2060 = vadd.f32 %v2059, 1.0
    %v2061 = vrcp.pop %v2060
    %v2062 = vmul.f32 1.0, %v2061
    %v2063 = vtanh.pop %v2056
    %v2065 = vrot.slane %v1969, 2
    %v2067 = vmul.f32 %v2062, %v2065
    %2069 = vrot.lane.b32.xlu0 %v2063, 64
    %v2070 = vpop.permute.xlu0 %2069
    %v2072 = vmul.f32 %v2062, %v2070
    %2074 = vrot.lane.b32.xlu0 %v2072, 32
    %v2075 = vpop.permute.xlu0 %2074
    %v2077 = vadd.f32 %v2067, %v2075
    %v2078 = vtanh.pop %v2077
    %2080 = vrot.lane.b32.xlu0 %v2078, 64
    %v2081 = vpop.permute.xlu0 %2080
    %v2083 = vmul.f32 %v2062, %v2081
    %2085 = vrot.lane.b32.xlu0 %v2083, 64
    %v2086 = vpop.permute.xlu0 %2085
    %2088 = vst.msk [vmem:[#allocation3] sm:$0x3] %vm1647, %v2086
    %v2089 = vld [vmem:[#allocation3] sm:$0xff]
    %v2090 = vld [vmem:[#allocation3 + $0x8] sm:$0xff]
    %v2091 = vld [vmem:[%s5] sm:$0xff]
    %v2092 = vld [vmem:[%s5 + $0x8] sm:$0xff]
    %v2093 = vld [vmem:[%s5 + $0x10] sm:$0xff]
    %v2094 = vld [vmem:[%s5 + $0x18] sm:$0xff]
    %v2095 = vld [vmem:[%s5 + $0x20] sm:$0xff]
    %v2096 = vld [vmem:[%s5 + $0x28] sm:$0xff]
    %v2097 = vld [vmem:[%s5 + $0x30] sm:$0xff]
    %v2098 = vld [vmem:[%s5 + $0x38] sm:$0xff]
    %v2099 = vld [vmem:[%s7] sm:$0x1]
    %v2101 = vlaneseq
    %v2102 = vshrl.u32 %v2101, 7
    %v2103 = vsub.s32 0, %v2102
    %v2104 = vrot.slane %v2099, %v2103
    %vm2106 = vcmask 523264
    %v2108 = vsel %vm2106, %v2089, 0
    %v2111 = vsel %vm2106, %v2090, 0
    %2113 = vmatprep.subr.mxu0 0.0
    %2114 = vmatpush1.msra.mxu0 %v2091
    %2115 = vmatprep.subr.mxu0 0.0
    %2116 = vmatpush1.msra.mxu0 %v2092
    %2117 = vmatprep.subr.mxu0 0.0
    %2118 = vmatpush1.msra.mxu0 %v2093
    %2119 = vmatprep.subr.mxu0 0.0
    %2120 = vmatpush1.msra.mxu0 %v2094
    %2121 = vmatprep.subr.mxu0 0.0
    %2122 = vmatpush1.msra.mxu0 %v2095
    %2123 = vmatprep.subr.mxu0 0.0
    %2124 = vmatpush1.msra.mxu0 %v2096
    %2125 = vmatprep.subr.mxu0 0.0
    %2126 = vmatpush1.msra.mxu0 %v2097
    %2127 = vmatprep.subr.mxu0 0.0
    %2128 = vmatpush1.msra.mxu0 %v2098
    %2129 = vmatprep.subr.mxu0 0.0
    %2130 = vmatpush1.msra.mxu0 0.0
    %2131 = vmatprep.subr.mxu0 0.0
    %2132 = vmatpush1.msra.mxu0 0.0
    %2133 = vmatprep.subr.mxu0 0.0
    %2134 = vmatpush1.msra.mxu0 0.0
    %2135 = vmatprep.subr.mxu0 0.0
    %2136 = vmatpush1.msra.mxu0 0.0
    %2137 = vmatprep.subr.mxu0 0.0
    %2138 = vmatpush1.msra.mxu0 0.0
    %2139 = vmatprep.subr.mxu0 0.0
    %2140 = vmatpush1.msra.mxu0 0.0
    %2141 = vmatprep.subr.mxu0 0.0
    %2142 = vmatpush1.msra.mxu0 0.0
    %2143 = vmatprep.subr.mxu0 0.0
    %2144 = vmatpush1.msra.mxu0 0.0
    %2145 = vmatprep.subr.mxu0 0.0
    %2146 = vmatpush1.msra.mxu0 0.0
    %2147 = vmatprep.subr.mxu0 0.0
    %2148 = vmatpush1.msra.mxu0 0.0
    %2149 = vmatprep.subr.mxu0 0.0
    %2150 = vmatpush1.msra.mxu0 0.0
    %2151 = vmatprep.subr.mxu0 0.0
    %2152 = vmatpush1.msra.mxu0 0.0
    %2153 = vmatprep.subr.mxu0 0.0
    %2154 = vmatpush1.msra.mxu0 0.0
    %2155 = vmatprep.subr.mxu0 0.0
    %2156 = vmatpush1.msra.mxu0 0.0
    %2157 = vmatprep.subr.mxu0 0.0
    %2158 = vmatpush1.msra.mxu0 0.0
    %2159 = vmatprep.subr.mxu0 0.0
    %2160 = vmatpush1.msra.mxu0 0.0
    %2161 = vmatprep.subr.mxu0 0.0
    %2162 = vmatpush1.msra.mxu0 0.0
    %2163 = vmatprep.subr.mxu0 0.0
    %2164 = vmatpush1.msra.mxu0 0.0
    %2165 = vmatprep.subr.mxu0 0.0
    %2166 = vmatpush1.msra.mxu0 0.0
    %2167 = vmatprep.subr.mxu0 0.0
    %2168 = vmatpush1.msra.mxu0 0.0
    %2169 = vmatprep.subr.mxu0 0.0
    %2170 = vmatpush1.msra.mxu0 0.0
    %2171 = vmatprep.subr.mxu0 0.0
    %2172 = vmatpush1.msra.mxu0 0.0
    %2173 = vmatprep.subr.mxu0 0.0
    %2174 = vmatpush1.msra.mxu0 0.0
    %2175 = vmatprep.subr.mxu0 0.0
    %2176 = vmatpush1.msra.mxu0 0.0
    %2177 = vmatprep.mubr.f32.mxu0 0.0
    %2178 = vmatmul.mubr.f32.gmra.mrb[0].mxu0 %v2108
    %v2179 = vpop.f32.mrb[0].mxu0
    %v2180 = vadd.f32 %v2104, %v2179
    %v2181 = vpop.f32.mrb[0].mxu0
    %2182 = vmatprep.mubr.f32.mxu0 0.0
    %2183 = vmatmul.mubr.f32.gmra.mrb[0].mxu0 %v2111
    %v2184 = vpop.f32.mrb[0].mxu0
    %v2185 = vadd.f32 %v2104, %v2184
    %v2186 = vpop.f32.mrb[0].mxu0
    %2187 = vdwg.mxu0
    %v2188 = vld [vmem:[%s6] sm:$0xff]
    %v2189 = vld [vmem:[%s6 + $0x8] sm:$0xff]
    %v2190 = vld [vmem:[%s6 + $0x10] sm:$0xff]
    %v2191 = vld [vmem:[%s6 + $0x18] sm:$0xff]
    %2192 = vmatprep.subr.mxu0 0.0
    %2193 = vmatpush1.msra.mxu0 %v2188
    %2194 = vmatprep.subr.mxu0 0.0
    %2195 = vmatpush1.msra.mxu0 %v2189
    %2196 = vmatprep.subr.mxu0 0.0
    %2197 = vmatpush1.msra.mxu0 %v2190
    %2198 = vmatprep.subr.mxu0 0.0
    %2199 = vmatpush1.msra.mxu0 %v2191
    %2200 = vmatprep.subr.mxu0 0.0
    %2201 = vmatpush1.msra.mxu0 0.0
    %2202 = vmatprep.subr.mxu0 0.0
    %2203 = vmatpush1.msra.mxu0 0.0
    %2204 = vmatprep.subr.mxu0 0.0
    %2205 = vmatpush1.msra.mxu0 0.0
    %2206 = vmatprep.subr.mxu0 0.0
    %2207 = vmatpush1.msra.mxu0 0.0
    %2208 = vmatprep.subr.mxu0 0.0
    %2209 = vmatpush1.msra.mxu0 0.0
    %2210 = vmatprep.subr.mxu0 0.0
    %2211 = vmatpush1.msra.mxu0 0.0
    %2212 = vmatprep.subr.mxu0 0.0
    %2213 = vmatpush1.msra.mxu0 0.0
    %2214 = vmatprep.subr.mxu0 0.0
    %2215 = vmatpush1.msra.mxu0 0.0
    %2216 = vmatprep.subr.mxu0 0.0
    %2217 = vmatpush1.msra.mxu0 0.0
    %2218 = vmatprep.subr.mxu0 0.0
    %2219 = vmatpush1.msra.mxu0 0.0
    %2220 = vmatprep.subr.mxu0 0.0
    %2221 = vmatpush1.msra.mxu0 0.0
    %2222 = vmatprep.subr.mxu0 0.0
    %2223 = vmatpush1.msra.mxu0 0.0
    %2224 = vmatprep.subr.mxu0 0.0
    %2225 = vmatpush1.msra.mxu0 0.0
    %2226 = vmatprep.subr.mxu0 0.0
    %2227 = vmatpush1.msra.mxu0 0.0
    %2228 = vmatprep.subr.mxu0 0.0
    %2229 = vmatpush1.msra.mxu0 0.0
    %2230 = vmatprep.subr.mxu0 0.0
    %2231 = vmatpush1.msra.mxu0 0.0
    %2232 = vmatprep.subr.mxu0 0.0
    %2233 = vmatpush1.msra.mxu0 0.0
    %2234 = vmatprep.subr.mxu0 0.0
    %2235 = vmatpush1.msra.mxu0 0.0
    %2236 = vmatprep.subr.mxu0 0.0
    %2237 = vmatpush1.msra.mxu0 0.0
    %2238 = vmatprep.subr.mxu0 0.0
    %2239 = vmatpush1.msra.mxu0 0.0
    %2240 = vmatprep.subr.mxu0 0.0
    %2241 = vmatpush1.msra.mxu0 0.0
    %2242 = vmatprep.subr.mxu0 0.0
    %2243 = vmatpush1.msra.mxu0 0.0
    %2244 = vmatprep.subr.mxu0 0.0
    %2245 = vmatpush1.msra.mxu0 0.0
    %2246 = vmatprep.subr.mxu0 0.0
    %2247 = vmatpush1.msra.mxu0 0.0
    %2248 = vmatprep.subr.mxu0 0.0
    %2249 = vmatpush1.msra.mxu0 0.0
    %2250 = vmatprep.subr.mxu0 0.0
    %2251 = vmatpush1.msra.mxu0 0.0
    %2252 = vmatprep.subr.mxu0 0.0
    %2253 = vmatpush1.msra.mxu0 0.0
    %2254 = vmatprep.subr.mxu0 0.0
    %2255 = vmatpush1.msra.mxu0 0.0
    %2256 = vmatprep.mubr.f32.mxu0 0.0
    %2257 = vmatmul.mubr.f32.gmra.mrb[0].mxu0 %v247
    %v2258 = vpop.f32.mrb[0].mxu0
    %v2259 = vadd.f32 0.0, %v2258
    %v2260 = vpop.f32.mrb[0].mxu0
    %2261 = vdwg.mxu0
    %v2262 = vadd.f32 %v2180, %v2259
    %v2263 = vxor.u32 %v2262, 2147483648
    %v2264 = vmul.f32 %v2263, 1.442695
    %v2265 = vpow.pop %v2264
    %v2266 = vadd.f32 %v2265, 1.0
    %v2267 = vrcp.pop %v2266
    %v2268 = vmul.f32 1.0, %v2267
    %v2269 = vtanh.pop %v2262
    %v2270 = vmul.f32 %v2268, 0.0
    %2272 = vrot.lane.b32.xlu0 %v2269, 64
    %v2273 = vpop.permute.xlu0 %2272
    %v2275 = vmul.f32 %v2268, %v2273
    %2277 = vrot.lane.b32.xlu0 %v2275, 32
    %v2278 = vpop.permute.xlu0 %2277
    %v2280 = vadd.f32 %v2270, %v2278
    %v2281 = vtanh.pop %v2280
    %2283 = vrot.lane.b32.xlu0 %v2281, 64
    %v2284 = vpop.permute.xlu0 %2283
    %v2286 = vmul.f32 %v2268, %v2284
    %2288 = vrot.lane.b32.xlu0 %v2286, 32
    %v2289 = vpop.permute.xlu0 %2288
    %2291 = vst.msk [vmem:[#allocation4] sm:$0x3] %vm348, %v2289
    %v2292 = vsel %vm245, %v2289, 0
    %2294 = vmatprep.subr.mxu0 0.0
    %2295 = vmatpush1.msra.mxu0 %v2188
    %2296 = vmatprep.subr.mxu0 0.0
    %2297 = vmatpush1.msra.mxu0 %v2189
    %2298 = vmatprep.subr.mxu0 0.0
    %2299 = vmatpush1.msra.mxu0 %v2190
    %2300 = vmatprep.subr.mxu0 0.0
    %2301 = vmatpush1.msra.mxu0 %v2191
    %2302 = vmatprep.subr.mxu0 0.0
    %2303 = vmatpush1.msra.mxu0 0.0
    %2304 = vmatprep.subr.mxu0 0.0
    %2305 = vmatpush1.msra.mxu0 0.0
    %2306 = vmatprep.subr.mxu0 0.0
    %2307 = vmatpush1.msra.mxu0 0.0
    %2308 = vmatprep.subr.mxu0 0.0
    %2309 = vmatpush1.msra.mxu0 0.0
    %2310 = vmatprep.subr.mxu0 0.0
    %2311 = vmatpush1.msra.mxu0 0.0
    %2312 = vmatprep.subr.mxu0 0.0
    %2313 = vmatpush1.msra.mxu0 0.0
    %2314 = vmatprep.subr.mxu0 0.0
    %2315 = vmatpush1.msra.mxu0 0.0
    %2316 = vmatprep.subr.mxu0 0.0
    %2317 = vmatpush1.msra.mxu0 0.0
    %2318 = vmatprep.subr.mxu0 0.0
    %2319 = vmatpush1.msra.mxu0 0.0
    %2320 = vmatprep.subr.mxu0 0.0
    %2321 = vmatpush1.msra.mxu0 0.0
    %2322 = vmatprep.subr.mxu0 0.0
    %2323 = vmatpush1.msra.mxu0 0.0
    %2324 = vmatprep.subr.mxu0 0.0
    %2325 = vmatpush1.msra.mxu0 0.0
    %2326 = vmatprep.subr.mxu0 0.0
    %2327 = vmatpush1.msra.mxu0 0.0
    %2328 = vmatprep.subr.mxu0 0.0
    %2329 = vmatpush1.msra.mxu0 0.0
    %2330 = vmatprep.subr.mxu0 0.0
    %2331 = vmatpush1.msra.mxu0 0.0
    %2332 = vmatprep.subr.mxu0 0.0
    %2333 = vmatpush1.msra.mxu0 0.0
    %2334 = vmatprep.subr.mxu0 0.0
    %2335 = vmatpush1.msra.mxu0 0.0
    %2336 = vmatprep.subr.mxu0 0.0
    %2337 = vmatpush1.msra.mxu0 0.0
    %2338 = vmatprep.subr.mxu0 0.0
    %2339 = vmatpush1.msra.mxu0 0.0
    %2340 = vmatprep.subr.mxu0 0.0
    %2341 = vmatpush1.msra.mxu0 0.0
    %2342 = vmatprep.subr.mxu0 0.0
    %2343 = vmatpush1.msra.mxu0 0.0
    %2344 = vmatprep.subr.mxu0 0.0
    %2345 = vmatpush1.msra.mxu0 0.0
    %2346 = vmatprep.subr.mxu0 0.0
    %2347 = vmatpush1.msra.mxu0 0.0
    %2348 = vmatprep.subr.mxu0 0.0
    %2349 = vmatpush1.msra.mxu0 0.0
    %2350 = vmatprep.subr.mxu0 0.0
    %2351 = vmatpush1.msra.mxu0 0.0
    %2352 = vmatprep.subr.mxu0 0.0
    %2353 = vmatpush1.msra.mxu0 0.0
    %2354 = vmatprep.subr.mxu0 0.0
    %2355 = vmatpush1.msra.mxu0 0.0
    %2356 = vmatprep.subr.mxu0 0.0
    %2357 = vmatpush1.msra.mxu0 0.0
    %2358 = vmatprep.mubr.f32.mxu0 0.0
    %2359 = vmatmul.mubr.f32.gmra.mrb[0].mxu0 %v2292
    %v2360 = vpop.f32.mrb[0].mxu0
    %v2361 = vadd.f32 0.0, %v2360
    %v2362 = vpop.f32.mrb[0].mxu0
    %2363 = vdwg.mxu0
    %v2365 = vrot.slane %v2361, 6
    %v2367 = vadd.f32 %v2180, %v2365
    %v2368 = vxor.u32 %v2367, 2147483648
    %v2369 = vmul.f32 %v2368, 1.442695
    %v2370 = vpow.pop %v2369
    %v2371 = vadd.f32 %v2370, 1.0
    %v2372 = vrcp.pop %v2371
    %v2373 = vmul.f32 1.0, %v2372
    %v2374 = vtanh.pop %v2367
    %v2376 = vrot.slane %v2280, 6
    %v2378 = vmul.f32 %v2373, %v2376
    %2380 = vrot.lane.b32.xlu0 %v2374, 64
    %v2381 = vpop.permute.xlu0 %2380
    %v2383 = vmul.f32 %v2373, %v2381
    %2385 = vrot.lane.b32.xlu0 %v2383, 32
    %v2386 = vpop.permute.xlu0 %2385
    %v2388 = vadd.f32 %v2378, %v2386
    %v2389 = vtanh.pop %v2388
    %2391 = vrot.lane.b32.xlu0 %v2389, 64
    %v2392 = vpop.permute.xlu0 %2391
    %v2394 = vmul.f32 %v2373, %v2392
    %2396 = vrot.lane.b32.xlu0 %v2394, 32
    %v2397 = vpop.permute.xlu0 %2396
    %2399 = vst.msk [vmem:[#allocation4] sm:$0xc] %vm457, %v2397
    %v2400 = vrot.slane %v2394, 2
    %2401 = vrot.lane.b32.xlu0 %v2400, 32
    %v2402 = vpop.permute.xlu0 %2401
    %v2403 = vsel %vm245, %v2402, 0
    %2405 = vmatprep.subr.mxu0 0.0
    %2406 = vmatpush1.msra.mxu0 %v2188
    %2407 = vmatprep.subr.mxu0 0.0
    %2408 = vmatpush1.msra.mxu0 %v2189
    %2409 = vmatprep.subr.mxu0 0.0
    %2410 = vmatpush1.msra.mxu0 %v2190
    %2411 = vmatprep.subr.mxu0 0.0
    %2412 = vmatpush1.msra.mxu0 %v2191
    %2413 = vmatprep.subr.mxu0 0.0
    %2414 = vmatpush1.msra.mxu0 0.0
    %2415 = vmatprep.subr.mxu0 0.0
    %2416 = vmatpush1.msra.mxu0 0.0
    %2417 = vmatprep.subr.mxu0 0.0
    %2418 = vmatpush1.msra.mxu0 0.0
    %2419 = vmatprep.subr.mxu0 0.0
    %2420 = vmatpush1.msra.mxu0 0.0
    %2421 = vmatprep.subr.mxu0 0.0
    %2422 = vmatpush1.msra.mxu0 0.0
    %2423 = vmatprep.subr.mxu0 0.0
    %2424 = vmatpush1.msra.mxu0 0.0
    %2425 = vmatprep.subr.mxu0 0.0
    %2426 = vmatpush1.msra.mxu0 0.0
    %2427 = vmatprep.subr.mxu0 0.0
    %2428 = vmatpush1.msra.mxu0 0.0
    %2429 = vmatprep.subr.mxu0 0.0
    %2430 = vmatpush1.msra.mxu0 0.0
    %2431 = vmatprep.subr.mxu0 0.0
    %2432 = vmatpush1.msra.mxu0 0.0
    %2433 = vmatprep.subr.mxu0 0.0
    %2434 = vmatpush1.msra.mxu0 0.0
    %2435 = vmatprep.subr.mxu0 0.0
    %2436 = vmatpush1.msra.mxu0 0.0
    %2437 = vmatprep.subr.mxu0 0.0
    %2438 = vmatpush1.msra.mxu0 0.0
    %2439 = vmatprep.subr.mxu0 0.0
    %2440 = vmatpush1.msra.mxu0 0.0
    %2441 = vmatprep.subr.mxu0 0.0
    %2442 = vmatpush1.msra.mxu0 0.0
    %2443 = vmatprep.subr.mxu0 0.0
    %2444 = vmatpush1.msra.mxu0 0.0
    %2445 = vmatprep.subr.mxu0 0.0
    %2446 = vmatpush1.msra.mxu0 0.0
    %2447 = vmatprep.subr.mxu0 0.0
    %2448 = vmatpush1.msra.mxu0 0.0
    %2449 = vmatprep.subr.mxu0 0.0
    %2450 = vmatpush1.msra.mxu0 0.0
    %2451 = vmatprep.subr.mxu0 0.0
    %2452 = vmatpush1.msra.mxu0 0.0
    %2453 = vmatprep.subr.mxu0 0.0
    %2454 = vmatpush1.msra.mxu0 0.0
    %2455 = vmatprep.subr.mxu0 0.0
    %2456 = vmatpush1.msra.mxu0 0.0
    %2457 = vmatprep.subr.mxu0 0.0
    %2458 = vmatpush1.msra.mxu0 0.0
    %2459 = vmatprep.subr.mxu0 0.0
    %2460 = vmatpush1.msra.mxu0 0.0
    %2461 = vmatprep.subr.mxu0 0.0
    %2462 = vmatpush1.msra.mxu0 0.0
    %2463 = vmatprep.subr.mxu0 0.0
    %2464 = vmatpush1.msra.mxu0 0.0
    %2465 = vmatprep.subr.mxu0 0.0
    %2466 = vmatpush1.msra.mxu0 0.0
    %2467 = vmatprep.subr.mxu0 0.0
    %2468 = vmatpush1.msra.mxu0 0.0
    %2469 = vmatprep.mubr.f32.mxu0 0.0
    %2470 = vmatmul.mubr.f32.gmra.mrb[0].mxu0 %v2403
    %v2471 = vpop.f32.mrb[0].mxu0
    %v2472 = vadd.f32 0.0, %v2471
    %v2473 = vpop.f32.mrb[0].mxu0
    %2474 = vdwg.mxu0
    %v2476 = vrot.slane %v2472, 4
    %v2478 = vadd.f32 %v2180, %v2476
    %v2479 = vxor.u32 %v2478, 2147483648
    %v2480 = vmul.f32 %v2479, 1.442695
    %v2481 = vpow.pop %v2480
    %v2482 = vadd.f32 %v2481, 1.0
    %v2483 = vrcp.pop %v2482
    %v2484 = vmul.f32 1.0, %v2483
    %v2485 = vtanh.pop %v2478
    %v2487 = vrot.slane %v2388, 6
    %v2489 = vmul.f32 %v2484, %v2487
    %2491 = vrot.lane.b32.xlu0 %v2485, 64
    %v2492 = vpop.permute.xlu0 %2491
    %v2494 = vmul.f32 %v2484, %v2492
    %2496 = vrot.lane.b32.xlu0 %v2494, 32
    %v2497 = vpop.permute.xlu0 %2496
    %v2499 = vadd.f32 %v2489, %v2497
    %v2500 = vtanh.pop %v2499
    %2502 = vrot.lane.b32.xlu0 %v2500, 64
    %v2503 = vpop.permute.xlu0 %2502
    %v2505 = vmul.f32 %v2484, %v2503
    %2507 = vrot.lane.b32.xlu0 %v2505, 32
    %v2508 = vpop.permute.xlu0 %2507
    %2510 = vst.msk [vmem:[#allocation4] sm:$0x30] %vm569, %v2508
    %v2511 = vrot.slane %v2505, 4
    %2512 = vrot.lane.b32.xlu0 %v2511, 32
    %v2513 = vpop.permute.xlu0 %2512
    %v2514 = vsel %vm245, %v2513, 0
    %2516 = vmatprep.subr.mxu0 0.0
    %2517 = vmatpush1.msra.mxu0 %v2188
    %2518 = vmatprep.subr.mxu0 0.0
    %2519 = vmatpush1.msra.mxu0 %v2189
    %2520 = vmatprep.subr.mxu0 0.0
    %2521 = vmatpush1.msra.mxu0 %v2190
    %2522 = vmatprep.subr.mxu0 0.0
    %2523 = vmatpush1.msra.mxu0 %v2191
    %2524 = vmatprep.subr.mxu0 0.0
    %2525 = vmatpush1.msra.mxu0 0.0
    %2526 = vmatprep.subr.mxu0 0.0
    %2527 = vmatpush1.msra.mxu0 0.0
    %2528 = vmatprep.subr.mxu0 0.0
    %2529 = vmatpush1.msra.mxu0 0.0
    %2530 = vmatprep.subr.mxu0 0.0
    %2531 = vmatpush1.msra.mxu0 0.0
    %2532 = vmatprep.subr.mxu0 0.0
    %2533 = vmatpush1.msra.mxu0 0.0
    %2534 = vmatprep.subr.mxu0 0.0
    %2535 = vmatpush1.msra.mxu0 0.0
    %2536 = vmatprep.subr.mxu0 0.0
    %2537 = vmatpush1.msra.mxu0 0.0
    %2538 = vmatprep.subr.mxu0 0.0
    %2539 = vmatpush1.msra.mxu0 0.0
    %2540 = vmatprep.subr.mxu0 0.0
    %2541 = vmatpush1.msra.mxu0 0.0
    %2542 = vmatprep.subr.mxu0 0.0
    %2543 = vmatpush1.msra.mxu0 0.0
    %2544 = vmatprep.subr.mxu0 0.0
    %2545 = vmatpush1.msra.mxu0 0.0
    %2546 = vmatprep.subr.mxu0 0.0
    %2547 = vmatpush1.msra.mxu0 0.0
    %2548 = vmatprep.subr.mxu0 0.0
    %2549 = vmatpush1.msra.mxu0 0.0
    %2550 = vmatprep.subr.mxu0 0.0
    %2551 = vmatpush1.msra.mxu0 0.0
    %2552 = vmatprep.subr.mxu0 0.0
    %2553 = vmatpush1.msra.mxu0 0.0
    %2554 = vmatprep.subr.mxu0 0.0
    %2555 = vmatpush1.msra.mxu0 0.0
    %2556 = vmatprep.subr.mxu0 0.0
    %2557 = vmatpush1.msra.mxu0 0.0
    %2558 = vmatprep.subr.mxu0 0.0
    %2559 = vmatpush1.msra.mxu0 0.0
    %2560 = vmatprep.subr.mxu0 0.0
    %2561 = vmatpush1.msra.mxu0 0.0
    %2562 = vmatprep.subr.mxu0 0.0
    %2563 = vmatpush1.msra.mxu0 0.0
    %2564 = vmatprep.subr.mxu0 0.0
    %2565 = vmatpush1.msra.mxu0 0.0
    %2566 = vmatprep.subr.mxu0 0.0
    %2567 = vmatpush1.msra.mxu0 0.0
    %2568 = vmatprep.subr.mxu0 0.0
    %2569 = vmatpush1.msra.mxu0 0.0
    %2570 = vmatprep.subr.mxu0 0.0
    %2571 = vmatpush1.msra.mxu0 0.0
    %2572 = vmatprep.subr.mxu0 0.0
    %2573 = vmatpush1.msra.mxu0 0.0
    %2574 = vmatprep.subr.mxu0 0.0
    %2575 = vmatpush1.msra.mxu0 0.0
    %2576 = vmatprep.subr.mxu0 0.0
    %2577 = vmatpush1.msra.mxu0 0.0
    %2578 = vmatprep.subr.mxu0 0.0
    %2579 = vmatpush1.msra.mxu0 0.0
    %2580 = vmatprep.mubr.f32.mxu0 0.0
    %2581 = vmatmul.mubr.f32.gmra.mrb[0].mxu0 %v2514
    %v2582 = vpop.f32.mrb[0].mxu0
    %v2583 = vadd.f32 0.0, %v2582
    %v2584 = vpop.f32.mrb[0].mxu0
    %2585 = vdwg.mxu0
    %v2587 = vrot.slane %v2583, 2
    %v2589 = vadd.f32 %v2180, %v2587
    %v2590 = vxor.u32 %v2589, 2147483648
    %v2591 = vmul.f32 %v2590, 1.442695
    %v2592 = vpow.pop %v2591
    %v2593 = vadd.f32 %v2592, 1.0
    %v2594 = vrcp.pop %v2593
    %v2595 = vmul.f32 1.0, %v2594
    %v2596 = vtanh.pop %v2589
    %v2598 = vrot.slane %v2499, 6
    %v2600 = vmul.f32 %v2595, %v2598
    %2602 = vrot.lane.b32.xlu0 %v2596, 64
    %v2603 = vpop.permute.xlu0 %2602
    %v2605 = vmul.f32 %v2595, %v2603
    %2607 = vrot.lane.b32.xlu0 %v2605, 32
    %v2608 = vpop.permute.xlu0 %2607
    %v2610 = vadd.f32 %v2600, %v2608
    %v2611 = vtanh.pop %v2610
    %2613 = vrot.lane.b32.xlu0 %v2611, 64
    %v2614 = vpop.permute.xlu0 %2613
    %v2616 = vmul.f32 %v2595, %v2614
    %2618 = vrot.lane.b32.xlu0 %v2616, 32
    %v2619 = vpop.permute.xlu0 %2618
    %2621 = vst.msk [vmem:[#allocation4] sm:$0xc0] %vm681, %v2619
    %v2622 = vrot.slane %v2616, 6
    %2623 = vrot.lane.b32.xlu0 %v2622, 32
    %v2624 = vpop.permute.xlu0 %2623
    %v2625 = vsel %vm245, %v2624, 0
    %2627 = vmatprep.subr.mxu0 0.0
    %2628 = vmatpush1.msra.mxu0 %v2188
    %2629 = vmatprep.subr.mxu0 0.0
    %2630 = vmatpush1.msra.mxu0 %v2189
    %2631 = vmatprep.subr.mxu0 0.0
    %2632 = vmatpush1.msra.mxu0 %v2190
    %2633 = vmatprep.subr.mxu0 0.0
    %2634 = vmatpush1.msra.mxu0 %v2191
    %2635 = vmatprep.subr.mxu0 0.0
    %2636 = vmatpush1.msra.mxu0 0.0
    %2637 = vmatprep.subr.mxu0 0.0
    %2638 = vmatpush1.msra.mxu0 0.0
    %2639 = vmatprep.subr.mxu0 0.0
    %2640 = vmatpush1.msra.mxu0 0.0
    %2641 = vmatprep.subr.mxu0 0.0
    %2642 = vmatpush1.msra.mxu0 0.0
    %2643 = vmatprep.subr.mxu0 0.0
    %2644 = vmatpush1.msra.mxu0 0.0
    %2645 = vmatprep.subr.mxu0 0.0
    %2646 = vmatpush1.msra.mxu0 0.0
    %2647 = vmatprep.subr.mxu0 0.0
    %2648 = vmatpush1.msra.mxu0 0.0
    %2649 = vmatprep.subr.mxu0 0.0
    %2650 = vmatpush1.msra.mxu0 0.0
    %2651 = vmatprep.subr.mxu0 0.0
    %2652 = vmatpush1.msra.mxu0 0.0
    %2653 = vmatprep.subr.mxu0 0.0
    %2654 = vmatpush1.msra.mxu0 0.0
    %2655 = vmatprep.subr.mxu0 0.0
    %2656 = vmatpush1.msra.mxu0 0.0
    %2657 = vmatprep.subr.mxu0 0.0
    %2658 = vmatpush1.msra.mxu0 0.0
    %2659 = vmatprep.subr.mxu0 0.0
    %2660 = vmatpush1.msra.mxu0 0.0
    %2661 = vmatprep.subr.mxu0 0.0
    %2662 = vmatpush1.msra.mxu0 0.0
    %2663 = vmatprep.subr.mxu0 0.0
    %2664 = vmatpush1.msra.mxu0 0.0
    %2665 = vmatprep.subr.mxu0 0.0
    %2666 = vmatpush1.msra.mxu0 0.0
    %2667 = vmatprep.subr.mxu0 0.0
    %2668 = vmatpush1.msra.mxu0 0.0
    %2669 = vmatprep.subr.mxu0 0.0
    %2670 = vmatpush1.msra.mxu0 0.0
    %2671 = vmatprep.subr.mxu0 0.0
    %2672 = vmatpush1.msra.mxu0 0.0
    %2673 = vmatprep.subr.mxu0 0.0
    %2674 = vmatpush1.msra.mxu0 0.0
    %2675 = vmatprep.subr.mxu0 0.0
    %2676 = vmatpush1.msra.mxu0 0.0
    %2677 = vmatprep.subr.mxu0 0.0
    %2678 = vmatpush1.msra.mxu0 0.0
    %2679 = vmatprep.subr.mxu0 0.0
    %2680 = vmatpush1.msra.mxu0 0.0
    %2681 = vmatprep.subr.mxu0 0.0
    %2682 = vmatpush1.msra.mxu0 0.0
    %2683 = vmatprep.subr.mxu0 0.0
    %2684 = vmatpush1.msra.mxu0 0.0
    %2685 = vmatprep.subr.mxu0 0.0
    %2686 = vmatpush1.msra.mxu0 0.0
    %2687 = vmatprep.subr.mxu0 0.0
    %2688 = vmatpush1.msra.mxu0 0.0
    %2689 = vmatprep.subr.mxu0 0.0
    %2690 = vmatpush1.msra.mxu0 0.0
    %2691 = vmatprep.mubr.f32.mxu0 0.0
    %2692 = vmatmul.mubr.f32.gmra.mrb[0].mxu0 %v2625
    %v2693 = vpop.f32.mrb[0].mxu0
    %v2694 = vadd.f32 0.0, %v2693
    %v2695 = vpop.f32.mrb[0].mxu0
    %2696 = vdwg.mxu0
    %v2697 = vadd.f32 %v2185, %v2694
    %v2698 = vxor.u32 %v2697, 2147483648
    %v2699 = vmul.f32 %v2698, 1.442695
    %v2700 = vpow.pop %v2699
    %v2701 = vadd.f32 %v2700, 1.0
    %v2702 = vrcp.pop %v2701
    %v2703 = vmul.f32 1.0, %v2702
    %v2704 = vtanh.pop %v2697
    %v2706 = vrot.slane %v2610, 6
    %v2708 = vmul.f32 %v2703, %v2706
    %2710 = vrot.lane.b32.xlu0 %v2704, 64
    %v2711 = vpop.permute.xlu0 %2710
    %v2713 = vmul.f32 %v2703, %v2711
    %2715 = vrot.lane.b32.xlu0 %v2713, 32
    %v2716 = vpop.permute.xlu0 %2715
    %v2718 = vadd.f32 %v2708, %v2716
    %v2719 = vtanh.pop %v2718
    %2721 = vrot.lane.b32.xlu0 %v2719, 64
    %v2722 = vpop.permute.xlu0 %2721
    %v2724 = vmul.f32 %v2703, %v2722
    %2726 = vrot.lane.b32.xlu0 %v2724, 32
    %v2727 = vpop.permute.xlu0 %2726
    %2729 = vst.msk [vmem:[#allocation4 + $0x8] sm:$0x3] %vm348, %v2727
    %v2730 = vsel %vm245, %v2727, 0
    %2732 = vmatprep.subr.mxu0 0.0
    %2733 = vmatpush1.msra.mxu0 %v2188
    %2734 = vmatprep.subr.mxu0 0.0
    %2735 = vmatpush1.msra.mxu0 %v2189
    %2736 = vmatprep.subr.mxu0 0.0
    %2737 = vmatpush1.msra.mxu0 %v2190
    %2738 = vmatprep.subr.mxu0 0.0
    %2739 = vmatpush1.msra.mxu0 %v2191
    %2740 = vmatprep.subr.mxu0 0.0
    %2741 = vmatpush1.msra.mxu0 0.0
    %2742 = vmatprep.subr.mxu0 0.0
    %2743 = vmatpush1.msra.mxu0 0.0
    %2744 = vmatprep.subr.mxu0 0.0
    %2745 = vmatpush1.msra.mxu0 0.0
    %2746 = vmatprep.subr.mxu0 0.0
    %2747 = vmatpush1.msra.mxu0 0.0
    %2748 = vmatprep.subr.mxu0 0.0
    %2749 = vmatpush1.msra.mxu0 0.0
    %2750 = vmatprep.subr.mxu0 0.0
    %2751 = vmatpush1.msra.mxu0 0.0
    %2752 = vmatprep.subr.mxu0 0.0
    %2753 = vmatpush1.msra.mxu0 0.0
    %2754 = vmatprep.subr.mxu0 0.0
    %2755 = vmatpush1.msra.mxu0 0.0
    %2756 = vmatprep.subr.mxu0 0.0
    %2757 = vmatpush1.msra.mxu0 0.0
    %2758 = vmatprep.subr.mxu0 0.0
    %2759 = vmatpush1.msra.mxu0 0.0
    %2760 = vmatprep.subr.mxu0 0.0
    %2761 = vmatpush1.msra.mxu0 0.0
    %2762 = vmatprep.subr.mxu0 0.0
    %2763 = vmatpush1.msra.mxu0 0.0
    %2764 = vmatprep.subr.mxu0 0.0
    %2765 = vmatpush1.msra.mxu0 0.0
    %2766 = vmatprep.subr.mxu0 0.0
    %2767 = vmatpush1.msra.mxu0 0.0
    %2768 = vmatprep.subr.mxu0 0.0
    %2769 = vmatpush1.msra.mxu0 0.0
    %2770 = vmatprep.subr.mxu0 0.0
    %2771 = vmatpush1.msra.mxu0 0.0
    %2772 = vmatprep.subr.mxu0 0.0
    %2773 = vmatpush1.msra.mxu0 0.0
    %2774 = vmatprep.subr.mxu0 0.0
    %2775 = vmatpush1.msra.mxu0 0.0
    %2776 = vmatprep.subr.mxu0 0.0
    %2777 = vmatpush1.msra.mxu0 0.0
    %2778 = vmatprep.subr.mxu0 0.0
    %2779 = vmatpush1.msra.mxu0 0.0
    %2780 = vmatprep.subr.mxu0 0.0
    %2781 = vmatpush1.msra.mxu0 0.0
    %2782 = vmatprep.subr.mxu0 0.0
    %2783 = vmatpush1.msra.mxu0 0.0
    %2784 = vmatprep.subr.mxu0 0.0
    %2785 = vmatpush1.msra.mxu0 0.0
    %2786 = vmatprep.subr.mxu0 0.0
    %2787 = vmatpush1.msra.mxu0 0.0
    %2788 = vmatprep.subr.mxu0 0.0
    %2789 = vmatpush1.msra.mxu0 0.0
    %2790 = vmatprep.subr.mxu0 0.0
    %2791 = vmatpush1.msra.mxu0 0.0
    %2792 = vmatprep.subr.mxu0 0.0
    %2793 = vmatpush1.msra.mxu0 0.0
    %2794 = vmatprep.subr.mxu0 0.0
    %2795 = vmatpush1.msra.mxu0 0.0
    %2796 = vmatprep.mubr.f32.mxu0 0.0
    %2797 = vmatmul.mubr.f32.gmra.mrb[0].mxu0 %v2730
    %v2798 = vpop.f32.mrb[0].mxu0
    %v2799 = vadd.f32 0.0, %v2798
    %v2800 = vpop.f32.mrb[0].mxu0
    %2801 = vdwg.mxu0
    %v2803 = vrot.slane %v2799, 6
    %v2805 = vadd.f32 %v2185, %v2803
    %v2806 = vxor.u32 %v2805, 2147483648
    %v2807 = vmul.f32 %v2806, 1.442695
    %v2808 = vpow.pop %v2807
    %v2809 = vadd.f32 %v2808, 1.0
    %v2810 = vrcp.pop %v2809
    %v2811 = vmul.f32 1.0, %v2810
    %v2812 = vtanh.pop %v2805
    %v2814 = vrot.slane %v2718, 6
    %v2816 = vmul.f32 %v2811, %v2814
    %2818 = vrot.lane.b32.xlu0 %v2812, 64
    %v2819 = vpop.permute.xlu0 %2818
    %v2821 = vmul.f32 %v2811, %v2819
    %2823 = vrot.lane.b32.xlu0 %v2821, 32
    %v2824 = vpop.permute.xlu0 %2823
    %v2826 = vadd.f32 %v2816, %v2824
    %v2827 = vtanh.pop %v2826
    %2829 = vrot.lane.b32.xlu0 %v2827, 64
    %v2830 = vpop.permute.xlu0 %2829
    %v2832 = vmul.f32 %v2811, %v2830
    %2834 = vrot.lane.b32.xlu0 %v2832, 32
    %v2835 = vpop.permute.xlu0 %2834
    %2837 = vst.msk [vmem:[#allocation4 + $0x8] sm:$0xc] %vm457, %v2835
    %v2838 = vrot.slane %v2832, 2
    %2839 = vrot.lane.b32.xlu0 %v2838, 32
    %v2840 = vpop.permute.xlu0 %2839
    %v2841 = vsel %vm245, %v2840, 0
    %2843 = vmatprep.subr.mxu0 0.0
    %2844 = vmatpush1.msra.mxu0 %v2188
    %2845 = vmatprep.subr.mxu0 0.0
    %2846 = vmatpush1.msra.mxu0 %v2189
    %2847 = vmatprep.subr.mxu0 0.0
    %2848 = vmatpush1.msra.mxu0 %v2190
    %2849 = vmatprep.subr.mxu0 0.0
    %2850 = vmatpush1.msra.mxu0 %v2191
    %2851 = vmatprep.subr.mxu0 0.0
    %2852 = vmatpush1.msra.mxu0 0.0
    %2853 = vmatprep.subr.mxu0 0.0
    %2854 = vmatpush1.msra.mxu0 0.0
    %2855 = vmatprep.subr.mxu0 0.0
    %2856 = vmatpush1.msra.mxu0 0.0
    %2857 = vmatprep.subr.mxu0 0.0
    %2858 = vmatpush1.msra.mxu0 0.0
    %2859 = vmatprep.subr.mxu0 0.0
    %2860 = vmatpush1.msra.mxu0 0.0
    %2861 = vmatprep.subr.mxu0 0.0
    %2862 = vmatpush1.msra.mxu0 0.0
    %2863 = vmatprep.subr.mxu0 0.0
    %2864 = vmatpush1.msra.mxu0 0.0
    %2865 = vmatprep.subr.mxu0 0.0
    %2866 = vmatpush1.msra.mxu0 0.0
    %2867 = vmatprep.subr.mxu0 0.0
    %2868 = vmatpush1.msra.mxu0 0.0
    %2869 = vmatprep.subr.mxu0 0.0
    %2870 = vmatpush1.msra.mxu0 0.0
    %2871 = vmatprep.subr.mxu0 0.0
    %2872 = vmatpush1.msra.mxu0 0.0
    %2873 = vmatprep.subr.mxu0 0.0
    %2874 = vmatpush1.msra.mxu0 0.0
    %2875 = vmatprep.subr.mxu0 0.0
    %2876 = vmatpush1.msra.mxu0 0.0
    %2877 = vmatprep.subr.mxu0 0.0
    %2878 = vmatpush1.msra.mxu0 0.0
    %2879 = vmatprep.subr.mxu0 0.0
    %2880 = vmatpush1.msra.mxu0 0.0
    %2881 = vmatprep.subr.mxu0 0.0
    %2882 = vmatpush1.msra.mxu0 0.0
    %2883 = vmatprep.subr.mxu0 0.0
    %2884 = vmatpush1.msra.mxu0 0.0
    %2885 = vmatprep.subr.mxu0 0.0
    %2886 = vmatpush1.msra.mxu0 0.0
    %2887 = vmatprep.subr.mxu0 0.0
    %2888 = vmatpush1.msra.mxu0 0.0
    %2889 = vmatprep.subr.mxu0 0.0
    %2890 = vmatpush1.msra.mxu0 0.0
    %2891 = vmatprep.subr.mxu0 0.0
    %2892 = vmatpush1.msra.mxu0 0.0
    %2893 = vmatprep.subr.mxu0 0.0
    %2894 = vmatpush1.msra.mxu0 0.0
    %2895 = vmatprep.subr.mxu0 0.0
    %2896 = vmatpush1.msra.mxu0 0.0
    %2897 = vmatprep.subr.mxu0 0.0
    %2898 = vmatpush1.msra.mxu0 0.0
    %2899 = vmatprep.subr.mxu0 0.0
    %2900 = vmatpush1.msra.mxu0 0.0
    %2901 = vmatprep.subr.mxu0 0.0
    %2902 = vmatpush1.msra.mxu0 0.0
    %2903 = vmatprep.subr.mxu0 0.0
    %2904 = vmatpush1.msra.mxu0 0.0
    %2905 = vmatprep.subr.mxu0 0.0
    %2906 = vmatpush1.msra.mxu0 0.0
    %2907 = vmatprep.mubr.f32.mxu0 0.0
    %2908 = vmatmul.mubr.f32.gmra.mrb[0].mxu0 %v2841
    %v2909 = vpop.f32.mrb[0].mxu0
    %v2910 = vadd.f32 0.0, %v2909
    %v2911 = vpop.f32.mrb[0].mxu0
    %2912 = vdwg.mxu0
    %v2914 = vrot.slane %v2910, 4
    %v2916 = vadd.f32 %v2185, %v2914
    %v2917 = vxor.u32 %v2916, 2147483648
    %v2918 = vmul.f32 %v2917, 1.442695
    %v2919 = vpow.pop %v2918
    %v2920 = vadd.f32 %v2919, 1.0
    %v2921 = vrcp.pop %v2920
    %v2922 = vmul.f32 1.0, %v2921
    %v2923 = vtanh.pop %v2916
    %v2925 = vrot.slane %v2826, 6
    %v2927 = vmul.f32 %v2922, %v2925
    %2929 = vrot.lane.b32.xlu0 %v2923, 64
    %v2930 = vpop.permute.xlu0 %2929
    %v2932 = vmul.f32 %v2922, %v2930
    %2934 = vrot.lane.b32.xlu0 %v2932, 32
    %v2935 = vpop.permute.xlu0 %2934
    %v2937 = vadd.f32 %v2927, %v2935
    %v2938 = vtanh.pop %v2937
    %2940 = vrot.lane.b32.xlu0 %v2938, 64
    %v2941 = vpop.permute.xlu0 %2940
    %v2943 = vmul.f32 %v2922, %v2941
    %2945 = vrot.lane.b32.xlu0 %v2943, 32
    %v2946 = vpop.permute.xlu0 %2945
    %2948 = vst.msk [vmem:[#allocation4 + $0x8] sm:$0x30] %vm569, %v2946
    %v2949 = vrot.slane %v2943, 4
    %2950 = vrot.lane.b32.xlu0 %v2949, 32
    %v2951 = vpop.permute.xlu0 %2950
    %v2952 = vsel %vm245, %v2951, 0
    %2954 = vmatprep.subr.mxu0 0.0
    %2955 = vmatpush1.msra.mxu0 %v2188
    %2956 = vmatprep.subr.mxu0 0.0
    %2957 = vmatpush1.msra.mxu0 %v2189
    %2958 = vmatprep.subr.mxu0 0.0
    %2959 = vmatpush1.msra.mxu0 %v2190
    %2960 = vmatprep.subr.mxu0 0.0
    %2961 = vmatpush1.msra.mxu0 %v2191
    %2962 = vmatprep.subr.mxu0 0.0
    %2963 = vmatpush1.msra.mxu0 0.0
    %2964 = vmatprep.subr.mxu0 0.0
    %2965 = vmatpush1.msra.mxu0 0.0
    %2966 = vmatprep.subr.mxu0 0.0
    %2967 = vmatpush1.msra.mxu0 0.0
    %2968 = vmatprep.subr.mxu0 0.0
    %2969 = vmatpush1.msra.mxu0 0.0
    %2970 = vmatprep.subr.mxu0 0.0
    %2971 = vmatpush1.msra.mxu0 0.0
    %2972 = vmatprep.subr.mxu0 0.0
    %2973 = vmatpush1.msra.mxu0 0.0
    %2974 = vmatprep.subr.mxu0 0.0
    %2975 = vmatpush1.msra.mxu0 0.0
    %2976 = vmatprep.subr.mxu0 0.0
    %2977 = vmatpush1.msra.mxu0 0.0
    %2978 = vmatprep.subr.mxu0 0.0
    %2979 = vmatpush1.msra.mxu0 0.0
    %2980 = vmatprep.subr.mxu0 0.0
    %2981 = vmatpush1.msra.mxu0 0.0
    %2982 = vmatprep.subr.mxu0 0.0
    %2983 = vmatpush1.msra.mxu0 0.0
    %2984 = vmatprep.subr.mxu0 0.0
    %2985 = vmatpush1.msra.mxu0 0.0
    %2986 = vmatprep.subr.mxu0 0.0
    %2987 = vmatpush1.msra.mxu0 0.0
    %2988 = vmatprep.subr.mxu0 0.0
    %2989 = vmatpush1.msra.mxu0 0.0
    %2990 = vmatprep.subr.mxu0 0.0
    %2991 = vmatpush1.msra.mxu0 0.0
    %2992 = vmatprep.subr.mxu0 0.0
    %2993 = vmatpush1.msra.mxu0 0.0
    %2994 = vmatprep.subr.mxu0 0.0
    %2995 = vmatpush1.msra.mxu0 0.0
    %2996 = vmatprep.subr.mxu0 0.0
    %2997 = vmatpush1.msra.mxu0 0.0
    %2998 = vmatprep.subr.mxu0 0.0
    %2999 = vmatpush1.msra.mxu0 0.0
    %3000 = vmatprep.subr.mxu0 0.0
    %3001 = vmatpush1.msra.mxu0 0.0
    %3002 = vmatprep.subr.mxu0 0.0
    %3003 = vmatpush1.msra.mxu0 0.0
    %3004 = vmatprep.subr.mxu0 0.0
    %3005 = vmatpush1.msra.mxu0 0.0
    %3006 = vmatprep.subr.mxu0 0.0
    %3007 = vmatpush1.msra.mxu0 0.0
    %3008 = vmatprep.subr.mxu0 0.0
    %3009 = vmatpush1.msra.mxu0 0.0
    %3010 = vmatprep.subr.mxu0 0.0
    %3011 = vmatpush1.msra.mxu0 0.0
    %3012 = vmatprep.subr.mxu0 0.0
    %3013 = vmatpush1.msra.mxu0 0.0
    %3014 = vmatprep.subr.mxu0 0.0
    %3015 = vmatpush1.msra.mxu0 0.0
    %3016 = vmatprep.subr.mxu0 0.0
    %3017 = vmatpush1.msra.mxu0 0.0
    %3018 = vmatprep.mubr.f32.mxu0 0.0
    %3019 = vmatmul.mubr.f32.gmra.mrb[0].mxu0 %v2952
    %v3020 = vpop.f32.mrb[0].mxu0
    %v3021 = vadd.f32 0.0, %v3020
    %v3022 = vpop.f32.mrb[0].mxu0
    %3023 = vdwg.mxu0
    %v3025 = vrot.slane %v3021, 2
    %v3027 = vadd.f32 %v2185, %v3025
    %v3028 = vxor.u32 %v3027, 2147483648
    %v3029 = vmul.f32 %v3028, 1.442695
    %v3030 = vpow.pop %v3029
    %v3031 = vadd.f32 %v3030, 1.0
    %v3032 = vrcp.pop %v3031
    %v3033 = vmul.f32 1.0, %v3032
    %v3034 = vtanh.pop %v3027
    %v3036 = vrot.slane %v2937, 6
    %v3038 = vmul.f32 %v3033, %v3036
    %3040 = vrot.lane.b32.xlu0 %v3034, 64
    %v3041 = vpop.permute.xlu0 %3040
    %v3043 = vmul.f32 %v3033, %v3041
    %3045 = vrot.lane.b32.xlu0 %v3043, 32
    %v3046 = vpop.permute.xlu0 %3045
    %v3048 = vadd.f32 %v3038, %v3046
    %v3049 = vtanh.pop %v3048
    %3051 = vrot.lane.b32.xlu0 %v3049, 64
    %v3052 = vpop.permute.xlu0 %3051
    %v3054 = vmul.f32 %v3033, %v3052
    %3056 = vrot.lane.b32.xlu0 %v3054, 32
    %v3057 = vpop.permute.xlu0 %3056
    %3059 = vst.msk [vmem:[#allocation4 + $0x8] sm:$0xc0] %vm681, %v3057
    %s3060 = scalar_lea.vmem %s5, 64
    %v3061 = vld [vmem:[%s3060] sm:$0xff]
    %v3062 = vld [vmem:[%s3060 + $0x8] sm:$0xff]
    %v3063 = vld [vmem:[%s3060 + $0x10] sm:$0xff]
    %v3064 = vld [vmem:[%s3060 + $0x18] sm:$0xff]
    %v3065 = vld [vmem:[%s3060 + $0x20] sm:$0xff]
    %v3066 = vld [vmem:[%s3060 + $0x28] sm:$0xff]
    %v3067 = vld [vmem:[%s3060 + $0x30] sm:$0xff]
    %v3068 = vld [vmem:[%s3060 + $0x38] sm:$0xff]
    %s3069 = scalar_lea.vmem %s7, 1
    %v3070 = vld [vmem:[%s3069] sm:$0x1]
    %v3072 = vlaneseq
    %v3073 = vshrl.u32 %v3072, 7
    %v3074 = vsub.s32 0, %v3073
    %v3075 = vrot.slane %v3070, %v3074
    %3077 = vmatprep.subr.mxu0 0.0
    %3078 = vmatpush1.msra.mxu0 %v3061
    %3079 = vmatprep.subr.mxu0 0.0
    %3080 = vmatpush1.msra.mxu0 %v3062
    %3081 = vmatprep.subr.mxu0 0.0
    %3082 = vmatpush1.msra.mxu0 %v3063
    %3083 = vmatprep.subr.mxu0 0.0
    %3084 = vmatpush1.msra.mxu0 %v3064
    %3085 = vmatprep.subr.mxu0 0.0
    %3086 = vmatpush1.msra.mxu0 %v3065
    %3087 = vmatprep.subr.mxu0 0.0
    %3088 = vmatpush1.msra.mxu0 %v3066
    %3089 = vmatprep.subr.mxu0 0.0
    %3090 = vmatpush1.msra.mxu0 %v3067
    %3091 = vmatprep.subr.mxu0 0.0
    %3092 = vmatpush1.msra.mxu0 %v3068
    %3093 = vmatprep.subr.mxu0 0.0
    %3094 = vmatpush1.msra.mxu0 0.0
    %3095 = vmatprep.subr.mxu0 0.0
    %3096 = vmatpush1.msra.mxu0 0.0
    %3097 = vmatprep.subr.mxu0 0.0
    %3098 = vmatpush1.msra.mxu0 0.0
    %3099 = vmatprep.subr.mxu0 0.0
    %3100 = vmatpush1.msra.mxu0 0.0
    %3101 = vmatprep.subr.mxu0 0.0
    %3102 = vmatpush1.msra.mxu0 0.0
    %3103 = vmatprep.subr.mxu0 0.0
    %3104 = vmatpush1.msra.mxu0 0.0
    %3105 = vmatprep.subr.mxu0 0.0
    %3106 = vmatpush1.msra.mxu0 0.0
    %3107 = vmatprep.subr.mxu0 0.0
    %3108 = vmatpush1.msra.mxu0 0.0
    %3109 = vmatprep.subr.mxu0 0.0
    %3110 = vmatpush1.msra.mxu0 0.0
    %3111 = vmatprep.subr.mxu0 0.0
    %3112 = vmatpush1.msra.mxu0 0.0
    %3113 = vmatprep.subr.mxu0 0.0
    %3114 = vmatpush1.msra.mxu0 0.0
    %3115 = vmatprep.subr.mxu0 0.0
    %3116 = vmatpush1.msra.mxu0 0.0
    %3117 = vmatprep.subr.mxu0 0.0
    %3118 = vmatpush1.msra.mxu0 0.0
    %3119 = vmatprep.subr.mxu0 0.0
    %3120 = vmatpush1.msra.mxu0 0.0
    %3121 = vmatprep.subr.mxu0 0.0
    %3122 = vmatpush1.msra.mxu0 0.0
    %3123 = vmatprep.subr.mxu0 0.0
    %3124 = vmatpush1.msra.mxu0 0.0
    %3125 = vmatprep.subr.mxu0 0.0
    %3126 = vmatpush1.msra.mxu0 0.0
    %3127 = vmatprep.subr.mxu0 0.0
    %3128 = vmatpush1.msra.mxu0 0.0
    %3129 = vmatprep.subr.mxu0 0.0
    %3130 = vmatpush1.msra.mxu0 0.0
    %3131 = vmatprep.subr.mxu0 0.0
    %3132 = vmatpush1.msra.mxu0 0.0
    %3133 = vmatprep.subr.mxu0 0.0
    %3134 = vmatpush1.msra.mxu0 0.0
    %3135 = vmatprep.subr.mxu0 0.0
    %3136 = vmatpush1.msra.mxu0 0.0
    %3137 = vmatprep.subr.mxu0 0.0
    %3138 = vmatpush1.msra.mxu0 0.0
    %3139 = vmatprep.subr.mxu0 0.0
    %3140 = vmatpush1.msra.mxu0 0.0
    %3141 = vmatprep.mubr.f32.mxu0 0.0
    %3142 = vmatmul.mubr.f32.gmra.mrb[0].mxu0 %v2108
    %v3143 = vpop.f32.mrb[0].mxu0
    %v3144 = vadd.f32 %v3075, %v3143
    %v3145 = vpop.f32.mrb[0].mxu0
    %3146 = vmatprep.mubr.f32.mxu0 0.0
    %3147 = vmatmul.mubr.f32.gmra.mrb[0].mxu0 %v2111
    %v3148 = vpop.f32.mrb[0].mxu0
    %v3149 = vadd.f32 %v3075, %v3148
    %v3150 = vpop.f32.mrb[0].mxu0
    %3151 = vdwg.mxu0
    %s3152 = scalar_lea.vmem %s6, 32
    %v3153 = vld [vmem:[%s3152] sm:$0xff]
    %v3154 = vld [vmem:[%s3152 + $0x8] sm:$0xff]
    %v3155 = vld [vmem:[%s3152 + $0x10] sm:$0xff]
    %v3156 = vld [vmem:[%s3152 + $0x18] sm:$0xff]
    %3157 = vmatprep.subr.mxu0 0.0
    %3158 = vmatpush1.msra.mxu0 %v3153
    %3159 = vmatprep.subr.mxu0 0.0
    %3160 = vmatpush1.msra.mxu0 %v3154
    %3161 = vmatprep.subr.mxu0 0.0
    %3162 = vmatpush1.msra.mxu0 %v3155
    %3163 = vmatprep.subr.mxu0 0.0
    %3164 = vmatpush1.msra.mxu0 %v3156
    %3165 = vmatprep.subr.mxu0 0.0
    %3166 = vmatpush1.msra.mxu0 0.0
    %3167 = vmatprep.subr.mxu0 0.0
    %3168 = vmatpush1.msra.mxu0 0.0
    %3169 = vmatprep.subr.mxu0 0.0
    %3170 = vmatpush1.msra.mxu0 0.0
    %3171 = vmatprep.subr.mxu0 0.0
    %3172 = vmatpush1.msra.mxu0 0.0
    %3173 = vmatprep.subr.mxu0 0.0
    %3174 = vmatpush1.msra.mxu0 0.0
    %3175 = vmatprep.subr.mxu0 0.0
    %3176 = vmatpush1.msra.mxu0 0.0
    %3177 = vmatprep.subr.mxu0 0.0
    %3178 = vmatpush1.msra.mxu0 0.0
    %3179 = vmatprep.subr.mxu0 0.0
    %3180 = vmatpush1.msra.mxu0 0.0
    %3181 = vmatprep.subr.mxu0 0.0
    %3182 = vmatpush1.msra.mxu0 0.0
    %3183 = vmatprep.subr.mxu0 0.0
    %3184 = vmatpush1.msra.mxu0 0.0
    %3185 = vmatprep.subr.mxu0 0.0
    %3186 = vmatpush1.msra.mxu0 0.0
    %3187 = vmatprep.subr.mxu0 0.0
    %3188 = vmatpush1.msra.mxu0 0.0
    %3189 = vmatprep.subr.mxu0 0.0
    %3190 = vmatpush1.msra.mxu0 0.0
    %3191 = vmatprep.subr.mxu0 0.0
    %3192 = vmatpush1.msra.mxu0 0.0
    %3193 = vmatprep.subr.mxu0 0.0
    %3194 = vmatpush1.msra.mxu0 0.0
    %3195 = vmatprep.subr.mxu0 0.0
    %3196 = vmatpush1.msra.mxu0 0.0
    %3197 = vmatprep.subr.mxu0 0.0
    %3198 = vmatpush1.msra.mxu0 0.0
    %3199 = vmatprep.subr.mxu0 0.0
    %3200 = vmatpush1.msra.mxu0 0.0
    %3201 = vmatprep.subr.mxu0 0.0
    %3202 = vmatpush1.msra.mxu0 0.0
    %3203 = vmatprep.subr.mxu0 0.0
    %3204 = vmatpush1.msra.mxu0 0.0
    %3205 = vmatprep.subr.mxu0 0.0
    %3206 = vmatpush1.msra.mxu0 0.0
    %3207 = vmatprep.subr.mxu0 0.0
    %3208 = vmatpush1.msra.mxu0 0.0
    %3209 = vmatprep.subr.mxu0 0.0
    %3210 = vmatpush1.msra.mxu0 0.0
    %3211 = vmatprep.subr.mxu0 0.0
    %3212 = vmatpush1.msra.mxu0 0.0
    %3213 = vmatprep.subr.mxu0 0.0
    %3214 = vmatpush1.msra.mxu0 0.0
    %3215 = vmatprep.subr.mxu0 0.0
    %3216 = vmatpush1.msra.mxu0 0.0
    %3217 = vmatprep.subr.mxu0 0.0
    %3218 = vmatpush1.msra.mxu0 0.0
    %3219 = vmatprep.subr.mxu0 0.0
    %3220 = vmatpush1.msra.mxu0 0.0
    %3221 = vmatprep.mubr.f32.mxu0 0.0
    %3222 = vmatmul.mubr.f32.gmra.mrb[0].mxu0 %v247
    %v3223 = vpop.f32.mrb[0].mxu0
    %v3224 = vadd.f32 0.0, %v3223
    %v3225 = vpop.f32.mrb[0].mxu0
    %3226 = vdwg.mxu0
    %v3228 = vrot.slane %v3224, 2
    %v3230 = vadd.f32 %v3149, %v3228
    %v3231 = vxor.u32 %v3230, 2147483648
    %v3232 = vmul.f32 %v3231, 1.442695
    %v3233 = vpow.pop %v3232
    %v3234 = vadd.f32 %v3233, 1.0
    %v3235 = vrcp.pop %v3234
    %v3236 = vmul.f32 1.0, %v3235
    %v3237 = vtanh.pop %v3230
    %v3238 = vmul.f32 %v3236, 0.0
    %3240 = vrot.lane.b32.xlu0 %v3237, 64
    %v3241 = vpop.permute.xlu0 %3240
    %v3243 = vmul.f32 %v3236, %v3241
    %3245 = vrot.lane.b32.xlu0 %v3243, 32
    %v3246 = vpop.permute.xlu0 %3245
    %v3248 = vadd.f32 %v3238, %v3246
    %v3249 = vtanh.pop %v3248
    %3251 = vrot.lane.b32.xlu0 %v3249, 64
    %v3252 = vpop.permute.xlu0 %3251
    %v3254 = vmul.f32 %v3236, %v3252
    %3256 = vrot.lane.b32.xlu0 %v3254, 64
    %v3257 = vpop.permute.xlu0 %3256
    %3259 = vst.msk [vmem:[#allocation4 + $0x8] sm:$0xc0] %vm1314, %v3257
    %v3260 = vrot.slane %v3254, 6
    %3261 = vrot.lane.b32.xlu0 %v3260, 32
    %v3262 = vpop.permute.xlu0 %3261
    %v3263 = vsel %vm245, %v3262, 0
    %3265 = vmatprep.subr.mxu0 0.0
    %3266 = vmatpush1.msra.mxu0 %v3153
    %3267 = vmatprep.subr.mxu0 0.0
    %3268 = vmatpush1.msra.mxu0 %v3154
    %3269 = vmatprep.subr.mxu0 0.0
    %3270 = vmatpush1.msra.mxu0 %v3155
    %3271 = vmatprep.subr.mxu0 0.0
    %3272 = vmatpush1.msra.mxu0 %v3156
    %3273 = vmatprep.subr.mxu0 0.0
    %3274 = vmatpush1.msra.mxu0 0.0
    %3275 = vmatprep.subr.mxu0 0.0
    %3276 = vmatpush1.msra.mxu0 0.0
    %3277 = vmatprep.subr.mxu0 0.0
    %3278 = vmatpush1.msra.mxu0 0.0
    %3279 = vmatprep.subr.mxu0 0.0
    %3280 = vmatpush1.msra.mxu0 0.0
    %3281 = vmatprep.subr.mxu0 0.0
    %3282 = vmatpush1.msra.mxu0 0.0
    %3283 = vmatprep.subr.mxu0 0.0
    %3284 = vmatpush1.msra.mxu0 0.0
    %3285 = vmatprep.subr.mxu0 0.0
    %3286 = vmatpush1.msra.mxu0 0.0
    %3287 = vmatprep.subr.mxu0 0.0
    %3288 = vmatpush1.msra.mxu0 0.0
    %3289 = vmatprep.subr.mxu0 0.0
    %3290 = vmatpush1.msra.mxu0 0.0
    %3291 = vmatprep.subr.mxu0 0.0
    %3292 = vmatpush1.msra.mxu0 0.0
    %3293 = vmatprep.subr.mxu0 0.0
    %3294 = vmatpush1.msra.mxu0 0.0
    %3295 = vmatprep.subr.mxu0 0.0
    %3296 = vmatpush1.msra.mxu0 0.0
    %3297 = vmatprep.subr.mxu0 0.0
    %3298 = vmatpush1.msra.mxu0 0.0
    %3299 = vmatprep.subr.mxu0 0.0
    %3300 = vmatpush1.msra.mxu0 0.0
    %3301 = vmatprep.subr.mxu0 0.0
    %3302 = vmatpush1.msra.mxu0 0.0
    %3303 = vmatprep.subr.mxu0 0.0
    %3304 = vmatpush1.msra.mxu0 0.0
    %3305 = vmatprep.subr.mxu0 0.0
    %3306 = vmatpush1.msra.mxu0 0.0
    %3307 = vmatprep.subr.mxu0 0.0
    %3308 = vmatpush1.msra.mxu0 0.0
    %3309 = vmatprep.subr.mxu0 0.0
    %3310 = vmatpush1.msra.mxu0 0.0
    %3311 = vmatprep.subr.mxu0 0.0
    %3312 = vmatpush1.msra.mxu0 0.0
    %3313 = vmatprep.subr.mxu0 0.0
    %3314 = vmatpush1.msra.mxu0 0.0
    %3315 = vmatprep.subr.mxu0 0.0
    %3316 = vmatpush1.msra.mxu0 0.0
    %3317 = vmatprep.subr.mxu0 0.0
    %3318 = vmatpush1.msra.mxu0 0.0
    %3319 = vmatprep.subr.mxu0 0.0
    %3320 = vmatpush1.msra.mxu0 0.0
    %3321 = vmatprep.subr.mxu0 0.0
    %3322 = vmatpush1.msra.mxu0 0.0
    %3323 = vmatprep.subr.mxu0 0.0
    %3324 = vmatpush1.msra.mxu0 0.0
    %3325 = vmatprep.subr.mxu0 0.0
    %3326 = vmatpush1.msra.mxu0 0.0
    %3327 = vmatprep.subr.mxu0 0.0
    %3328 = vmatpush1.msra.mxu0 0.0
    %3329 = vmatprep.mubr.f32.mxu0 0.0
    %3330 = vmatmul.mubr.f32.gmra.mrb[0].mxu0 %v3263
    %v3331 = vpop.f32.mrb[0].mxu0
    %v3332 = vadd.f32 0.0, %v3331
    %v3333 = vpop.f32.mrb[0].mxu0
    %3334 = vdwg.mxu0
    %v3336 = vrot.slane %v3332, 4
    %v3338 = vadd.f32 %v3149, %v3336
    %v3339 = vxor.u32 %v3338, 2147483648
    %v3340 = vmul.f32 %v3339, 1.442695
    %v3341 = vpow.pop %v3340
    %v3342 = vadd.f32 %v3341, 1.0
    %v3343 = vrcp.pop %v3342
    %v3344 = vmul.f32 1.0, %v3343
    %v3345 = vtanh.pop %v3338
    %v3347 = vrot.slane %v3248, 2
    %v3349 = vmul.f32 %v3344, %v3347
    %3351 = vrot.lane.b32.xlu0 %v3345, 64
    %v3352 = vpop.permute.xlu0 %3351
    %v3354 = vmul.f32 %v3344, %v3352
    %3356 = vrot.lane.b32.xlu0 %v3354, 32
    %v3357 = vpop.permute.xlu0 %3356
    %v3359 = vadd.f32 %v3349, %v3357
    %v3360 = vtanh.pop %v3359
    %3362 = vrot.lane.b32.xlu0 %v3360, 64
    %v3363 = vpop.permute.xlu0 %3362
    %v3365 = vmul.f32 %v3344, %v3363
    %3367 = vrot.lane.b32.xlu0 %v3365, 64
    %v3368 = vpop.permute.xlu0 %3367
    %3370 = vst.msk [vmem:[#allocation4 + $0x8] sm:$0x30] %vm1426, %v3368
    %v3371 = vrot.slane %v3365, 4
    %3372 = vrot.lane.b32.xlu0 %v3371, 32
    %v3373 = vpop.permute.xlu0 %3372
    %v3374 = vsel %vm245, %v3373, 0
    %3376 = vmatprep.subr.mxu0 0.0
    %3377 = vmatpush1.msra.mxu0 %v3153
    %3378 = vmatprep.subr.mxu0 0.0
    %3379 = vmatpush1.msra.mxu0 %v3154
    %3380 = vmatprep.subr.mxu0 0.0
    %3381 = vmatpush1.msra.mxu0 %v3155
    %3382 = vmatprep.subr.mxu0 0.0
    %3383 = vmatpush1.msra.mxu0 %v3156
    %3384 = vmatprep.subr.mxu0 0.0
    %3385 = vmatpush1.msra.mxu0 0.0
    %3386 = vmatprep.subr.mxu0 0.0
    %3387 = vmatpush1.msra.mxu0 0.0
    %3388 = vmatprep.subr.mxu0 0.0
    %3389 = vmatpush1.msra.mxu0 0.0
    %3390 = vmatprep.subr.mxu0 0.0
    %3391 = vmatpush1.msra.mxu0 0.0
    %3392 = vmatprep.subr.mxu0 0.0
    %3393 = vmatpush1.msra.mxu0 0.0
    %3394 = vmatprep.subr.mxu0 0.0
    %3395 = vmatpush1.msra.mxu0 0.0
    %3396 = vmatprep.subr.mxu0 0.0
    %3397 = vmatpush1.msra.mxu0 0.0
    %3398 = vmatprep.subr.mxu0 0.0
    %3399 = vmatpush1.msra.mxu0 0.0
    %3400 = vmatprep.subr.mxu0 0.0
    %3401 = vmatpush1.msra.mxu0 0.0
    %3402 = vmatprep.subr.mxu0 0.0
    %3403 = vmatpush1.msra.mxu0 0.0
    %3404 = vmatprep.subr.mxu0 0.0
    %3405 = vmatpush1.msra.mxu0 0.0
    %3406 = vmatprep.subr.mxu0 0.0
    %3407 = vmatpush1.msra.mxu0 0.0
    %3408 = vmatprep.subr.mxu0 0.0
    %3409 = vmatpush1.msra.mxu0 0.0
    %3410 = vmatprep.subr.mxu0 0.0
    %3411 = vmatpush1.msra.mxu0 0.0
    %3412 = vmatprep.subr.mxu0 0.0
    %3413 = vmatpush1.msra.mxu0 0.0
    %3414 = vmatprep.subr.mxu0 0.0
    %3415 = vmatpush1.msra.mxu0 0.0
    %3416 = vmatprep.subr.mxu0 0.0
    %3417 = vmatpush1.msra.mxu0 0.0
    %3418 = vmatprep.subr.mxu0 0.0
    %3419 = vmatpush1.msra.mxu0 0.0
    %3420 = vmatprep.subr.mxu0 0.0
    %3421 = vmatpush1.msra.mxu0 0.0
    %3422 = vmatprep.subr.mxu0 0.0
    %3423 = vmatpush1.msra.mxu0 0.0
    %3424 = vmatprep.subr.mxu0 0.0
    %3425 = vmatpush1.msra.mxu0 0.0
    %3426 = vmatprep.subr.mxu0 0.0
    %3427 = vmatpush1.msra.mxu0 0.0
    %3428 = vmatprep.subr.mxu0 0.0
    %3429 = vmatpush1.msra.mxu0 0.0
    %3430 = vmatprep.subr.mxu0 0.0
    %3431 = vmatpush1.msra.mxu0 0.0
    %3432 = vmatprep.subr.mxu0 0.0
    %3433 = vmatpush1.msra.mxu0 0.0
    %3434 = vmatprep.subr.mxu0 0.0
    %3435 = vmatpush1.msra.mxu0 0.0
    %3436 = vmatprep.subr.mxu0 0.0
    %3437 = vmatpush1.msra.mxu0 0.0
    %3438 = vmatprep.subr.mxu0 0.0
    %3439 = vmatpush1.msra.mxu0 0.0
    %3440 = vmatprep.mubr.f32.mxu0 0.0
    %3441 = vmatmul.mubr.f32.gmra.mrb[0].mxu0 %v3374
    %v3442 = vpop.f32.mrb[0].mxu0
    %v3443 = vadd.f32 0.0, %v3442
    %v3444 = vpop.f32.mrb[0].mxu0
    %3445 = vdwg.mxu0
    %v3447 = vrot.slane %v3443, 6
    %v3449 = vadd.f32 %v3149, %v3447
    %v3450 = vxor.u32 %v3449, 2147483648
    %v3451 = vmul.f32 %v3450, 1.442695
    %v3452 = vpow.pop %v3451
    %v3453 = vadd.f32 %v3452, 1.0
    %v3454 = vrcp.pop %v3453
    %v3455 = vmul.f32 1.0, %v3454
    %v3456 = vtanh.pop %v3449
    %v3458 = vrot.slane %v3359, 2
    %v3460 = vmul.f32 %v3455, %v3458
    %3462 = vrot.lane.b32.xlu0 %v3456, 64
    %v3463 = vpop.permute.xlu0 %3462
    %v3465 = vmul.f32 %v3455, %v3463
    %3467 = vrot.lane.b32.xlu0 %v3465, 32
    %v3468 = vpop.permute.xlu0 %3467
    %v3470 = vadd.f32 %v3460, %v3468
    %v3471 = vtanh.pop %v3470
    %3473 = vrot.lane.b32.xlu0 %v3471, 64
    %v3474 = vpop.permute.xlu0 %3473
    %v3476 = vmul.f32 %v3455, %v3474
    %3478 = vrot.lane.b32.xlu0 %v3476, 64
    %v3479 = vpop.permute.xlu0 %3478
    %3481 = vst.msk [vmem:[#allocation4 + $0x8] sm:$0xc] %vm1538, %v3479
    %v3482 = vrot.slane %v3476, 2
    %3483 = vrot.lane.b32.xlu0 %v3482, 32
    %v3484 = vpop.permute.xlu0 %3483
    %v3485 = vsel %vm245, %v3484, 0
    %3487 = vmatprep.subr.mxu0 0.0
    %3488 = vmatpush1.msra.mxu0 %v3153
    %3489 = vmatprep.subr.mxu0 0.0
    %3490 = vmatpush1.msra.mxu0 %v3154
    %3491 = vmatprep.subr.mxu0 0.0
    %3492 = vmatpush1.msra.mxu0 %v3155
    %3493 = vmatprep.subr.mxu0 0.0
    %3494 = vmatpush1.msra.mxu0 %v3156
    %3495 = vmatprep.subr.mxu0 0.0
    %3496 = vmatpush1.msra.mxu0 0.0
    %3497 = vmatprep.subr.mxu0 0.0
    %3498 = vmatpush1.msra.mxu0 0.0
    %3499 = vmatprep.subr.mxu0 0.0
    %3500 = vmatpush1.msra.mxu0 0.0
    %3501 = vmatprep.subr.mxu0 0.0
    %3502 = vmatpush1.msra.mxu0 0.0
    %3503 = vmatprep.subr.mxu0 0.0
    %3504 = vmatpush1.msra.mxu0 0.0
    %3505 = vmatprep.subr.mxu0 0.0
    %3506 = vmatpush1.msra.mxu0 0.0
    %3507 = vmatprep.subr.mxu0 0.0
    %3508 = vmatpush1.msra.mxu0 0.0
    %3509 = vmatprep.subr.mxu0 0.0
    %3510 = vmatpush1.msra.mxu0 0.0
    %3511 = vmatprep.subr.mxu0 0.0
    %3512 = vmatpush1.msra.mxu0 0.0
    %3513 = vmatprep.subr.mxu0 0.0
    %3514 = vmatpush1.msra.mxu0 0.0
    %3515 = vmatprep.subr.mxu0 0.0
    %3516 = vmatpush1.msra.mxu0 0.0
    %3517 = vmatprep.subr.mxu0 0.0
    %3518 = vmatpush1.msra.mxu0 0.0
    %3519 = vmatprep.subr.mxu0 0.0
    %3520 = vmatpush1.msra.mxu0 0.0
    %3521 = vmatprep.subr.mxu0 0.0
    %3522 = vmatpush1.msra.mxu0 0.0
    %3523 = vmatprep.subr.mxu0 0.0
    %3524 = vmatpush1.msra.mxu0 0.0
    %3525 = vmatprep.subr.mxu0 0.0
    %3526 = vmatpush1.msra.mxu0 0.0
    %3527 = vmatprep.subr.mxu0 0.0
    %3528 = vmatpush1.msra.mxu0 0.0
    %3529 = vmatprep.subr.mxu0 0.0
    %3530 = vmatpush1.msra.mxu0 0.0
    %3531 = vmatprep.subr.mxu0 0.0
    %3532 = vmatpush1.msra.mxu0 0.0
    %3533 = vmatprep.subr.mxu0 0.0
    %3534 = vmatpush1.msra.mxu0 0.0
    %3535 = vmatprep.subr.mxu0 0.0
    %3536 = vmatpush1.msra.mxu0 0.0
    %3537 = vmatprep.subr.mxu0 0.0
    %3538 = vmatpush1.msra.mxu0 0.0
    %3539 = vmatprep.subr.mxu0 0.0
    %3540 = vmatpush1.msra.mxu0 0.0
    %3541 = vmatprep.subr.mxu0 0.0
    %3542 = vmatpush1.msra.mxu0 0.0
    %3543 = vmatprep.subr.mxu0 0.0
    %3544 = vmatpush1.msra.mxu0 0.0
    %3545 = vmatprep.subr.mxu0 0.0
    %3546 = vmatpush1.msra.mxu0 0.0
    %3547 = vmatprep.subr.mxu0 0.0
    %3548 = vmatpush1.msra.mxu0 0.0
    %3549 = vmatprep.subr.mxu0 0.0
    %3550 = vmatpush1.msra.mxu0 0.0
    %3551 = vmatprep.mubr.f32.mxu0 0.0
    %3552 = vmatmul.mubr.f32.gmra.mrb[0].mxu0 %v3485
    %v3553 = vpop.f32.mrb[0].mxu0
    %v3554 = vadd.f32 0.0, %v3553
    %v3555 = vpop.f32.mrb[0].mxu0
    %3556 = vdwg.mxu0
    %v3557 = vadd.f32 %v3149, %v3554
    %v3558 = vxor.u32 %v3557, 2147483648
    %v3559 = vmul.f32 %v3558, 1.442695
    %v3560 = vpow.pop %v3559
    %v3561 = vadd.f32 %v3560, 1.0
    %v3562 = vrcp.pop %v3561
    %v3563 = vmul.f32 1.0, %v3562
    %v3564 = vtanh.pop %v3557
    %v3566 = vrot.slane %v3470, 2
    %v3568 = vmul.f32 %v3563, %v3566
    %3570 = vrot.lane.b32.xlu0 %v3564, 64
    %v3571 = vpop.permute.xlu0 %3570
    %v3573 = vmul.f32 %v3563, %v3571
    %3575 = vrot.lane.b32.xlu0 %v3573, 32
    %v3576 = vpop.permute.xlu0 %3575
    %v3578 = vadd.f32 %v3568, %v3576
    %v3579 = vtanh.pop %v3578
    %3581 = vrot.lane.b32.xlu0 %v3579, 64
    %v3582 = vpop.permute.xlu0 %3581
    %v3584 = vmul.f32 %v3563, %v3582
    %3586 = vrot.lane.b32.xlu0 %v3584, 64
    %v3587 = vpop.permute.xlu0 %3586
    %3589 = vst.msk [vmem:[#allocation4 + $0x8] sm:$0x3] %vm1647, %v3587
    %3590 = vrot.lane.b32.xlu0 %v3584, 32
    %v3591 = vpop.permute.xlu0 %3590
    %v3592 = vsel %vm245, %v3591, 0
    %3594 = vmatprep.subr.mxu0 0.0
    %3595 = vmatpush1.msra.mxu0 %v3153
    %3596 = vmatprep.subr.mxu0 0.0
    %3597 = vmatpush1.msra.mxu0 %v3154
    %3598 = vmatprep.subr.mxu0 0.0
    %3599 = vmatpush1.msra.mxu0 %v3155
    %3600 = vmatprep.subr.mxu0 0.0
    %3601 = vmatpush1.msra.mxu0 %v3156
    %3602 = vmatprep.subr.mxu0 0.0
    %3603 = vmatpush1.msra.mxu0 0.0
    %3604 = vmatprep.subr.mxu0 0.0
    %3605 = vmatpush1.msra.mxu0 0.0
    %3606 = vmatprep.subr.mxu0 0.0
    %3607 = vmatpush1.msra.mxu0 0.0
    %3608 = vmatprep.subr.mxu0 0.0
    %3609 = vmatpush1.msra.mxu0 0.0
    %3610 = vmatprep.subr.mxu0 0.0
    %3611 = vmatpush1.msra.mxu0 0.0
    %3612 = vmatprep.subr.mxu0 0.0
    %3613 = vmatpush1.msra.mxu0 0.0
    %3614 = vmatprep.subr.mxu0 0.0
    %3615 = vmatpush1.msra.mxu0 0.0
    %3616 = vmatprep.subr.mxu0 0.0
    %3617 = vmatpush1.msra.mxu0 0.0
    %3618 = vmatprep.subr.mxu0 0.0
    %3619 = vmatpush1.msra.mxu0 0.0
    %3620 = vmatprep.subr.mxu0 0.0
    %3621 = vmatpush1.msra.mxu0 0.0
    %3622 = vmatprep.subr.mxu0 0.0
    %3623 = vmatpush1.msra.mxu0 0.0
    %3624 = vmatprep.subr.mxu0 0.0
    %3625 = vmatpush1.msra.mxu0 0.0
    %3626 = vmatprep.subr.mxu0 0.0
    %3627 = vmatpush1.msra.mxu0 0.0
    %3628 = vmatprep.subr.mxu0 0.0
    %3629 = vmatpush1.msra.mxu0 0.0
    %3630 = vmatprep.subr.mxu0 0.0
    %3631 = vmatpush1.msra.mxu0 0.0
    %3632 = vmatprep.subr.mxu0 0.0
    %3633 = vmatpush1.msra.mxu0 0.0
    %3634 = vmatprep.subr.mxu0 0.0
    %3635 = vmatpush1.msra.mxu0 0.0
    %3636 = vmatprep.subr.mxu0 0.0
    %3637 = vmatpush1.msra.mxu0 0.0
    %3638 = vmatprep.subr.mxu0 0.0
    %3639 = vmatpush1.msra.mxu0 0.0
    %3640 = vmatprep.subr.mxu0 0.0
    %3641 = vmatpush1.msra.mxu0 0.0
    %3642 = vmatprep.subr.mxu0 0.0
    %3643 = vmatpush1.msra.mxu0 0.0
    %3644 = vmatprep.subr.mxu0 0.0
    %3645 = vmatpush1.msra.mxu0 0.0
    %3646 = vmatprep.subr.mxu0 0.0
    %3647 = vmatpush1.msra.mxu0 0.0
    %3648 = vmatprep.subr.mxu0 0.0
    %3649 = vmatpush1.msra.mxu0 0.0
    %3650 = vmatprep.subr.mxu0 0.0
    %3651 = vmatpush1.msra.mxu0 0.0
    %3652 = vmatprep.subr.mxu0 0.0
    %3653 = vmatpush1.msra.mxu0 0.0
    %3654 = vmatprep.subr.mxu0 0.0
    %3655 = vmatpush1.msra.mxu0 0.0
    %3656 = vmatprep.subr.mxu0 0.0
    %3657 = vmatpush1.msra.mxu0 0.0
    %3658 = vmatprep.mubr.f32.mxu0 0.0
    %3659 = vmatmul.mubr.f32.gmra.mrb[0].mxu0 %v3592
    %v3660 = vpop.f32.mrb[0].mxu0
    %v3661 = vadd.f32 0.0, %v3660
    %v3662 = vpop.f32.mrb[0].mxu0
    %3663 = vdwg.mxu0
    %v3665 = vrot.slane %v3661, 2
    %v3667 = vadd.f32 %v3144, %v3665
    %v3668 = vxor.u32 %v3667, 2147483648
    %v3669 = vmul.f32 %v3668, 1.442695
    %v3670 = vpow.pop %v3669
    %v3671 = vadd.f32 %v3670, 1.0
    %v3672 = vrcp.pop %v3671
    %v3673 = vmul.f32 1.0, %v3672
    %v3674 = vtanh.pop %v3667
    %v3676 = vrot.slane %v3578, 2
    %v3678 = vmul.f32 %v3673, %v3676
    %3680 = vrot.lane.b32.xlu0 %v3674, 64
    %v3681 = vpop.permute.xlu0 %3680
    %v3683 = vmul.f32 %v3673, %v3681
    %3685 = vrot.lane.b32.xlu0 %v3683, 32
    %v3686 = vpop.permute.xlu0 %3685
    %v3688 = vadd.f32 %v3678, %v3686
    %v3689 = vtanh.pop %v3688
    %3691 = vrot.lane.b32.xlu0 %v3689, 64
    %v3692 = vpop.permute.xlu0 %3691
    %v3694 = vmul.f32 %v3673, %v3692
    %3696 = vrot.lane.b32.xlu0 %v3694, 64
    %v3697 = vpop.permute.xlu0 %3696
    %3699 = vst.msk [vmem:[#allocation4] sm:$0xc0] %vm1314, %v3697
    %v3700 = vrot.slane %v3694, 6
    %3701 = vrot.lane.b32.xlu0 %v3700, 32
    %v3702 = vpop.permute.xlu0 %3701
    %v3703 = vsel %vm245, %v3702, 0
    %3705 = vmatprep.subr.mxu0 0.0
    %3706 = vmatpush1.msra.mxu0 %v3153
    %3707 = vmatprep.subr.mxu0 0.0
    %3708 = vmatpush1.msra.mxu0 %v3154
    %3709 = vmatprep.subr.mxu0 0.0
    %3710 = vmatpush1.msra.mxu0 %v3155
    %3711 = vmatprep.subr.mxu0 0.0
    %3712 = vmatpush1.msra.mxu0 %v3156
    %3713 = vmatprep.subr.mxu0 0.0
    %3714 = vmatpush1.msra.mxu0 0.0
    %3715 = vmatprep.subr.mxu0 0.0
    %3716 = vmatpush1.msra.mxu0 0.0
    %3717 = vmatprep.subr.mxu0 0.0
    %3718 = vmatpush1.msra.mxu0 0.0
    %3719 = vmatprep.subr.mxu0 0.0
    %3720 = vmatpush1.msra.mxu0 0.0
    %3721 = vmatprep.subr.mxu0 0.0
    %3722 = vmatpush1.msra.mxu0 0.0
    %3723 = vmatprep.subr.mxu0 0.0
    %3724 = vmatpush1.msra.mxu0 0.0
    %3725 = vmatprep.subr.mxu0 0.0
    %3726 = vmatpush1.msra.mxu0 0.0
    %3727 = vmatprep.subr.mxu0 0.0
    %3728 = vmatpush1.msra.mxu0 0.0
    %3729 = vmatprep.subr.mxu0 0.0
    %3730 = vmatpush1.msra.mxu0 0.0
    %3731 = vmatprep.subr.mxu0 0.0
    %3732 = vmatpush1.msra.mxu0 0.0
    %3733 = vmatprep.subr.mxu0 0.0
    %3734 = vmatpush1.msra.mxu0 0.0
    %3735 = vmatprep.subr.mxu0 0.0
    %3736 = vmatpush1.msra.mxu0 0.0
    %3737 = vmatprep.subr.mxu0 0.0
    %3738 = vmatpush1.msra.mxu0 0.0
    %3739 = vmatprep.subr.mxu0 0.0
    %3740 = vmatpush1.msra.mxu0 0.0
    %3741 = vmatprep.subr.mxu0 0.0
    %3742 = vmatpush1.msra.mxu0 0.0
    %3743 = vmatprep.subr.mxu0 0.0
    %3744 = vmatpush1.msra.mxu0 0.0
    %3745 = vmatprep.subr.mxu0 0.0
    %3746 = vmatpush1.msra.mxu0 0.0
    %3747 = vmatprep.subr.mxu0 0.0
    %3748 = vmatpush1.msra.mxu0 0.0
    %3749 = vmatprep.subr.mxu0 0.0
    %3750 = vmatpush1.msra.mxu0 0.0
    %3751 = vmatprep.subr.mxu0 0.0
    %3752 = vmatpush1.msra.mxu0 0.0
    %3753 = vmatprep.subr.mxu0 0.0
    %3754 = vmatpush1.msra.mxu0 0.0
    %3755 = vmatprep.subr.mxu0 0.0
    %3756 = vmatpush1.msra.mxu0 0.0
    %3757 = vmatprep.subr.mxu0 0.0
    %3758 = vmatpush1.msra.mxu0 0.0
    %3759 = vmatprep.subr.mxu0 0.0
    %3760 = vmatpush1.msra.mxu0 0.0
    %3761 = vmatprep.subr.mxu0 0.0
    %3762 = vmatpush1.msra.mxu0 0.0
    %3763 = vmatprep.subr.mxu0 0.0
    %3764 = vmatpush1.msra.mxu0 0.0
    %3765 = vmatprep.subr.mxu0 0.0
    %3766 = vmatpush1.msra.mxu0 0.0
    %3767 = vmatprep.subr.mxu0 0.0
    %3768 = vmatpush1.msra.mxu0 0.0
    %3769 = vmatprep.mubr.f32.mxu0 0.0
    %3770 = vmatmul.mubr.f32.gmra.mrb[0].mxu0 %v3703
    %v3771 = vpop.f32.mrb[0].mxu0
    %v3772 = vadd.f32 0.0, %v3771
    %v3773 = vpop.f32.mrb[0].mxu0
    %3774 = vdwg.mxu0
    %v3776 = vrot.slane %v3772, 4
    %v3778 = vadd.f32 %v3144, %v3776
    %v3779 = vxor.u32 %v3778, 2147483648
    %v3780 = vmul.f32 %v3779, 1.442695
    %v3781 = vpow.pop %v3780
    %v3782 = vadd.f32 %v3781, 1.0
    %v3783 = vrcp.pop %v3782
    %v3784 = vmul.f32 1.0, %v3783
    %v3785 = vtanh.pop %v3778
    %v3787 = vrot.slane %v3688, 2
    %v3789 = vmul.f32 %v3784, %v3787
    %3791 = vrot.lane.b32.xlu0 %v3785, 64
    %v3792 = vpop.permute.xlu0 %3791
    %v3794 = vmul.f32 %v3784, %v3792
    %3796 = vrot.lane.b32.xlu0 %v3794, 32
    %v3797 = vpop.permute.xlu0 %3796
    %v3799 = vadd.f32 %v3789, %v3797
    %v3800 = vtanh.pop %v3799
    %3802 = vrot.lane.b32.xlu0 %v3800, 64
    %v3803 = vpop.permute.xlu0 %3802
    %v3805 = vmul.f32 %v3784, %v3803
    %3807 = vrot.lane.b32.xlu0 %v3805, 64
    %v3808 = vpop.permute.xlu0 %3807
    %3810 = vst.msk [vmem:[#allocation4] sm:$0x30] %vm1426, %v3808
    %v3811 = vrot.slane %v3805, 4
    %3812 = vrot.lane.b32.xlu0 %v3811, 32
    %v3813 = vpop.permute.xlu0 %3812
    %v3814 = vsel %vm245, %v3813, 0
    %3816 = vmatprep.subr.mxu0 0.0
    %3817 = vmatpush1.msra.mxu0 %v3153
    %3818 = vmatprep.subr.mxu0 0.0
    %3819 = vmatpush1.msra.mxu0 %v3154
    %3820 = vmatprep.subr.mxu0 0.0
    %3821 = vmatpush1.msra.mxu0 %v3155
    %3822 = vmatprep.subr.mxu0 0.0
    %3823 = vmatpush1.msra.mxu0 %v3156
    %3824 = vmatprep.subr.mxu0 0.0
    %3825 = vmatpush1.msra.mxu0 0.0
    %3826 = vmatprep.subr.mxu0 0.0
    %3827 = vmatpush1.msra.mxu0 0.0
    %3828 = vmatprep.subr.mxu0 0.0
    %3829 = vmatpush1.msra.mxu0 0.0
    %3830 = vmatprep.subr.mxu0 0.0
    %3831 = vmatpush1.msra.mxu0 0.0
    %3832 = vmatprep.subr.mxu0 0.0
    %3833 = vmatpush1.msra.mxu0 0.0
    %3834 = vmatprep.subr.mxu0 0.0
    %3835 = vmatpush1.msra.mxu0 0.0
    %3836 = vmatprep.subr.mxu0 0.0
    %3837 = vmatpush1.msra.mxu0 0.0
    %3838 = vmatprep.subr.mxu0 0.0
    %3839 = vmatpush1.msra.mxu0 0.0
    %3840 = vmatprep.subr.mxu0 0.0
    %3841 = vmatpush1.msra.mxu0 0.0
    %3842 = vmatprep.subr.mxu0 0.0
    %3843 = vmatpush1.msra.mxu0 0.0
    %3844 = vmatprep.subr.mxu0 0.0
    %3845 = vmatpush1.msra.mxu0 0.0
    %3846 = vmatprep.subr.mxu0 0.0
    %3847 = vmatpush1.msra.mxu0 0.0
    %3848 = vmatprep.subr.mxu0 0.0
    %3849 = vmatpush1.msra.mxu0 0.0
    %3850 = vmatprep.subr.mxu0 0.0
    %3851 = vmatpush1.msra.mxu0 0.0
    %3852 = vmatprep.subr.mxu0 0.0
    %3853 = vmatpush1.msra.mxu0 0.0
    %3854 = vmatprep.subr.mxu0 0.0
    %3855 = vmatpush1.msra.mxu0 0.0
    %3856 = vmatprep.subr.mxu0 0.0
    %3857 = vmatpush1.msra.mxu0 0.0
    %3858 = vmatprep.subr.mxu0 0.0
    %3859 = vmatpush1.msra.mxu0 0.0
    %3860 = vmatprep.subr.mxu0 0.0
    %3861 = vmatpush1.msra.mxu0 0.0
    %3862 = vmatprep.subr.mxu0 0.0
    %3863 = vmatpush1.msra.mxu0 0.0
    %3864 = vmatprep.subr.mxu0 0.0
    %3865 = vmatpush1.msra.mxu0 0.0
    %3866 = vmatprep.subr.mxu0 0.0
    %3867 = vmatpush1.msra.mxu0 0.0
    %3868 = vmatprep.subr.mxu0 0.0
    %3869 = vmatpush1.msra.mxu0 0.0
    %3870 = vmatprep.subr.mxu0 0.0
    %3871 = vmatpush1.msra.mxu0 0.0
    %3872 = vmatprep.subr.mxu0 0.0
    %3873 = vmatpush1.msra.mxu0 0.0
    %3874 = vmatprep.subr.mxu0 0.0
    %3875 = vmatpush1.msra.mxu0 0.0
    %3876 = vmatprep.subr.mxu0 0.0
    %3877 = vmatpush1.msra.mxu0 0.0
    %3878 = vmatprep.subr.mxu0 0.0
    %3879 = vmatpush1.msra.mxu0 0.0
    %3880 = vmatprep.mubr.f32.mxu0 0.0
    %3881 = vmatmul.mubr.f32.gmra.mrb[0].mxu0 %v3814
    %v3882 = vpop.f32.mrb[0].mxu0
    %v3883 = vadd.f32 0.0, %v3882
    %v3884 = vpop.f32.mrb[0].mxu0
    %3885 = vdwg.mxu0
    %v3887 = vrot.slane %v3883, 6
    %v3889 = vadd.f32 %v3144, %v3887
    %v3890 = vxor.u32 %v3889, 2147483648
    %v3891 = vmul.f32 %v3890, 1.442695
    %v3892 = vpow.pop %v3891
    %v3893 = vadd.f32 %v3892, 1.0
    %v3894 = vrcp.pop %v3893
    %v3895 = vmul.f32 1.0, %v3894
    %v3896 = vtanh.pop %v3889
    %v3898 = vrot.slane %v3799, 2
    %v3900 = vmul.f32 %v3895, %v3898
    %3902 = vrot.lane.b32.xlu0 %v3896, 64
    %v3903 = vpop.permute.xlu0 %3902
    %v3905 = vmul.f32 %v3895, %v3903
    %3907 = vrot.lane.b32.xlu0 %v3905, 32
    %v3908 = vpop.permute.xlu0 %3907
    %v3910 = vadd.f32 %v3900, %v3908
    %v3911 = vtanh.pop %v3910
    %3913 = vrot.lane.b32.xlu0 %v3911, 64
    %v3914 = vpop.permute.xlu0 %3913
    %v3916 = vmul.f32 %v3895, %v3914
    %3918 = vrot.lane.b32.xlu0 %v3916, 64
    %v3919 = vpop.permute.xlu0 %3918
    %3921 = vst.msk [vmem:[#allocation4] sm:$0xc] %vm1538, %v3919
    %v3922 = vrot.slane %v3916, 2
    %3923 = vrot.lane.b32.xlu0 %v3922, 32
    %v3924 = vpop.permute.xlu0 %3923
    %v3925 = vsel %vm245, %v3924, 0
    %3927 = vmatprep.subr.mxu0 0.0
    %3928 = vmatpush1.msra.mxu0 %v3153
    %3929 = vmatprep.subr.mxu0 0.0
    %3930 = vmatpush1.msra.mxu0 %v3154
    %3931 = vmatprep.subr.mxu0 0.0
    %3932 = vmatpush1.msra.mxu0 %v3155
    %3933 = vmatprep.subr.mxu0 0.0
    %3934 = vmatpush1.msra.mxu0 %v3156
    %3935 = vmatprep.subr.mxu0 0.0
    %3936 = vmatpush1.msra.mxu0 0.0
    %3937 = vmatprep.subr.mxu0 0.0
    %3938 = vmatpush1.msra.mxu0 0.0
    %3939 = vmatprep.subr.mxu0 0.0
    %3940 = vmatpush1.msra.mxu0 0.0
    %3941 = vmatprep.subr.mxu0 0.0
    %3942 = vmatpush1.msra.mxu0 0.0
    %3943 = vmatprep.subr.mxu0 0.0
    %3944 = vmatpush1.msra.mxu0 0.0
    %3945 = vmatprep.subr.mxu0 0.0
    %3946 = vmatpush1.msra.mxu0 0.0
    %3947 = vmatprep.subr.mxu0 0.0
    %3948 = vmatpush1.msra.mxu0 0.0
    %3949 = vmatprep.subr.mxu0 0.0
    %3950 = vmatpush1.msra.mxu0 0.0
    %3951 = vmatprep.subr.mxu0 0.0
    %3952 = vmatpush1.msra.mxu0 0.0
    %3953 = vmatprep.subr.mxu0 0.0
    %3954 = vmatpush1.msra.mxu0 0.0
    %3955 = vmatprep.subr.mxu0 0.0
    %3956 = vmatpush1.msra.mxu0 0.0
    %3957 = vmatprep.subr.mxu0 0.0
    %3958 = vmatpush1.msra.mxu0 0.0
    %3959 = vmatprep.subr.mxu0 0.0
    %3960 = vmatpush1.msra.mxu0 0.0
    %3961 = vmatprep.subr.mxu0 0.0
    %3962 = vmatpush1.msra.mxu0 0.0
    %3963 = vmatprep.subr.mxu0 0.0
    %3964 = vmatpush1.msra.mxu0 0.0
    %3965 = vmatprep.subr.mxu0 0.0
    %3966 = vmatpush1.msra.mxu0 0.0
    %3967 = vmatprep.subr.mxu0 0.0
    %3968 = vmatpush1.msra.mxu0 0.0
    %3969 = vmatprep.subr.mxu0 0.0
    %3970 = vmatpush1.msra.mxu0 0.0
    %3971 = vmatprep.subr.mxu0 0.0
    %3972 = vmatpush1.msra.mxu0 0.0
    %3973 = vmatprep.subr.mxu0 0.0
    %3974 = vmatpush1.msra.mxu0 0.0
    %3975 = vmatprep.subr.mxu0 0.0
    %3976 = vmatpush1.msra.mxu0 0.0
    %3977 = vmatprep.subr.mxu0 0.0
    %3978 = vmatpush1.msra.mxu0 0.0
    %3979 = vmatprep.subr.mxu0 0.0
    %3980 = vmatpush1.msra.mxu0 0.0
    %3981 = vmatprep.subr.mxu0 0.0
    %3982 = vmatpush1.msra.mxu0 0.0
    %3983 = vmatprep.subr.mxu0 0.0
    %3984 = vmatpush1.msra.mxu0 0.0
    %3985 = vmatprep.subr.mxu0 0.0
    %3986 = vmatpush1.msra.mxu0 0.0
    %3987 = vmatprep.subr.mxu0 0.0
    %3988 = vmatpush1.msra.mxu0 0.0
    %3989 = vmatprep.subr.mxu0 0.0
    %3990 = vmatpush1.msra.mxu0 0.0
    %3991 = vmatprep.mubr.f32.mxu0 0.0
    %3992 = vmatmul.mubr.f32.gmra.mrb[0].mxu0 %v3925
    %v3993 = vpop.f32.mrb[0].mxu0
    %v3994 = vadd.f32 0.0, %v3993
    %v3995 = vpop.f32.mrb[0].mxu0
    %3996 = vdwg.mxu0
    %v3997 = vadd.f32 %v3144, %v3994
    %v3998 = vxor.u32 %v3997, 2147483648
    %v3999 = vmul.f32 %v3998, 1.442695
    %v4000 = vpow.pop %v3999
    %v4001 = vadd.f32 %v4000, 1.0
    %v4002 = vrcp.pop %v4001
    %v4003 = vmul.f32 1.0, %v4002
    %v4004 = vtanh.pop %v3997
    %v4006 = vrot.slane %v3910, 2
    %v4008 = vmul.f32 %v4003, %v4006
    %4010 = vrot.lane.b32.xlu0 %v4004, 64
    %v4011 = vpop.permute.xlu0 %4010
    %v4013 = vmul.f32 %v4003, %v4011
    %4015 = vrot.lane.b32.xlu0 %v4013, 32
    %v4016 = vpop.permute.xlu0 %4015
    %v4018 = vadd.f32 %v4008, %v4016
    %v4019 = vtanh.pop %v4018
    %4021 = vrot.lane.b32.xlu0 %v4019, 64
    %v4022 = vpop.permute.xlu0 %4021
    %v4024 = vmul.f32 %v4003, %v4022
    %4026 = vrot.lane.b32.xlu0 %v4024, 64
    %v4027 = vpop.permute.xlu0 %4026
    %4029 = vst.msk [vmem:[#allocation4] sm:$0x3] %vm1647, %v4027
    %v4030 = vld [vmem:[#allocation4] sm:$0xff]
    %v4031 = vld [vmem:[#allocation4 + $0x8] sm:$0xff]
    %v4032 = vld [vmem:[%s8] sm:$0xff]
    %v4033 = vld [vmem:[%s8 + $0x8] sm:$0xff]
    %v4034 = vld [vmem:[%s8 + $0x10] sm:$0xff]
    %v4035 = vld [vmem:[%s8 + $0x18] sm:$0xff]
    %v4036 = vld [vmem:[%s8 + $0x20] sm:$0xff]
    %v4037 = vld [vmem:[%s8 + $0x28] sm:$0xff]
    %v4038 = vld [vmem:[%s8 + $0x30] sm:$0xff]
    %v4039 = vld [vmem:[%s8 + $0x38] sm:$0xff]
    %v4040 = vld [vmem:[%s9] sm:$0x1]
    %v4042 = vlaneseq
    %v4043 = vshrl.u32 %v4042, 7
    %v4044 = vsub.s32 0, %v4043
    %v4045 = vrot.slane %v4040, %v4044
    %v4048 = vsel %vm2106, %v4030, 0
    %v4051 = vsel %vm2106, %v4031, 0
    %4053 = vmatprep.subr.mxu0 0.0
    %4054 = vmatpush1.msra.mxu0 %v4032
    %4055 = vmatprep.subr.mxu0 0.0
    %4056 = vmatpush1.msra.mxu0 %v4033
    %4057 = vmatprep.subr.mxu0 0.0
    %4058 = vmatpush1.msra.mxu0 %v4034
    %4059 = vmatprep.subr.mxu0 0.0
    %4060 = vmatpush1.msra.mxu0 %v4035
    %4061 = vmatprep.subr.mxu0 0.0
    %4062 = vmatpush1.msra.mxu0 %v4036
    %4063 = vmatprep.subr.mxu0 0.0
    %4064 = vmatpush1.msra.mxu0 %v4037
    %4065 = vmatprep.subr.mxu0 0.0
    %4066 = vmatpush1.msra.mxu0 %v4038
    %4067 = vmatprep.subr.mxu0 0.0
    %4068 = vmatpush1.msra.mxu0 %v4039
    %4069 = vmatprep.subr.mxu0 0.0
    %4070 = vmatpush1.msra.mxu0 0.0
    %4071 = vmatprep.subr.mxu0 0.0
    %4072 = vmatpush1.msra.mxu0 0.0
    %4073 = vmatprep.subr.mxu0 0.0
    %4074 = vmatpush1.msra.mxu0 0.0
    %4075 = vmatprep.subr.mxu0 0.0
    %4076 = vmatpush1.msra.mxu0 0.0
    %4077 = vmatprep.subr.mxu0 0.0
    %4078 = vmatpush1.msra.mxu0 0.0
    %4079 = vmatprep.subr.mxu0 0.0
    %4080 = vmatpush1.msra.mxu0 0.0
    %4081 = vmatprep.subr.mxu0 0.0
    %4082 = vmatpush1.msra.mxu0 0.0
    %4083 = vmatprep.subr.mxu0 0.0
    %4084 = vmatpush1.msra.mxu0 0.0
    %4085 = vmatprep.subr.mxu0 0.0
    %4086 = vmatpush1.msra.mxu0 0.0
    %4087 = vmatprep.subr.mxu0 0.0
    %4088 = vmatpush1.msra.mxu0 0.0
    %4089 = vmatprep.subr.mxu0 0.0
    %4090 = vmatpush1.msra.mxu0 0.0
    %4091 = vmatprep.subr.mxu0 0.0
    %4092 = vmatpush1.msra.mxu0 0.0
    %4093 = vmatprep.subr.mxu0 0.0
    %4094 = vmatpush1.msra.mxu0 0.0
    %4095 = vmatprep.subr.mxu0 0.0
    %4096 = vmatpush1.msra.mxu0 0.0
    %4097 = vmatprep.subr.mxu0 0.0
    %4098 = vmatpush1.msra.mxu0 0.0
    %4099 = vmatprep.subr.mxu0 0.0
    %4100 = vmatpush1.msra.mxu0 0.0
    %4101 = vmatprep.subr.mxu0 0.0
    %4102 = vmatpush1.msra.mxu0 0.0
    %4103 = vmatprep.subr.mxu0 0.0
    %4104 = vmatpush1.msra.mxu0 0.0
    %4105 = vmatprep.subr.mxu0 0.0
    %4106 = vmatpush1.msra.mxu0 0.0
    %4107 = vmatprep.subr.mxu0 0.0
    %4108 = vmatpush1.msra.mxu0 0.0
    %4109 = vmatprep.subr.mxu0 0.0
    %4110 = vmatpush1.msra.mxu0 0.0
    %4111 = vmatprep.subr.mxu0 0.0
    %4112 = vmatpush1.msra.mxu0 0.0
    %4113 = vmatprep.subr.mxu0 0.0
    %4114 = vmatpush1.msra.mxu0 0.0
    %4115 = vmatprep.subr.mxu0 0.0
    %4116 = vmatpush1.msra.mxu0 0.0
    %4117 = vmatprep.mubr.f32.mxu0 0.0
    %4118 = vmatmul.mubr.f32.gmra.mrb[0].mxu0 %v4048
    %v4119 = vpop.f32.mrb[0].mxu0
    %v4120 = vadd.f32 %v4045, %v4119
    %v4121 = vpop.f32.mrb[0].mxu0
    %4122 = vmatprep.mubr.f32.mxu0 0.0
    %4123 = vmatmul.mubr.f32.gmra.mrb[0].mxu0 %v4051
    %v4124 = vpop.f32.mrb[0].mxu0
    %v4125 = vadd.f32 %v4045, %v4124
    %v4126 = vpop.f32.mrb[0].mxu0
    %4127 = vdwg.mxu0
    %v4128 = vmax.f32 %v4120, 0.0
    %v4129 = vmax.f32 %v4125, 0.0
    %v4130 = vadd.f32 %v4128, 0.0
    %v4132 = vrot.slane %v4128, 2
    %v4134 = vadd.f32 %v4130, %v4132
    %v4135 = vrot.slane %v4128, 4
    %v4137 = vadd.f32 %v4134, %v4135
    %v4138 = vrot.slane %v4128, 6
    %v4140 = vadd.f32 %v4137, %v4138
    %v4141 = vadd.f32 %v4140, %v4129
    %v4143 = vrot.slane %v4129, 2
    %v4145 = vadd.f32 %v4141, %v4143
    %v4146 = vrot.slane %v4129, 4
    %v4148 = vadd.f32 %v4145, %v4146
    %v4149 = vrot.slane %v4129, 6
    %v4151 = vadd.f32 %v4148, %v4149
    %v4152 = vmul.f32 %v4151, 0.125
    %v4153 = vld [vmem:[%s10] sm:$0xff]
    %v4154 = vld [vmem:[%s10 + $0x8] sm:$0xff]
    %v4155 = vld [vmem:[%s10 + $0x10] sm:$0xff]
    %v4156 = vld [vmem:[%s10 + $0x18] sm:$0xff]
    %v4157 = vld [vmem:[#allocation12] sm:$0x1]
    %v4159 = vlaneseq
    %v4160 = vshrl.u32 %v4159, 7
    %v4161 = vsub.s32 0, %v4160
    %v4162 = vrot.slane %v4157, %v4161
    %v4165 = vsel %vm245, %v4152, 0
    %4167 = vmatprep.subr.mxu0 0.0
    %4168 = vmatpush1.msra.mxu0 %v4153
    %4169 = vmatprep.subr.mxu0 0.0
    %4170 = vmatpush1.msra.mxu0 %v4154
    %4171 = vmatprep.subr.mxu0 0.0
    %4172 = vmatpush1.msra.mxu0 %v4155
    %4173 = vmatprep.subr.mxu0 0.0
    %4174 = vmatpush1.msra.mxu0 %v4156
    %4175 = vmatprep.subr.mxu0 0.0
    %4176 = vmatpush1.msra.mxu0 0.0
    %4177 = vmatprep.subr.mxu0 0.0
    %4178 = vmatpush1.msra.mxu0 0.0
    %4179 = vmatprep.subr.mxu0 0.0
    %4180 = vmatpush1.msra.mxu0 0.0
    %4181 = vmatprep.subr.mxu0 0.0
    %4182 = vmatpush1.msra.mxu0 0.0
    %4183 = vmatprep.subr.mxu0 0.0
    %4184 = vmatpush1.msra.mxu0 0.0
    %4185 = vmatprep.subr.mxu0 0.0
    %4186 = vmatpush1.msra.mxu0 0.0
    %4187 = vmatprep.subr.mxu0 0.0
    %4188 = vmatpush1.msra.mxu0 0.0
    %4189 = vmatprep.subr.mxu0 0.0
    %4190 = vmatpush1.msra.mxu0 0.0
    %4191 = vmatprep.subr.mxu0 0.0
    %4192 = vmatpush1.msra.mxu0 0.0
    %4193 = vmatprep.subr.mxu0 0.0
    %4194 = vmatpush1.msra.mxu0 0.0
    %4195 = vmatprep.subr.mxu0 0.0
    %4196 = vmatpush1.msra.mxu0 0.0
    %4197 = vmatprep.subr.mxu0 0.0
    %4198 = vmatpush1.msra.mxu0 0.0
    %4199 = vmatprep.subr.mxu0 0.0
    %4200 = vmatpush1.msra.mxu0 0.0
    %4201 = vmatprep.subr.mxu0 0.0
    %4202 = vmatpush1.msra.mxu0 0.0
    %4203 = vmatprep.subr.mxu0 0.0
    %4204 = vmatpush1.msra.mxu0 0.0
    %4205 = vmatprep.subr.mxu0 0.0
    %4206 = vmatpush1.msra.mxu0 0.0
    %4207 = vmatprep.subr.mxu0 0.0
    %4208 = vmatpush1.msra.mxu0 0.0
    %4209 = vmatprep.subr.mxu0 0.0
    %4210 = vmatpush1.msra.mxu0 0.0
    %4211 = vmatprep.subr.mxu0 0.0
    %4212 = vmatpush1.msra.mxu0 0.0
    %4213 = vmatprep.subr.mxu0 0.0
    %4214 = vmatpush1.msra.mxu0 0.0
    %4215 = vmatprep.subr.mxu0 0.0
    %4216 = vmatpush1.msra.mxu0 0.0
    %4217 = vmatprep.subr.mxu0 0.0
    %4218 = vmatpush1.msra.mxu0 0.0
    %4219 = vmatprep.subr.mxu0 0.0
    %4220 = vmatpush1.msra.mxu0 0.0
    %4221 = vmatprep.subr.mxu0 0.0
    %4222 = vmatpush1.msra.mxu0 0.0
    %4223 = vmatprep.subr.mxu0 0.0
    %4224 = vmatpush1.msra.mxu0 0.0
    %4225 = vmatprep.subr.mxu0 0.0
    %4226 = vmatpush1.msra.mxu0 0.0
    %4227 = vmatprep.subr.mxu0 0.0
    %4228 = vmatpush1.msra.mxu0 0.0
    %4229 = vmatprep.subr.mxu0 0.0
    %4230 = vmatpush1.msra.mxu0 0.0
    %4231 = vmatprep.mubr.f32.mxu0 0.0
    %4232 = vmatmul.mubr.f32.gmra.mrb[0].mxu0 %v4165
    %v4233 = vpop.f32.mrb[0].mxu0
    %v4234 = vadd.f32 %v4162, %v4233
    %v4235 = vpop.f32.mrb[0].mxu0
    %4236 = vdwg.mxu0
    %vm4237 = vcmask 9216
    %4238 = vst.msk [vmem:[#allocation13] sm:$0x3] %vm4237, %v4234
    // Predicated region
    $region58: #{model_forward.1} parent=1 // pred_check
      _
    $region59: #{model_forward.1} parent=1 // pred_check_branch
      %4240 = sbr.rel (0) target = $region61
    $region60: #{model_forward.1} parent=1 // pred_region
      %s4242 = ssub.s32 32, 32
      %4243 = vsyncadd [#allocation9], %s4242
      %s4245 = sshll.u32 [#allocation13], 4
      %s4246 = int_to_ptr.vmem [resolvable:$true] %s4245
      %4248 = dma.vmem_to_hbm [thread:$0]  %s4246, 32, %s12, [#allocation9]
    $region61: #{model_forward.1} parent=1 // pred_fallthru
      _
    // Predicated region
    $region62: #{model_forward.1} parent=1 // pred_check
      _
    $region63: #{model_forward.1} parent=1 // pred_check_branch
      %4250 = sbr.rel (0) target = $region65
    $region64: #{model_forward.1} parent=1 // pred_region
      %4251 = dma.done [#allocation9], 32
    $region65: #{model_forward.1} parent=1 // pred_fallthru
      _
    %4252 = vsyncpa [#allocation8], 1
    %4253 = vsyncpa [#allocation11], 1
    %4254 = vsyncpa [#allocation9], 1

</llo_original>
